<compile_context>
chip_gen: v7x
topology: tpu7x:2x2x1
jax: 0.10.0
libtpu: 0.0.40
codegen_flags: <defaults>
</compile_context>

<pallas_src>
import jax
import jax.numpy as jnp
from jax.experimental import pallas as pl
from jax.experimental.pallas import tpu as pltpu


def _round_up(a, m):
    return (a + m - 1) // m * m


def _leaky_relu(v, slope=0.2):
    return jnp.where(v > 0, v, slope * v)


def discriminator_kernel(x_ref,
                         w1_ref, b1_ref,
                         w2_ref, b2_ref,
                         w3_ref, b3_ref,
                         w4_ref, b4_ref,
                         o_ref):
    """Fused 4-layer MLP forward on one (TB, Dp) batch tile.

    x/w refs are bf16; biases and all element-wise math are f32.
    """
    x = x_ref[...]                                                   # (TB, Dp) bf16

    h1 = jnp.dot(x, w1_ref[...], preferred_element_type=jnp.float32)
    h1 = _leaky_relu(h1 + b1_ref[...])                               # (TB, 512) f32

    h2 = jnp.dot(h1.astype(jnp.bfloat16), w2_ref[...],
                 preferred_element_type=jnp.float32)
    h2 = _leaky_relu(h2 + b2_ref[...])                               # (TB, 256) f32

    h3 = jnp.dot(h2.astype(jnp.bfloat16), w3_ref[...],
                 preferred_element_type=jnp.float32)
    h3 = _leaky_relu(h3 + b3_ref[...])                               # (TB, 128) f32

    logit = jnp.dot(h3.astype(jnp.bfloat16), w4_ref[...],
                    preferred_element_type=jnp.float32)              # (TB, 1) f32
    logit = logit + b4_ref[...]                                      # broadcast (1,1)

    # sigmoid(x) = 1 / (1 + exp(-x)); reciprocal goes to the EUP slot.
    o_ref[...] = pl.reciprocal(1.0 + jnp.exp(-logit), approx=True)


def discriminator_forward(x, params, *, batch_tile=256):
    """x: (B, input_size) float32.  params: dict of f32 weights/biases.

    Returns (B, 1) float32 probabilities.
    """
    B, D = x.shape
    batch_tile = max(8, _round_up(batch_tile, 8))

    # Pad feature dim to a multiple of 128 (lane alignment) and batch to a
    # multiple of the chosen tile (handles small / ragged batches).
    Dp = _round_up(D, 128)
    tile = min(batch_tile, _round_up(B, 8))
    Bp = _round_up(B, tile)

    x_p = x
    if Bp != B or Dp != D:
        x_p = jnp.pad(x, ((0, Bp - B), (0, Dp - D)))
    x_b = x_p.astype(jnp.bfloat16)

    w1 = params["w1"]
    if Dp != D:
        w1 = jnp.pad(w1, ((0, Dp - D), (0, 0)))
    w1b = w1.astype(jnp.bfloat16)
    w2b = params["w2"].astype(jnp.bfloat16)
    w3b = params["w3"].astype(jnp.bfloat16)
    w4b = params["w4"].astype(jnp.bfloat16)

    b1 = params["b1"].astype(jnp.float32)
    b2 = params["b2"].astype(jnp.float32)
    b3 = params["b3"].astype(jnp.float32)
    b4 = params["b4"].astype(jnp.float32)

    grid = (Bp // tile,)

    def full(shape):
        # Weight / bias blocks: whole (resident) array at every grid step.
        return pl.BlockSpec(shape, lambda i: (0, 0))

    out = pl.pallas_call(
        discriminator_kernel,
        out_shape=jax.ShapeDtypeStruct((Bp, 1), jnp.float32),
        grid_spec=pltpu.PrefetchScalarGridSpec(
            num_scalar_prefetch=0,
            grid=grid,
            in_specs=[
                pl.BlockSpec((tile, Dp), lambda i: (i, 0)),    # x tile
                full(w1b.shape), full(b1.shape),
                full(w2b.shape), full(b2.shape),
                full(w3b.shape), full(b3.shape),
                full(w4b.shape), full(b4.shape),
            ],
            out_specs=pl.BlockSpec((tile, 1), lambda i: (i, 0)),
        ),
        compiler_params=pltpu.CompilerParams(
            dimension_semantics=("parallel",),
        ),
    )(x_b, w1b, b1, w2b, b2, w3b, b3, w4b, b4)

    return out[:B]


def init_params(key, input_size):
    """Deterministic synthetic init (shapes from Discriminator.__init__)."""
    dims = [input_size, 512, 256, 128, 1]
    params = {}
    keys = jax.random.split(key, 2 * (len(dims) - 1))
    for li in range(len(dims) - 1):
        fan_in, fan_out = dims[li], dims[li + 1]
        wk, bk = keys[2 * li], keys[2 * li + 1]
        # PyTorch Linear default: U(-1/sqrt(fan_in), 1/sqrt(fan_in))
        bound = 1.0 / jnp.sqrt(jnp.float32(fan_in))
        params[f"w{li+1}"] = jax.random.uniform(
            wk, (fan_in, fan_out), jnp.float32, -bound, bound)
        params[f"b{li+1}"] = jax.random.uniform(
            bk, (1, fan_out), jnp.float32, -bound, bound)
    return params


def reference_forward(x, params):
    """Plain-JAX f32 reference mirroring the PyTorch forward."""
    h = jax.nn.leaky_relu(x @ params["w1"] + params["b1"], 0.2)
    h = jax.nn.leaky_relu(h @ params["w2"] + params["b2"], 0.2)
    h = jax.nn.leaky_relu(h @ params["w3"] + params["b3"], 0.2)
    return jax.nn.sigmoid(h @ params["w4"] + params["b4"])


if __name__ == "__main__":
    key = jax.random.PRNGKey(0)
    k_param, k_x = jax.random.split(key)

    input_size = 784   # MNIST flattened image (28*28)
    batch = 300        # non-multiple of the tile -> exercises batch padding

    params = init_params(k_param, input_size)
    x = jax.random.normal(k_x, (batch, input_size), jnp.float32)

    out = jax.block_until_ready(discriminator_forward(x, params))
    ref = reference_forward(x, params)

    assert out.shape == (batch, 1), out.shape
    max_err = float(jnp.max(jnp.abs(out - ref)))
    # bf16 matmul operands + approx reciprocal vs f32 reference.
    assert max_err < 2e-2, f"max abs err {max_err}"

    print("KERNEL_OK")
</pallas_src>

<mosaic_0001>
module attributes {stable_mosaic.version = 11 : i64} {
  func.func @discriminator_kernel(%arg0: i32, %arg1: memref<256x896xbf16, #tpu.memory_space<vmem>>, %arg2: memref<896x512xbf16, #tpu.memory_space<vmem>>, %arg3: memref<1x512xf32, #tpu.memory_space<vmem>>, %arg4: memref<512x256xbf16, #tpu.memory_space<vmem>>, %arg5: memref<1x256xf32, #tpu.memory_space<vmem>>, %arg6: memref<256x128xbf16, #tpu.memory_space<vmem>>, %arg7: memref<1x128xf32, #tpu.memory_space<vmem>>, %arg8: memref<128x1xbf16, #tpu.memory_space<vmem>>, %arg9: memref<1x1xf32, #tpu.memory_space<vmem>>, %arg10: memref<256x1xf32, #tpu.memory_space<vmem>>) attributes {dimension_semantics = [#tpu.dimension_semantics<parallel>], iteration_bounds = array<i64: 2>, scalar_prefetch = 0 : i64, scratch_operands = 0 : i64, tpu.core_type = #tpu.core_type<tc>, window_params = [{transform_indices = @transform_0, window_bounds = array<i64: 256, 896>}, {pipeline_mode = #tpu.pipeline_mode<synchronous>, transform_indices = @transform_1, window_bounds = array<i64: 896, 512>}, {pipeline_mode = #tpu.pipeline_mode<synchronous>, transform_indices = @transform_2, window_bounds = array<i64: 1, 512>}, {pipeline_mode = #tpu.pipeline_mode<synchronous>, transform_indices = @transform_3, window_bounds = array<i64: 512, 256>}, {pipeline_mode = #tpu.pipeline_mode<synchronous>, transform_indices = @transform_4, window_bounds = array<i64: 1, 256>}, {pipeline_mode = #tpu.pipeline_mode<synchronous>, transform_indices = @transform_5, window_bounds = array<i64: 256, 128>}, {pipeline_mode = #tpu.pipeline_mode<synchronous>, transform_indices = @transform_6, window_bounds = array<i64: 1, 128>}, {pipeline_mode = #tpu.pipeline_mode<synchronous>, transform_indices = @transform_7, window_bounds = array<i64: 128, 1>}, {pipeline_mode = #tpu.pipeline_mode<synchronous>, transform_indices = @transform_8, window_bounds = array<i64: 1, 1>}, {transform_indices = @transform_9, window_bounds = array<i64: 256, 1>}]} {
    %c0 = arith.constant 0 : index
    %c0_0 = arith.constant 0 : index
    %0 = vector.load %arg1[%c0, %c0_0] : memref<256x896xbf16, #tpu.memory_space<vmem>>, vector<256x896xbf16>
    %c0_1 = arith.constant 0 : index
    %c0_2 = arith.constant 0 : index
    %1 = vector.load %arg2[%c0_1, %c0_2] : memref<896x512xbf16, #tpu.memory_space<vmem>>, vector<896x512xbf16>
    %cst = arith.constant dense<0.000000e+00> : vector<256x512xf32>
    %2 = tpu.matmul %0, %1, %cst {dimension_numbers = #tpu.dot_dimension_numbers<[1], [0], [0], [1], [0, 0, 1, 1], [], []>} : vector<256x896xbf16>, vector<896x512xbf16>, vector<256x512xf32> -> vector<256x512xf32>
    %c0_3 = arith.constant 0 : index
    %c0_4 = arith.constant 0 : index
    %3 = vector.load %arg3[%c0_3, %c0_4] : memref<1x512xf32, #tpu.memory_space<vmem>>, vector<1x512xf32>
    %4 = vector.broadcast %3 : vector<1x512xf32> to vector<256x512xf32>
    %5 = arith.addf %2, %4 : vector<256x512xf32>
    %cst_5 = arith.constant 0.000000e+00 : f32
    %6 = vector.broadcast %cst_5 : f32 to vector<256x512xf32>
    %7 = arith.cmpf ogt, %5, %6 : vector<256x512xf32>
    %cst_6 = arith.constant 2.000000e-01 : f32
    %8 = vector.broadcast %cst_6 : f32 to vector<256x512xf32>
    %9 = arith.mulf %8, %5 : vector<256x512xf32>
    %10 = arith.select %7, %5, %9 : vector<256x512xi1>, vector<256x512xf32>
    %11 = arith.truncf %10 : vector<256x512xf32> to vector<256x512xbf16>
    %c0_7 = arith.constant 0 : index
    %c0_8 = arith.constant 0 : index
    %12 = vector.load %arg4[%c0_7, %c0_8] : memref<512x256xbf16, #tpu.memory_space<vmem>>, vector<512x256xbf16>
    %cst_9 = arith.constant dense<0.000000e+00> : vector<256x256xf32>
    %13 = tpu.matmul %11, %12, %cst_9 {dimension_numbers = #tpu.dot_dimension_numbers<[1], [0], [0], [1], [0, 0, 1, 1], [], []>} : vector<256x512xbf16>, vector<512x256xbf16>, vector<256x256xf32> -> vector<256x256xf32>
    %c0_10 = arith.constant 0 : index
    %c0_11 = arith.constant 0 : index
    %14 = vector.load %arg5[%c0_10, %c0_11] : memref<1x256xf32, #tpu.memory_space<vmem>>, vector<1x256xf32>
    %15 = vector.broadcast %14 : vector<1x256xf32> to vector<256x256xf32>
    %16 = arith.addf %13, %15 : vector<256x256xf32>
    %cst_12 = arith.constant 0.000000e+00 : f32
    %17 = vector.broadcast %cst_12 : f32 to vector<256x256xf32>
    %18 = arith.cmpf ogt, %16, %17 : vector<256x256xf32>
    %cst_13 = arith.constant 2.000000e-01 : f32
    %19 = vector.broadcast %cst_13 : f32 to vector<256x256xf32>
    %20 = arith.mulf %19, %16 : vector<256x256xf32>
    %21 = arith.select %18, %16, %20 : vector<256x256xi1>, vector<256x256xf32>
    %22 = arith.truncf %21 : vector<256x256xf32> to vector<256x256xbf16>
    %c0_14 = arith.constant 0 : index
    %c0_15 = arith.constant 0 : index
    %23 = vector.load %arg6[%c0_14, %c0_15] : memref<256x128xbf16, #tpu.memory_space<vmem>>, vector<256x128xbf16>
    %cst_16 = arith.constant dense<0.000000e+00> : vector<256x128xf32>
    %24 = tpu.matmul %22, %23, %cst_16 {dimension_numbers = #tpu.dot_dimension_numbers<[1], [0], [0], [1], [0, 0, 1, 1], [], []>} : vector<256x256xbf16>, vector<256x128xbf16>, vector<256x128xf32> -> vector<256x128xf32>
    %c0_17 = arith.constant 0 : index
    %c0_18 = arith.constant 0 : index
    %25 = vector.load %arg7[%c0_17, %c0_18] : memref<1x128xf32, #tpu.memory_space<vmem>>, vector<1x128xf32>
    %26 = vector.broadcast %25 : vector<1x128xf32> to vector<256x128xf32>
    %27 = arith.addf %24, %26 : vector<256x128xf32>
    %cst_19 = arith.constant 0.000000e+00 : f32
    %28 = vector.broadcast %cst_19 : f32 to vector<256x128xf32>
    %29 = arith.cmpf ogt, %27, %28 : vector<256x128xf32>
    %cst_20 = arith.constant 2.000000e-01 : f32
    %30 = vector.broadcast %cst_20 : f32 to vector<256x128xf32>
    %31 = arith.mulf %30, %27 : vector<256x128xf32>
    %32 = arith.select %29, %27, %31 : vector<256x128xi1>, vector<256x128xf32>
    %33 = arith.truncf %32 : vector<256x128xf32> to vector<256x128xbf16>
    %c0_21 = arith.constant 0 : index
    %c0_22 = arith.constant 0 : index
    %34 = vector.load %arg8[%c0_21, %c0_22] : memref<128x1xbf16, #tpu.memory_space<vmem>>, vector<128x1xbf16>
    %cst_23 = arith.constant dense<0.000000e+00> : vector<256x1xf32>
    %35 = tpu.matmul %33, %34, %cst_23 {dimension_numbers = #tpu.dot_dimension_numbers<[1], [0], [0], [1], [0, 0, 1, 1], [], []>} : vector<256x128xbf16>, vector<128x1xbf16>, vector<256x1xf32> -> vector<256x1xf32>
    %c0_24 = arith.constant 0 : index
    %c0_25 = arith.constant 0 : index
    %36 = vector.load %arg9[%c0_24, %c0_25] : memref<1x1xf32, #tpu.memory_space<vmem>>, vector<1x1xf32>
    %37 = vector.broadcast %36 : vector<1x1xf32> to vector<256x1xf32>
    %38 = arith.addf %35, %37 : vector<256x1xf32>
    %cst_26 = arith.constant 0.000000e+00 : f32
    %39 = vector.broadcast %cst_26 : f32 to vector<256x1xf32>
    %40 = arith.subf %39, %38 : vector<256x1xf32>
    %41 = math.exp %40 : vector<256x1xf32>
    %cst_27 = arith.constant 1.000000e+00 : f32
    %42 = vector.broadcast %cst_27 : f32 to vector<256x1xf32>
    %43 = arith.addf %42, %41 : vector<256x1xf32>
    %44 = tpu.reciprocal %43 {approx = true} : vector<256x1xf32> -> vector<256x1xf32>
    %c0_28 = arith.constant 0 : index
    %c0_29 = arith.constant 0 : index
    %45 = vector.load %arg10[%c0_28, %c0_29] : memref<256x1xf32, #tpu.memory_space<vmem>>, vector<256x1xf32>
    tpu.vector_store %arg10[%c0_28, %c0_29], %44 {strides = array<i32>} : memref<256x1xf32, #tpu.memory_space<vmem>>, vector<256x1xf32>,
    return
  }
  func.func @transform_0(%arg0: i32) -> (i32, i32) {
    %c0_i32 = arith.constant 0 : i32
    %c0_i32_0 = arith.constant 0 : i32
    return %arg0, %c0_i32 : i32, i32
  }
  func.func @transform_1(%arg0: i32) -> (i32, i32) {
    %c0_i32 = arith.constant 0 : i32
    %c0_i32_0 = arith.constant 0 : i32
    %c0_i32_1 = arith.constant 0 : i32
    return %c0_i32, %c0_i32_0 : i32, i32
  }
  func.func @transform_2(%arg0: i32) -> (i32, i32) {
    %c0_i32 = arith.constant 0 : i32
    %c0_i32_0 = arith.constant 0 : i32
    %c0_i32_1 = arith.constant 0 : i32
    return %c0_i32, %c0_i32_0 : i32, i32
  }
  func.func @transform_3(%arg0: i32) -> (i32, i32) {
    %c0_i32 = arith.constant 0 : i32
    %c0_i32_0 = arith.constant 0 : i32
    %c0_i32_1 = arith.constant 0 : i32
    return %c0_i32, %c0_i32_0 : i32, i32
  }
  func.func @transform_4(%arg0: i32) -> (i32, i32) {
    %c0_i32 = arith.constant 0 : i32
    %c0_i32_0 = arith.constant 0 : i32
    %c0_i32_1 = arith.constant 0 : i32
    return %c0_i32, %c0_i32_0 : i32, i32
  }
  func.func @transform_5(%arg0: i32) -> (i32, i32) {
    %c0_i32 = arith.constant 0 : i32
    %c0_i32_0 = arith.constant 0 : i32
    %c0_i32_1 = arith.constant 0 : i32
    return %c0_i32, %c0_i32_0 : i32, i32
  }
  func.func @transform_6(%arg0: i32) -> (i32, i32) {
    %c0_i32 = arith.constant 0 : i32
    %c0_i32_0 = arith.constant 0 : i32
    %c0_i32_1 = arith.constant 0 : i32
    return %c0_i32, %c0_i32_0 : i32, i32
  }
  func.func @transform_7(%arg0: i32) -> (i32, i32) {
    %c0_i32 = arith.constant 0 : i32
    %c0_i32_0 = arith.constant 0 : i32
    %c0_i32_1 = arith.constant 0 : i32
    return %c0_i32, %c0_i32_0 : i32, i32
  }
  func.func @transform_8(%arg0: i32) -> (i32, i32) {
    %c0_i32 = arith.constant 0 : i32
    %c0_i32_0 = arith.constant 0 : i32
    %c0_i32_1 = arith.constant 0 : i32
    return %c0_i32, %c0_i32_0 : i32, i32
  }
  func.func @transform_9(%arg0: i32) -> (i32, i32) {
    %c0_i32 = arith.constant 0 : i32
    %c0_i32_0 = arith.constant 0 : i32
    return %arg0, %c0_i32 : i32, i32
  }
}

</mosaic_0001>

<llo_original>
// kernel: tpu_custom_call.1
$region0: #{tpu_custom_call.1}
  #allocation0 [shape = 'u32[]', space=smem, size = 0x4, offset = 0x4, fixed_abs, tag = 'smem constant byte address 0x4 - core index']
  #allocation1 [shape = 'u32[144,128]{1,0:T(1,128)}', space=vmem, size = 0x12000, scoped, tag = 'internal scratch']
  #allocation2 [shape = 'f32[1,1]{1,0:T(1,128)S(1)}', space=vmem, size = 0x200, scoped, tag = 'scoped memory for tpu_custom_call.1']
  %s0 = inlined_call_operand.hbm [shape: bf16[512,896], index: 0, kind: input, shape index: {}]
  %s1 = inlined_call_operand.hbm [shape: bf16[896,512], index: 1, kind: input, shape index: {}]
  %s2 = inlined_call_operand.vmem [shape: f32[1,512], index: 2, kind: input, shape index: {}]
  %s3 = inlined_call_operand.hbm [shape: bf16[512,256], index: 3, kind: input, shape index: {}]
  %s4 = inlined_call_operand.vmem [shape: f32[1,256], index: 4, kind: input, shape index: {}]
  %s5 = inlined_call_operand.hbm [shape: bf16[256,128], index: 5, kind: input, shape index: {}]
  %s6 = inlined_call_operand.vmem [shape: f32[1,128], index: 6, kind: input, shape index: {}]
  %s7 = inlined_call_operand.vmem [shape: bf16[128,1], index: 7, kind: input, shape index: {}]
  %s8 = inlined_call_operand.<no memory space> [shape: f32[1,1], index: 8, kind: input, shape index: {}]
  %s9 = inlined_call_operand.vmem [shape: f32[512,1], index: 9, kind: output, shape index: {}]
  %s10 = sld [smem:[#allocation0]]
  $region85: #{tpu_custom_call.1} parent=0
    _
  %s12 = ssub.s32 1, %s10
  %s13 = scalar_select 0, %s12, %s10
  %v14 = vstv %s8
  %15 = vst [vmem:[#allocation2] sm:$0x1] %v14
  $region1: #{tpu_custom_call.1} parent=0
    #allocation3 [shape = 'u8[917504]{0}', space=vmem, size = 0xe0000, scoped, tag = 'input window, operand 0']
    #allocation4 [shape = 's32[2]{0}', space=sflag, size = 0x8, scoped, tag = 'scoped memory for tpu_custom_call.1']
    #allocation5 [shape = 'u8[917504]{0}', space=vmem, size = 0xe0000, scoped, tag = 'input window, operand 1, single buffered']
    #allocation6 [shape = 's32[1]{0}', space=sflag, size = 0x4, scoped, tag = 'scoped memory for tpu_custom_call.1']
    #allocation7 [shape = 'u8[262144]{0}', space=vmem, size = 0x40000, scoped, tag = 'input window, operand 3, single buffered']
    #allocation8 [shape = 'u8[65536]{0}', space=vmem, size = 0x10000, scoped, tag = 'input window, operand 5, single buffered']
    #allocation9 [shape = 's32[1]{0}', space=sflag, size = 0x4, scoped, tag = 'scoped memory for tpu_custom_call.1']
    %16 = vsyncpa [#allocation4], 0
    %s17 = scalar_lea.sflag [#allocation4], 1
    %18 = vsyncpa %s17, 0
    %19 = vsyncpa [#allocation6], 0
    %20 = vsyncpa [#allocation9], 0
    loop: start=0, step=1, limit=4
    $region2: #{tpu_custom_call.1} parent=1 // loop_pre_header
      _
    $region3: #{tpu_custom_call.1} parent=1 // loop_header
      %s22 = sphi 0, %s26
      %p23 = scmp.ge.s32.totalorder %s22, 4
      %s32 = sphi 0, %s34
      %s35 = sphi 0, %s32
      %s36 = sphi 0, %s35
      %s52 = sphi 0, %s36
      %s56 = sphi 0, %s56
      %s58 = sphi 0, %s56
      %s59 = sphi 0, %s58
      %s73 = sphi 0, %s59
      %s77 = sphi 0, %s77
      %s79 = sphi 0, %s77
      %s80 = sphi 0, %s79
      %s94 = sphi 0, %s80
      %s98 = sphi 0, %s98
      %s100 = sphi 0, %s98
      %s101 = sphi 0, %s100
      %s115 = sphi 0, %s101
      %s119 = sphi 0, %s119
      %s121 = sphi 0, %s119
      %s122 = sphi 0, %s121
      %s136 = sphi 0, %s122
      %s140 = sphi 0, %s140
      %s142 = sphi 0, %s140
      %s143 = sphi 0, %s142
      %s157 = sphi 0, %s143
      %s161 = sphi 0, %s161
      %s163 = sphi 0, %s161
      %s164 = sphi 0, %s163
      %s178 = sphi 0, %s164
      %s182 = sphi 0, %s182
      %s184 = sphi 0, %s182
      %s185 = sphi 0, %s184
      %s199 = sphi 0, %s185
      %s203 = sphi 0, %s203
      %s205 = sphi 0, %s203
      %s206 = sphi 0, %s205
      %s220 = sphi 0, %s206
      %s226 = sphi 0, %s228
      %s229 = sphi 0, %s226
      %s230 = sphi 0, %s229
      %s246 = sphi 0, %s230
    $region4: #{tpu_custom_call.1} parent=1 // loop_header_branch
      %25 = sbr.rel (%p23) target = $region8
    $region5: #{tpu_custom_call.1} parent=1 // loop_body
      %s27 = ssub.s32 %s22, 1
      %s28 = ssub.s32 %s22, 2
      %s29 = sadd.s32 %s22, 1
      %s30 = ssub.s32 %s22, %s29
      %p31 = scmp.eq.s32.totalorder %s30, 0
      %s33 = sadd.s32 %s32, 1
      %s34 = scalar_select %p31, %s32, %s33
      %p37 = pneg %p31
      %p38 = scmp.eq.s32.totalorder %s22, 1
      %p39 = por %p37, %p38
      %p40 = scmp.ne.s32.totalorder %s32, %s35
      %p41 = scmp.eq.s32.totalorder %s22, 0
      %p42 = por %p40, %p41
      %p43 = scmp.ne.s32.totalorder %s32, %s35
      %p44 = scmp.eq.s32.totalorder %s27, 1
      %p45 = por %p43, %p44
      %p46 = scmp.ne.s32.totalorder %s35, %s36
      %p47 = scmp.eq.s32.totalorder %s27, 0
      %p48 = por %p46, %p47
      %p49 = scmp.ne.s32.totalorder %s35, %s36
      %p50 = scmp.eq.s32.totalorder %s28, 1
      %p51 = por %p49, %p50
      %p53 = scmp.ne.s32.totalorder %s36, %s52
      %p54 = scmp.eq.s32.totalorder %s28, 0
      %p55 = por %p53, %p54
      %s57 = sadd.s32 %s56, 1
      %p60 = scmp.eq.s32.totalorder %s22, 1
      %p61 = scmp.ne.s32.totalorder %s56, %s58
      %p62 = scmp.eq.s32.totalorder %s22, 0
      %p63 = por %p61, %p62
      %p64 = scmp.ne.s32.totalorder %s56, %s58
      %p65 = scmp.eq.s32.totalorder %s27, 1
      %p66 = por %p64, %p65
      %p67 = scmp.ne.s32.totalorder %s58, %s59
      %p68 = scmp.eq.s32.totalorder %s27, 0
      %p69 = por %p67, %p68
      %p70 = scmp.ne.s32.totalorder %s58, %s59
      %p71 = scmp.eq.s32.totalorder %s28, 1
      %p72 = por %p70, %p71
      %p74 = scmp.ne.s32.totalorder %s59, %s73
      %p75 = scmp.eq.s32.totalorder %s28, 0
      %p76 = por %p74, %p75
      %s78 = sadd.s32 %s77, 1
      %p81 = scmp.eq.s32.totalorder %s22, 1
      %p82 = scmp.ne.s32.totalorder %s77, %s79
      %p83 = scmp.eq.s32.totalorder %s22, 0
      %p84 = por %p82, %p83
      %p85 = scmp.ne.s32.totalorder %s77, %s79
      %p86 = scmp.eq.s32.totalorder %s27, 1
      %p87 = por %p85, %p86
      %p88 = scmp.ne.s32.totalorder %s79, %s80
      %p89 = scmp.eq.s32.totalorder %s27, 0
      %p90 = por %p88, %p89
      %p91 = scmp.ne.s32.totalorder %s79, %s80
      %p92 = scmp.eq.s32.totalorder %s28, 1
      %p93 = por %p91, %p92
      %p95 = scmp.ne.s32.totalorder %s80, %s94
      %p96 = scmp.eq.s32.totalorder %s28, 0
      %p97 = por %p95, %p96
      %s99 = sadd.s32 %s98, 1
      %p102 = scmp.eq.s32.totalorder %s22, 1
      %p103 = scmp.ne.s32.totalorder %s98, %s100
      %p104 = scmp.eq.s32.totalorder %s22, 0
      %p105 = por %p103, %p104
      %p106 = scmp.ne.s32.totalorder %s98, %s100
      %p107 = scmp.eq.s32.totalorder %s27, 1
      %p108 = por %p106, %p107
      %p109 = scmp.ne.s32.totalorder %s100, %s101
      %p110 = scmp.eq.s32.totalorder %s27, 0
      %p111 = por %p109, %p110
      %p112 = scmp.ne.s32.totalorder %s100, %s101
      %p113 = scmp.eq.s32.totalorder %s28, 1
      %p114 = por %p112, %p113
      %p116 = scmp.ne.s32.totalorder %s101, %s115
      %p117 = scmp.eq.s32.totalorder %s28, 0
      %p118 = por %p116, %p117
      %s120 = sadd.s32 %s119, 1
      %p123 = scmp.eq.s32.totalorder %s22, 1
      %p124 = scmp.ne.s32.totalorder %s119, %s121
      %p125 = scmp.eq.s32.totalorder %s22, 0
      %p126 = por %p124, %p125
      %p127 = scmp.ne.s32.totalorder %s119, %s121
      %p128 = scmp.eq.s32.totalorder %s27, 1
      %p129 = por %p127, %p128
      %p130 = scmp.ne.s32.totalorder %s121, %s122
      %p131 = scmp.eq.s32.totalorder %s27, 0
      %p132 = por %p130, %p131
      %p133 = scmp.ne.s32.totalorder %s121, %s122
      %p134 = scmp.eq.s32.totalorder %s28, 1
      %p135 = por %p133, %p134
      %p137 = scmp.ne.s32.totalorder %s122, %s136
      %p138 = scmp.eq.s32.totalorder %s28, 0
      %p139 = por %p137, %p138
      %s141 = sadd.s32 %s140, 1
      %p144 = scmp.eq.s32.totalorder %s22, 1
      %p145 = scmp.ne.s32.totalorder %s140, %s142
      %p146 = scmp.eq.s32.totalorder %s22, 0
      %p147 = por %p145, %p146
      %p148 = scmp.ne.s32.totalorder %s140, %s142
      %p149 = scmp.eq.s32.totalorder %s27, 1
      %p150 = por %p148, %p149
      %p151 = scmp.ne.s32.totalorder %s142, %s143
      %p152 = scmp.eq.s32.totalorder %s27, 0
      %p153 = por %p151, %p152
      %p154 = scmp.ne.s32.totalorder %s142, %s143
      %p155 = scmp.eq.s32.totalorder %s28, 1
      %p156 = por %p154, %p155
      %p158 = scmp.ne.s32.totalorder %s143, %s157
      %p159 = scmp.eq.s32.totalorder %s28, 0
      %p160 = por %p158, %p159
      %s162 = sadd.s32 %s161, 1
      %p165 = scmp.eq.s32.totalorder %s22, 1
      %p166 = scmp.ne.s32.totalorder %s161, %s163
      %p167 = scmp.eq.s32.totalorder %s22, 0
      %p168 = por %p166, %p167
      %p169 = scmp.ne.s32.totalorder %s161, %s163
      %p170 = scmp.eq.s32.totalorder %s27, 1
      %p171 = por %p169, %p170
      %p172 = scmp.ne.s32.totalorder %s163, %s164
      %p173 = scmp.eq.s32.totalorder %s27, 0
      %p174 = por %p172, %p173
      %p175 = scmp.ne.s32.totalorder %s163, %s164
      %p176 = scmp.eq.s32.totalorder %s28, 1
      %p177 = por %p175, %p176
      %p179 = scmp.ne.s32.totalorder %s164, %s178
      %p180 = scmp.eq.s32.totalorder %s28, 0
      %p181 = por %p179, %p180
      %s183 = sadd.s32 %s182, 1
      %p186 = scmp.eq.s32.totalorder %s22, 1
      %p187 = scmp.ne.s32.totalorder %s182, %s184
      %p188 = scmp.eq.s32.totalorder %s22, 0
      %p189 = por %p187, %p188
      %p190 = scmp.ne.s32.totalorder %s182, %s184
      %p191 = scmp.eq.s32.totalorder %s27, 1
      %p192 = por %p190, %p191
      %p193 = scmp.ne.s32.totalorder %s184, %s185
      %p194 = scmp.eq.s32.totalorder %s27, 0
      %p195 = por %p193, %p194
      %p196 = scmp.ne.s32.totalorder %s184, %s185
      %p197 = scmp.eq.s32.totalorder %s28, 1
      %p198 = por %p196, %p197
      %p200 = scmp.ne.s32.totalorder %s185, %s199
      %p201 = scmp.eq.s32.totalorder %s28, 0
      %p202 = por %p200, %p201
      %s204 = sadd.s32 %s203, 1
      %p207 = scmp.eq.s32.totalorder %s22, 1
      %p208 = scmp.ne.s32.totalorder %s203, %s205
      %p209 = scmp.eq.s32.totalorder %s22, 0
      %p210 = por %p208, %p209
      %p211 = scmp.ne.s32.totalorder %s203, %s205
      %p212 = scmp.eq.s32.totalorder %s27, 1
      %p213 = por %p211, %p212
      %p214 = scmp.ne.s32.totalorder %s205, %s206
      %p215 = scmp.eq.s32.totalorder %s27, 0
      %p216 = por %p214, %p215
      %p217 = scmp.ne.s32.totalorder %s205, %s206
      %p218 = scmp.eq.s32.totalorder %s28, 1
      %p219 = por %p217, %p218
      %p221 = scmp.ne.s32.totalorder %s206, %s220
      %p222 = scmp.eq.s32.totalorder %s28, 0
      %p223 = por %p221, %p222
      %s224 = ssub.s32 %s22, %s29
      %p225 = scmp.eq.s32.totalorder %s224, 0
      %s227 = sadd.s32 %s226, 1
      %s228 = scalar_select %p225, %s226, %s227
      %p231 = pneg %p225
      %p232 = scmp.eq.s32.totalorder %s22, 1
      %p233 = por %p231, %p232
      %p234 = scmp.ne.s32.totalorder %s226, %s229
      %p235 = scmp.eq.s32.totalorder %s22, 0
      %p236 = por %p234, %p235
      %p237 = scmp.ne.s32.totalorder %s226, %s229
      %p238 = scmp.eq.s32.totalorder %s27, 1
      %p239 = por %p237, %p238
      %p240 = scmp.ne.s32.totalorder %s229, %s230
      %p241 = scmp.eq.s32.totalorder %s27, 0
      %p242 = por %p240, %p241
      %p243 = scmp.ne.s32.totalorder %s229, %s230
      %p244 = scmp.eq.s32.totalorder %s28, 1
      %p245 = por %p243, %p244
      %p247 = scmp.ne.s32.totalorder %s230, %s246
      %p248 = scmp.eq.s32.totalorder %s28, 0
      %p249 = por %p247, %p248
      %p250 = scmp.le.s32.totalorder 1, %s22
      %p251 = scmp.lt.s32.totalorder %s22, 3
      %p252 = pnand %p250, %p251
      %p253 = pneg %p252
      // Predicated region
      $region9: #{tpu_custom_call.1} parent=5 // pred_check
        _
      $region10: #{tpu_custom_call.1} parent=5 // pred_check_branch
        %255 = sbr.rel (%p252) target = $region12
      $region11: #{tpu_custom_call.1} parent=5 // pred_region
        %s256 = ssub.s32 %s22, 1
        // Predicated region
        $region13: #{tpu_custom_call.1} parent=11 // pred_check
          %p257 = pneg %p69
        $region14: #{tpu_custom_call.1} parent=11 // pred_check_branch
          %259 = sbr.rel (%p257) target = $region16
        $region15: #{tpu_custom_call.1} parent=11 // pred_region
          %s261 = ssub.s32 28672, 28672
          %262 = vsyncadd [#allocation6], %s261
          %s263 = sshll.u32 [#allocation5], 4
          %s264 = int_to_ptr.vmem [resolvable:$true] %s263
          %269 = dma.hbm_to_vmem [thread:$0]  %s1, 28672, %s264, [#allocation6], 256, 256, 16
        $region16: #{tpu_custom_call.1} parent=11 // pred_fallthru
          _
        // Predicated region
        $region17: #{tpu_custom_call.1} parent=11 // pred_check
          %p270 = pneg %p90
        $region18: #{tpu_custom_call.1} parent=11 // pred_check_branch
          %272 = sbr.rel (%p270) target = $region20
        $region19: #{tpu_custom_call.1} parent=11 // pred_region
          _
        $region20: #{tpu_custom_call.1} parent=11 // pred_fallthru
          _
        // Predicated region
        $region21: #{tpu_custom_call.1} parent=11 // pred_check
          %p273 = pneg %p111
        $region22: #{tpu_custom_call.1} parent=11 // pred_check_branch
          %275 = sbr.rel (%p273) target = $region24
        $region23: #{tpu_custom_call.1} parent=11 // pred_region
          %s277 = ssub.s32 8192, 8192
          %278 = vsyncadd [#allocation6], %s277
          %s279 = sshll.u32 [#allocation7], 4
          %s280 = int_to_ptr.vmem [resolvable:$true] %s279
          %285 = dma.hbm_to_vmem [thread:$0]  %s3, 8192, %s280, [#allocation6], 128, 128, 8
        $region24: #{tpu_custom_call.1} parent=11 // pred_fallthru
          _
        // Predicated region
        $region25: #{tpu_custom_call.1} parent=11 // pred_check
          %p286 = pneg %p132
        $region26: #{tpu_custom_call.1} parent=11 // pred_check_branch
          %288 = sbr.rel (%p286) target = $region28
        $region27: #{tpu_custom_call.1} parent=11 // pred_region
          _
        $region28: #{tpu_custom_call.1} parent=11 // pred_fallthru
          _
        // Predicated region
        $region29: #{tpu_custom_call.1} parent=11 // pred_check
          %p289 = pneg %p153
        $region30: #{tpu_custom_call.1} parent=11 // pred_check_branch
          %291 = sbr.rel (%p289) target = $region32
        $region31: #{tpu_custom_call.1} parent=11 // pred_region
          %s293 = ssub.s32 2048, 2048
          %294 = vsyncadd [#allocation9], %s293
          %s295 = sshll.u32 [#allocation8], 4
          %s296 = int_to_ptr.vmem [resolvable:$true] %s295
          %301 = dma.hbm_to_vmem [thread:$0]  %s5, 2048, %s296, [#allocation9], 64, 64, 4
        $region32: #{tpu_custom_call.1} parent=11 // pred_fallthru
          _
        // Predicated region
        $region33: #{tpu_custom_call.1} parent=11 // pred_check
          %p302 = pneg %p174
        $region34: #{tpu_custom_call.1} parent=11 // pred_check_branch
          %304 = sbr.rel (%p302) target = $region36
        $region35: #{tpu_custom_call.1} parent=11 // pred_region
          _
        $region36: #{tpu_custom_call.1} parent=11 // pred_fallthru
          _
        // Predicated region
        $region37: #{tpu_custom_call.1} parent=11 // pred_check
          %p305 = pneg %p195
        $region38: #{tpu_custom_call.1} parent=11 // pred_check_branch
          %307 = sbr.rel (%p305) target = $region40
        $region39: #{tpu_custom_call.1} parent=11 // pred_region
          _
        $region40: #{tpu_custom_call.1} parent=11 // pred_fallthru
          _
        // Predicated region
        $region41: #{tpu_custom_call.1} parent=11 // pred_check
          %p308 = pneg %p216
        $region42: #{tpu_custom_call.1} parent=11 // pred_check_branch
          %310 = sbr.rel (%p308) target = $region44
        $region43: #{tpu_custom_call.1} parent=11 // pred_region
          _
        $region44: #{tpu_custom_call.1} parent=11 // pred_fallthru
          _
      $region12: #{tpu_custom_call.1} parent=5 // pred_fallthru
        _
      %p311 = scmp.lt.s32.totalorder %s22, 2
      // Predicated region
      $region45: #{tpu_custom_call.1} parent=5 // pred_check
        %p312 = pneg %p311
      $region46: #{tpu_custom_call.1} parent=5 // pred_check_branch
        %314 = sbr.rel (%p312) target = $region48
      $region47: #{tpu_custom_call.1} parent=5 // pred_region
        // Predicated region
        $region49: #{tpu_custom_call.1} parent=47 // pred_check
          %p315 = pneg %p42
        $region50: #{tpu_custom_call.1} parent=47 // pred_check_branch
          %317 = sbr.rel (%p315) target = $region52
        $region51: #{tpu_custom_call.1} parent=47 // pred_region
          %s318 = sand.u32 %s32, 1
          %s319 = scalar_lea.sflag [#allocation4], %s318
          %s320 = sand.u32 %s32, 1
          %s321 = smul.addr %s320, 896
          %s322 = scalar_lea.vmem [#allocation3], %s321
          %s323 = smul.u32 32, %s22
          %s325 = ssub.s32 14336, 14336
          %326 = vsyncadd %s319, %s325
          %s327 = smul.addr %s323, 7
          %s328 = smul.addr %s327, 64
          %s329 = scalar_lea.hbm %s0, %s328
          %s330 = sshll.u32 %s322, 4
          %s331 = int_to_ptr.vmem [resolvable:$true] %s330
          %336 = dma.hbm_to_vmem [thread:$0]  %s329, 14336, %s331, %s319, 448, 448, 28
        $region52: #{tpu_custom_call.1} parent=47 // pred_fallthru
          _
      $region48: #{tpu_custom_call.1} parent=5 // pred_fallthru
        _
      %p337 = scmp.le.s32.totalorder 1, %s22
      %p338 = scmp.lt.s32.totalorder %s22, 3
      %p339 = pnand %p337, %p338
      %p340 = pneg %p339
      // Predicated region
      $region53: #{tpu_custom_call.1} parent=5 // pred_check
        _
      $region54: #{tpu_custom_call.1} parent=5 // pred_check_branch
        %342 = sbr.rel (%p339) target = $region56
      $region55: #{tpu_custom_call.1} parent=5 // pred_region
        %s343 = ssub.s32 %s22, 1
        %s344 = sand.u32 %s35, 1
        %s345 = scalar_lea.sflag [#allocation4], %s344
        %s346 = sand.u32 %s35, 1
        %s347 = smul.addr %s346, 896
        %s348 = scalar_lea.vmem [#allocation3], %s347
        // Predicated region
        $region57: #{tpu_custom_call.1} parent=55 // pred_check
          %p349 = pneg %p48
        $region58: #{tpu_custom_call.1} parent=55 // pred_check_branch
          %351 = sbr.rel (%p349) target = $region60
        $region59: #{tpu_custom_call.1} parent=55 // pred_region
          %352 = dma.done %s345, 14336
        $region60: #{tpu_custom_call.1} parent=55 // pred_fallthru
          _
        // Predicated region
        $region61: #{tpu_custom_call.1} parent=55 // pred_check
          %p353 = pneg %p69
        $region62: #{tpu_custom_call.1} parent=55 // pred_check_branch
          %355 = sbr.rel (%p353) target = $region64
        $region63: #{tpu_custom_call.1} parent=55 // pred_region
          %356 = dma.done [#allocation6], 28672
        $region64: #{tpu_custom_call.1} parent=55 // pred_fallthru
          _
        // Predicated region
        $region65: #{tpu_custom_call.1} parent=55 // pred_check
          %p357 = pneg %p111
        $region66: #{tpu_custom_call.1} parent=55 // pred_check_branch
          %359 = sbr.rel (%p357) target = $region68
        $region67: #{tpu_custom_call.1} parent=55 // pred_region
          %360 = dma.done [#allocation6], 8192
        $region68: #{tpu_custom_call.1} parent=55 // pred_fallthru
          _
        // Predicated region
        $region69: #{tpu_custom_call.1} parent=55 // pred_check
          %p361 = pneg %p153
        $region70: #{tpu_custom_call.1} parent=55 // pred_check_branch
          %363 = sbr.rel (%p361) target = $region72
        $region71: #{tpu_custom_call.1} parent=55 // pred_region
          %364 = dma.done [#allocation9], 2048
        $region72: #{tpu_custom_call.1} parent=55 // pred_fallthru
          _
        %s365 = sand.u32 %s35, 1
        %s366 = scalar_lea.sflag [#allocation4], %s365
        %s367 = sand.u32 %s35, 1
        %s368 = smul.addr %s367, 896
        %s369 = scalar_lea.vmem [#allocation3], %s368
        %p370 = pneg %p48
        %p371 = pneg %p45
        %p372 = pneg %p69
        %p373 = pneg %p66
        %p374 = pneg %p90
        %p375 = pneg %p87
        %p376 = pneg %p111
        %p377 = pneg %p108
        %p378 = pneg %p132
        %p379 = pneg %p129
        %p380 = pneg %p153
        %p381 = pneg %p150
        %p382 = pneg %p174
        %p383 = pneg %p171
        %p384 = pneg %p195
        %p385 = pneg %p192
        %p386 = pneg %p216
        %p387 = pneg %p213
        %p388 = pneg %p242
        %p389 = pneg %p239
        %s390 = smul.u32 32, %s27
        %p391 = scmp.lt.s32.totalorder %s390, 63
        %s392 = scalar_select %p391, %s390, 63
        %s393 = smul.addr %s392, 8
        %s394 = scalar_lea.vmem %s9, %s393
        %s395 = smul.u32 32, %s27
        %s396 = smul.u32 32, %s27
        %p397 = scmp.lt.s32.totalorder %s396, 63
        %s398 = scalar_select %p397, %s396, 63
        %s399 = smul.addr %s398, 8
        %s400 = scalar_lea.vmem %s9, %s399
        %s401 = smul.u32 32, %s27
        %v403 = vld [vmem:[%s348] sm:$0xff]
        %v404 = vld [vmem:[%s348 + $0x8] sm:$0xff]
        %v405 = vld [vmem:[%s348 + $0x10] sm:$0xff]
        %v406 = vld [vmem:[%s348 + $0x18] sm:$0xf]
        %v407 = vld [vmem:[%s348 + $0x1c] sm:$0xff]
        %v408 = vld [vmem:[%s348 + $0x24] sm:$0xff]
        %v409 = vld [vmem:[%s348 + $0x2c] sm:$0xff]
        %v410 = vld [vmem:[%s348 + $0x34] sm:$0xf]
        %v411 = vld [vmem:[%s348 + $0x38] sm:$0xff]
        %v412 = vld [vmem:[%s348 + $0x40] sm:$0xff]
        %v413 = vld [vmem:[%s348 + $0x48] sm:$0xff]
        %v414 = vld [vmem:[%s348 + $0x50] sm:$0xf]
        %v415 = vld [vmem:[%s348 + $0x54] sm:$0xff]
        %v416 = vld [vmem:[%s348 + $0x5c] sm:$0xff]
        %v417 = vld [vmem:[%s348 + $0x64] sm:$0xff]
        %v418 = vld [vmem:[%s348 + $0x6c] sm:$0xf]
        %v419 = vld [vmem:[%s348 + $0x70] sm:$0xff]
        %v420 = vld [vmem:[%s348 + $0x78] sm:$0xff]
        %v421 = vld [vmem:[%s348 + $0x80] sm:$0xff]
        %v422 = vld [vmem:[%s348 + $0x88] sm:$0xf]
        %v423 = vld [vmem:[%s348 + $0x8c] sm:$0xff]
        %v424 = vld [vmem:[%s348 + $0x94] sm:$0xff]
        %v425 = vld [vmem:[%s348 + $0x9c] sm:$0xff]
        %v426 = vld [vmem:[%s348 + $0xa4] sm:$0xf]
        %v427 = vld [vmem:[%s348 + $0xa8] sm:$0xff]
        %v428 = vld [vmem:[%s348 + $0xb0] sm:$0xff]
        %v429 = vld [vmem:[%s348 + $0xb8] sm:$0xff]
        %v430 = vld [vmem:[%s348 + $0xc0] sm:$0xf]
        %v431 = vld [vmem:[%s348 + $0xc4] sm:$0xff]
        %v432 = vld [vmem:[%s348 + $0xcc] sm:$0xff]
        %v433 = vld [vmem:[%s348 + $0xd4] sm:$0xff]
        %v434 = vld [vmem:[%s348 + $0xdc] sm:$0xf]
        %v435 = vld [vmem:[%s348 + $0xe0] sm:$0xff]
        %v436 = vld [vmem:[%s348 + $0xe8] sm:$0xff]
        %v437 = vld [vmem:[%s348 + $0xf0] sm:$0xff]
        %v438 = vld [vmem:[%s348 + $0xf8] sm:$0xf]
        %v439 = vld [vmem:[%s348 + $0xfc] sm:$0xff]
        %v440 = vld [vmem:[%s348 + $0x104] sm:$0xff]
        %v441 = vld [vmem:[%s348 + $0x10c] sm:$0xff]
        %v442 = vld [vmem:[%s348 + $0x114] sm:$0xf]
        %v443 = vld [vmem:[%s348 + $0x118] sm:$0xff]
        %v444 = vld [vmem:[%s348 + $0x120] sm:$0xff]
        %v445 = vld [vmem:[%s348 + $0x128] sm:$0xff]
        %v446 = vld [vmem:[%s348 + $0x130] sm:$0xf]
        %v447 = vld [vmem:[%s348 + $0x134] sm:$0xff]
        %v448 = vld [vmem:[%s348 + $0x13c] sm:$0xff]
        %v449 = vld [vmem:[%s348 + $0x144] sm:$0xff]
        %v450 = vld [vmem:[%s348 + $0x14c] sm:$0xf]
        %v451 = vld [vmem:[%s348 + $0x150] sm:$0xff]
        %v452 = vld [vmem:[%s348 + $0x158] sm:$0xff]
        %v453 = vld [vmem:[%s348 + $0x160] sm:$0xff]
        %v454 = vld [vmem:[%s348 + $0x168] sm:$0xf]
        %v455 = vld [vmem:[%s348 + $0x16c] sm:$0xff]
        %v456 = vld [vmem:[%s348 + $0x174] sm:$0xff]
        %v457 = vld [vmem:[%s348 + $0x17c] sm:$0xff]
        %v458 = vld [vmem:[%s348 + $0x184] sm:$0xf]
        %v459 = vld [vmem:[%s348 + $0x188] sm:$0xff]
        %v460 = vld [vmem:[%s348 + $0x190] sm:$0xff]
        %v461 = vld [vmem:[%s348 + $0x198] sm:$0xff]
        %v462 = vld [vmem:[%s348 + $0x1a0] sm:$0xf]
        %v463 = vld [vmem:[%s348 + $0x1a4] sm:$0xff]
        %v464 = vld [vmem:[%s348 + $0x1ac] sm:$0xff]
        %v465 = vld [vmem:[%s348 + $0x1b4] sm:$0xff]
        %v466 = vld [vmem:[%s348 + $0x1bc] sm:$0xf]
        %v467 = vld [vmem:[%s348 + $0x1c0] sm:$0xff]
        %v468 = vld [vmem:[%s348 + $0x1c8] sm:$0xff]
        %v469 = vld [vmem:[%s348 + $0x1d0] sm:$0xff]
        %v470 = vld [vmem:[%s348 + $0x1d8] sm:$0xf]
        %v471 = vld [vmem:[%s348 + $0x1dc] sm:$0xff]
        %v472 = vld [vmem:[%s348 + $0x1e4] sm:$0xff]
        %v473 = vld [vmem:[%s348 + $0x1ec] sm:$0xff]
        %v474 = vld [vmem:[%s348 + $0x1f4] sm:$0xf]
        %v475 = vld [vmem:[%s348 + $0x1f8] sm:$0xff]
        %v476 = vld [vmem:[%s348 + $0x200] sm:$0xff]
        %v477 = vld [vmem:[%s348 + $0x208] sm:$0xff]
        %v478 = vld [vmem:[%s348 + $0x210] sm:$0xf]
        %v479 = vld [vmem:[%s348 + $0x214] sm:$0xff]
        %v480 = vld [vmem:[%s348 + $0x21c] sm:$0xff]
        %v481 = vld [vmem:[%s348 + $0x224] sm:$0xff]
        %v482 = vld [vmem:[%s348 + $0x22c] sm:$0xf]
        %v483 = vld [vmem:[%s348 + $0x230] sm:$0xff]
        %v484 = vld [vmem:[%s348 + $0x238] sm:$0xff]
        %v485 = vld [vmem:[%s348 + $0x240] sm:$0xff]
        %v486 = vld [vmem:[%s348 + $0x248] sm:$0xf]
        %v487 = vld [vmem:[%s348 + $0x24c] sm:$0xff]
        %v488 = vld [vmem:[%s348 + $0x254] sm:$0xff]
        %v489 = vld [vmem:[%s348 + $0x25c] sm:$0xff]
        %v490 = vld [vmem:[%s348 + $0x264] sm:$0xf]
        %v491 = vld [vmem:[%s348 + $0x268] sm:$0xff]
        %v492 = vld [vmem:[%s348 + $0x270] sm:$0xff]
        %v493 = vld [vmem:[%s348 + $0x278] sm:$0xff]
        %v494 = vld [vmem:[%s348 + $0x280] sm:$0xf]
        %v495 = vld [vmem:[%s348 + $0x284] sm:$0xff]
        %v496 = vld [vmem:[%s348 + $0x28c] sm:$0xff]
        %v497 = vld [vmem:[%s348 + $0x294] sm:$0xff]
        %v498 = vld [vmem:[%s348 + $0x29c] sm:$0xf]
        %v499 = vld [vmem:[%s348 + $0x2a0] sm:$0xff]
        %v500 = vld [vmem:[%s348 + $0x2a8] sm:$0xff]
        %v501 = vld [vmem:[%s348 + $0x2b0] sm:$0xff]
        %v502 = vld [vmem:[%s348 + $0x2b8] sm:$0xf]
        %v503 = vld [vmem:[%s348 + $0x2bc] sm:$0xff]
        %v504 = vld [vmem:[%s348 + $0x2c4] sm:$0xff]
        %v505 = vld [vmem:[%s348 + $0x2cc] sm:$0xff]
        %v506 = vld [vmem:[%s348 + $0x2d4] sm:$0xf]
        %v507 = vld [vmem:[%s348 + $0x2d8] sm:$0xff]
        %v508 = vld [vmem:[%s348 + $0x2e0] sm:$0xff]
        %v509 = vld [vmem:[%s348 + $0x2e8] sm:$0xff]
        %v510 = vld [vmem:[%s348 + $0x2f0] sm:$0xf]
        %v511 = vld [vmem:[%s348 + $0x2f4] sm:$0xff]
        %v512 = vld [vmem:[%s348 + $0x2fc] sm:$0xff]
        %v513 = vld [vmem:[%s348 + $0x304] sm:$0xff]
        %v514 = vld [vmem:[%s348 + $0x30c] sm:$0xf]
        %v515 = vld [vmem:[%s348 + $0x310] sm:$0xff]
        %v516 = vld [vmem:[%s348 + $0x318] sm:$0xff]
        %v517 = vld [vmem:[%s348 + $0x320] sm:$0xff]
        %v518 = vld [vmem:[%s348 + $0x328] sm:$0xf]
        %v519 = vld [vmem:[%s348 + $0x32c] sm:$0xff]
        %v520 = vld [vmem:[%s348 + $0x334] sm:$0xff]
        %v521 = vld [vmem:[%s348 + $0x33c] sm:$0xff]
        %v522 = vld [vmem:[%s348 + $0x344] sm:$0xf]
        %v523 = vld [vmem:[%s348 + $0x348] sm:$0xff]
        %v524 = vld [vmem:[%s348 + $0x350] sm:$0xff]
        %v525 = vld [vmem:[%s348 + $0x358] sm:$0xff]
        %v526 = vld [vmem:[%s348 + $0x360] sm:$0xf]
        %v527 = vld [vmem:[%s348 + $0x364] sm:$0xff]
        %v528 = vld [vmem:[%s348 + $0x36c] sm:$0xff]
        %v529 = vld [vmem:[%s348 + $0x374] sm:$0xff]
        %v530 = vld [vmem:[%s348 + $0x37c] sm:$0xf]
        %v531 = vld [vmem:[#allocation5] sm:$0xff]
        %v532 = vld [vmem:[#allocation5 + $0x8] sm:$0xff]
        %v533 = vld [vmem:[#allocation5 + $0x10] sm:$0xff]
        %v534 = vld [vmem:[#allocation5 + $0x18] sm:$0xff]
        %v535 = vld [vmem:[#allocation5 + $0x20] sm:$0xff]
        %v536 = vld [vmem:[#allocation5 + $0x28] sm:$0xff]
        %v537 = vld [vmem:[#allocation5 + $0x30] sm:$0xff]
        %v538 = vld [vmem:[#allocation5 + $0x38] sm:$0xff]
        %v539 = vld [vmem:[#allocation5 + $0x40] sm:$0xff]
        %v540 = vld [vmem:[#allocation5 + $0x48] sm:$0xff]
        %v541 = vld [vmem:[#allocation5 + $0x50] sm:$0xff]
        %v542 = vld [vmem:[#allocation5 + $0x58] sm:$0xff]
        %v543 = vld [vmem:[#allocation5 + $0x60] sm:$0xff]
        %v544 = vld [vmem:[#allocation5 + $0x68] sm:$0xff]
        %v545 = vld [vmem:[#allocation5 + $0x70] sm:$0xff]
        %v546 = vld [vmem:[#allocation5 + $0x78] sm:$0xff]
        %v547 = vld [vmem:[#allocation5 + $0x80] sm:$0xff]
        %v548 = vld [vmem:[#allocation5 + $0x88] sm:$0xff]
        %v549 = vld [vmem:[#allocation5 + $0x90] sm:$0xff]
        %v550 = vld [vmem:[#allocation5 + $0x98] sm:$0xff]
        %v551 = vld [vmem:[#allocation5 + $0xa0] sm:$0xff]
        %v552 = vld [vmem:[#allocation5 + $0xa8] sm:$0xff]
        %v553 = vld [vmem:[#allocation5 + $0xb0] sm:$0xff]
        %v554 = vld [vmem:[#allocation5 + $0xb8] sm:$0xff]
        %v555 = vld [vmem:[#allocation5 + $0xc0] sm:$0xff]
        %v556 = vld [vmem:[#allocation5 + $0xc8] sm:$0xff]
        %v557 = vld [vmem:[#allocation5 + $0xd0] sm:$0xff]
        %v558 = vld [vmem:[#allocation5 + $0xd8] sm:$0xff]
        %v559 = vld [vmem:[#allocation5 + $0xe0] sm:$0xff]
        %v560 = vld [vmem:[#allocation5 + $0xe8] sm:$0xff]
        %v561 = vld [vmem:[#allocation5 + $0xf0] sm:$0xff]
        %v562 = vld [vmem:[#allocation5 + $0xf8] sm:$0xff]
        %v563 = vld [vmem:[#allocation5 + $0x100] sm:$0xff]
        %v564 = vld [vmem:[#allocation5 + $0x108] sm:$0xff]
        %v565 = vld [vmem:[#allocation5 + $0x110] sm:$0xff]
        %v566 = vld [vmem:[#allocation5 + $0x118] sm:$0xff]
        %v567 = vld [vmem:[#allocation5 + $0x120] sm:$0xff]
        %v568 = vld [vmem:[#allocation5 + $0x128] sm:$0xff]
        %v569 = vld [vmem:[#allocation5 + $0x130] sm:$0xff]
        %v570 = vld [vmem:[#allocation5 + $0x138] sm:$0xff]
        %v571 = vld [vmem:[#allocation5 + $0x140] sm:$0xff]
        %v572 = vld [vmem:[#allocation5 + $0x148] sm:$0xff]
        %v573 = vld [vmem:[#allocation5 + $0x150] sm:$0xff]
        %v574 = vld [vmem:[#allocation5 + $0x158] sm:$0xff]
        %v575 = vld [vmem:[#allocation5 + $0x160] sm:$0xff]
        %v576 = vld [vmem:[#allocation5 + $0x168] sm:$0xff]
        %v577 = vld [vmem:[#allocation5 + $0x170] sm:$0xff]
        %v578 = vld [vmem:[#allocation5 + $0x178] sm:$0xff]
        %v579 = vld [vmem:[#allocation5 + $0x180] sm:$0xff]
        %v580 = vld [vmem:[#allocation5 + $0x188] sm:$0xff]
        %v581 = vld [vmem:[#allocation5 + $0x190] sm:$0xff]
        %v582 = vld [vmem:[#allocation5 + $0x198] sm:$0xff]
        %v583 = vld [vmem:[#allocation5 + $0x1a0] sm:$0xff]
        %v584 = vld [vmem:[#allocation5 + $0x1a8] sm:$0xff]
        %v585 = vld [vmem:[#allocation5 + $0x1b0] sm:$0xff]
        %v586 = vld [vmem:[#allocation5 + $0x1b8] sm:$0xff]
        %v587 = vld [vmem:[#allocation5 + $0x1c0] sm:$0xff]
        %v588 = vld [vmem:[#allocation5 + $0x1c8] sm:$0xff]
        %v589 = vld [vmem:[#allocation5 + $0x1d0] sm:$0xff]
        %v590 = vld [vmem:[#allocation5 + $0x1d8] sm:$0xff]
        %v591 = vld [vmem:[#allocation5 + $0x1e0] sm:$0xff]
        %v592 = vld [vmem:[#allocation5 + $0x1e8] sm:$0xff]
        %v593 = vld [vmem:[#allocation5 + $0x1f0] sm:$0xff]
        %v594 = vld [vmem:[#allocation5 + $0x1f8] sm:$0xff]
        %v595 = vld [vmem:[#allocation5 + $0x200] sm:$0xff]
        %v596 = vld [vmem:[#allocation5 + $0x208] sm:$0xff]
        %v597 = vld [vmem:[#allocation5 + $0x210] sm:$0xff]
        %v598 = vld [vmem:[#allocation5 + $0x218] sm:$0xff]
        %v599 = vld [vmem:[#allocation5 + $0x220] sm:$0xff]
        %v600 = vld [vmem:[#allocation5 + $0x228] sm:$0xff]
        %v601 = vld [vmem:[#allocation5 + $0x230] sm:$0xff]
        %v602 = vld [vmem:[#allocation5 + $0x238] sm:$0xff]
        %v603 = vld [vmem:[#allocation5 + $0x240] sm:$0xff]
        %v604 = vld [vmem:[#allocation5 + $0x248] sm:$0xff]
        %v605 = vld [vmem:[#allocation5 + $0x250] sm:$0xff]
        %v606 = vld [vmem:[#allocation5 + $0x258] sm:$0xff]
        %v607 = vld [vmem:[#allocation5 + $0x260] sm:$0xff]
        %v608 = vld [vmem:[#allocation5 + $0x268] sm:$0xff]
        %v609 = vld [vmem:[#allocation5 + $0x270] sm:$0xff]
        %v610 = vld [vmem:[#allocation5 + $0x278] sm:$0xff]
        %v611 = vld [vmem:[#allocation5 + $0x280] sm:$0xff]
        %v612 = vld [vmem:[#allocation5 + $0x288] sm:$0xff]
        %v613 = vld [vmem:[#allocation5 + $0x290] sm:$0xff]
        %v614 = vld [vmem:[#allocation5 + $0x298] sm:$0xff]
        %v615 = vld [vmem:[#allocation5 + $0x2a0] sm:$0xff]
        %v616 = vld [vmem:[#allocation5 + $0x2a8] sm:$0xff]
        %v617 = vld [vmem:[#allocation5 + $0x2b0] sm:$0xff]
        %v618 = vld [vmem:[#allocation5 + $0x2b8] sm:$0xff]
        %v619 = vld [vmem:[#allocation5 + $0x2c0] sm:$0xff]
        %v620 = vld [vmem:[#allocation5 + $0x2c8] sm:$0xff]
        %v621 = vld [vmem:[#allocation5 + $0x2d0] sm:$0xff]
        %v622 = vld [vmem:[#allocation5 + $0x2d8] sm:$0xff]
        %v623 = vld [vmem:[#allocation5 + $0x2e0] sm:$0xff]
        %v624 = vld [vmem:[#allocation5 + $0x2e8] sm:$0xff]
        %v625 = vld [vmem:[#allocation5 + $0x2f0] sm:$0xff]
        %v626 = vld [vmem:[#allocation5 + $0x2f8] sm:$0xff]
        %v627 = vld [vmem:[#allocation5 + $0x300] sm:$0xff]
        %v628 = vld [vmem:[#allocation5 + $0x308] sm:$0xff]
        %v629 = vld [vmem:[#allocation5 + $0x310] sm:$0xff]
        %v630 = vld [vmem:[#allocation5 + $0x318] sm:$0xff]
        %v631 = vld [vmem:[#allocation5 + $0x320] sm:$0xff]
        %v632 = vld [vmem:[#allocation5 + $0x328] sm:$0xff]
        %v633 = vld [vmem:[#allocation5 + $0x330] sm:$0xff]
        %v634 = vld [vmem:[#allocation5 + $0x338] sm:$0xff]
        %v635 = vld [vmem:[#allocation5 + $0x340] sm:$0xff]
        %v636 = vld [vmem:[#allocation5 + $0x348] sm:$0xff]
        %v637 = vld [vmem:[#allocation5 + $0x350] sm:$0xff]
        %v638 = vld [vmem:[#allocation5 + $0x358] sm:$0xff]
        %v639 = vld [vmem:[#allocation5 + $0x360] sm:$0xff]
        %v640 = vld [vmem:[#allocation5 + $0x368] sm:$0xff]
        %v641 = vld [vmem:[#allocation5 + $0x370] sm:$0xff]
        %v642 = vld [vmem:[#allocation5 + $0x378] sm:$0xff]
        %v643 = vld [vmem:[#allocation5 + $0x380] sm:$0xff]
        %v644 = vld [vmem:[#allocation5 + $0x388] sm:$0xff]
        %v645 = vld [vmem:[#allocation5 + $0x390] sm:$0xff]
        %v646 = vld [vmem:[#allocation5 + $0x398] sm:$0xff]
        %v647 = vld [vmem:[#allocation5 + $0x3a0] sm:$0xff]
        %v648 = vld [vmem:[#allocation5 + $0x3a8] sm:$0xff]
        %v649 = vld [vmem:[#allocation5 + $0x3b0] sm:$0xff]
        %v650 = vld [vmem:[#allocation5 + $0x3b8] sm:$0xff]
        %v651 = vld [vmem:[#allocation5 + $0x3c0] sm:$0xff]
        %v652 = vld [vmem:[#allocation5 + $0x3c8] sm:$0xff]
        %v653 = vld [vmem:[#allocation5 + $0x3d0] sm:$0xff]
        %v654 = vld [vmem:[#allocation5 + $0x3d8] sm:$0xff]
        %v655 = vld [vmem:[#allocation5 + $0x3e0] sm:$0xff]
        %v656 = vld [vmem:[#allocation5 + $0x3e8] sm:$0xff]
        %v657 = vld [vmem:[#allocation5 + $0x3f0] sm:$0xff]
        %v658 = vld [vmem:[#allocation5 + $0x3f8] sm:$0xff]
        %v659 = vld [vmem:[#allocation5 + $0x400] sm:$0xff]
        %v660 = vld [vmem:[#allocation5 + $0x408] sm:$0xff]
        %v661 = vld [vmem:[#allocation5 + $0x410] sm:$0xff]
        %v662 = vld [vmem:[#allocation5 + $0x418] sm:$0xff]
        %v663 = vld [vmem:[#allocation5 + $0x420] sm:$0xff]
        %v664 = vld [vmem:[#allocation5 + $0x428] sm:$0xff]
        %v665 = vld [vmem:[#allocation5 + $0x430] sm:$0xff]
        %v666 = vld [vmem:[#allocation5 + $0x438] sm:$0xff]
        %v667 = vld [vmem:[#allocation5 + $0x440] sm:$0xff]
        %v668 = vld [vmem:[#allocation5 + $0x448] sm:$0xff]
        %v669 = vld [vmem:[#allocation5 + $0x450] sm:$0xff]
        %v670 = vld [vmem:[#allocation5 + $0x458] sm:$0xff]
        %v671 = vld [vmem:[#allocation5 + $0x460] sm:$0xff]
        %v672 = vld [vmem:[#allocation5 + $0x468] sm:$0xff]
        %v673 = vld [vmem:[#allocation5 + $0x470] sm:$0xff]
        %v674 = vld [vmem:[#allocation5 + $0x478] sm:$0xff]
        %v675 = vld [vmem:[#allocation5 + $0x480] sm:$0xff]
        %v676 = vld [vmem:[#allocation5 + $0x488] sm:$0xff]
        %v677 = vld [vmem:[#allocation5 + $0x490] sm:$0xff]
        %v678 = vld [vmem:[#allocation5 + $0x498] sm:$0xff]
        %v679 = vld [vmem:[#allocation5 + $0x4a0] sm:$0xff]
        %v680 = vld [vmem:[#allocation5 + $0x4a8] sm:$0xff]
        %v681 = vld [vmem:[#allocation5 + $0x4b0] sm:$0xff]
        %v682 = vld [vmem:[#allocation5 + $0x4b8] sm:$0xff]
        %v683 = vld [vmem:[#allocation5 + $0x4c0] sm:$0xff]
        %v684 = vld [vmem:[#allocation5 + $0x4c8] sm:$0xff]
        %v685 = vld [vmem:[#allocation5 + $0x4d0] sm:$0xff]
        %v686 = vld [vmem:[#allocation5 + $0x4d8] sm:$0xff]
        %v687 = vld [vmem:[#allocation5 + $0x4e0] sm:$0xff]
        %v688 = vld [vmem:[#allocation5 + $0x4e8] sm:$0xff]
        %v689 = vld [vmem:[#allocation5 + $0x4f0] sm:$0xff]
        %v690 = vld [vmem:[#allocation5 + $0x4f8] sm:$0xff]
        %v691 = vld [vmem:[#allocation5 + $0x500] sm:$0xff]
        %v692 = vld [vmem:[#allocation5 + $0x508] sm:$0xff]
        %v693 = vld [vmem:[#allocation5 + $0x510] sm:$0xff]
        %v694 = vld [vmem:[#allocation5 + $0x518] sm:$0xff]
        %v695 = vld [vmem:[#allocation5 + $0x520] sm:$0xff]
        %v696 = vld [vmem:[#allocation5 + $0x528] sm:$0xff]
        %v697 = vld [vmem:[#allocation5 + $0x530] sm:$0xff]
        %v698 = vld [vmem:[#allocation5 + $0x538] sm:$0xff]
        %v699 = vld [vmem:[#allocation5 + $0x540] sm:$0xff]
        %v700 = vld [vmem:[#allocation5 + $0x548] sm:$0xff]
        %v701 = vld [vmem:[#allocation5 + $0x550] sm:$0xff]
        %v702 = vld [vmem:[#allocation5 + $0x558] sm:$0xff]
        %v703 = vld [vmem:[#allocation5 + $0x560] sm:$0xff]
        %v704 = vld [vmem:[#allocation5 + $0x568] sm:$0xff]
        %v705 = vld [vmem:[#allocation5 + $0x570] sm:$0xff]
        %v706 = vld [vmem:[#allocation5 + $0x578] sm:$0xff]
        %v707 = vld [vmem:[#allocation5 + $0x580] sm:$0xff]
        %v708 = vld [vmem:[#allocation5 + $0x588] sm:$0xff]
        %v709 = vld [vmem:[#allocation5 + $0x590] sm:$0xff]
        %v710 = vld [vmem:[#allocation5 + $0x598] sm:$0xff]
        %v711 = vld [vmem:[#allocation5 + $0x5a0] sm:$0xff]
        %v712 = vld [vmem:[#allocation5 + $0x5a8] sm:$0xff]
        %v713 = vld [vmem:[#allocation5 + $0x5b0] sm:$0xff]
        %v714 = vld [vmem:[#allocation5 + $0x5b8] sm:$0xff]
        %v715 = vld [vmem:[#allocation5 + $0x5c0] sm:$0xff]
        %v716 = vld [vmem:[#allocation5 + $0x5c8] sm:$0xff]
        %v717 = vld [vmem:[#allocation5 + $0x5d0] sm:$0xff]
        %v718 = vld [vmem:[#allocation5 + $0x5d8] sm:$0xff]
        %v719 = vld [vmem:[#allocation5 + $0x5e0] sm:$0xff]
        %v720 = vld [vmem:[#allocation5 + $0x5e8] sm:$0xff]
        %v721 = vld [vmem:[#allocation5 + $0x5f0] sm:$0xff]
        %v722 = vld [vmem:[#allocation5 + $0x5f8] sm:$0xff]
        %v723 = vld [vmem:[#allocation5 + $0x600] sm:$0xff]
        %v724 = vld [vmem:[#allocation5 + $0x608] sm:$0xff]
        %v725 = vld [vmem:[#allocation5 + $0x610] sm:$0xff]
        %v726 = vld [vmem:[#allocation5 + $0x618] sm:$0xff]
        %v727 = vld [vmem:[#allocation5 + $0x620] sm:$0xff]
        %v728 = vld [vmem:[#allocation5 + $0x628] sm:$0xff]
        %v729 = vld [vmem:[#allocation5 + $0x630] sm:$0xff]
        %v730 = vld [vmem:[#allocation5 + $0x638] sm:$0xff]
        %v731 = vld [vmem:[#allocation5 + $0x640] sm:$0xff]
        %v732 = vld [vmem:[#allocation5 + $0x648] sm:$0xff]
        %v733 = vld [vmem:[#allocation5 + $0x650] sm:$0xff]
        %v734 = vld [vmem:[#allocation5 + $0x658] sm:$0xff]
        %v735 = vld [vmem:[#allocation5 + $0x660] sm:$0xff]
        %v736 = vld [vmem:[#allocation5 + $0x668] sm:$0xff]
        %v737 = vld [vmem:[#allocation5 + $0x670] sm:$0xff]
        %v738 = vld [vmem:[#allocation5 + $0x678] sm:$0xff]
        %v739 = vld [vmem:[#allocation5 + $0x680] sm:$0xff]
        %v740 = vld [vmem:[#allocation5 + $0x688] sm:$0xff]
        %v741 = vld [vmem:[#allocation5 + $0x690] sm:$0xff]
        %v742 = vld [vmem:[#allocation5 + $0x698] sm:$0xff]
        %v743 = vld [vmem:[#allocation5 + $0x6a0] sm:$0xff]
        %v744 = vld [vmem:[#allocation5 + $0x6a8] sm:$0xff]
        %v745 = vld [vmem:[#allocation5 + $0x6b0] sm:$0xff]
        %v746 = vld [vmem:[#allocation5 + $0x6b8] sm:$0xff]
        %v747 = vld [vmem:[#allocation5 + $0x6c0] sm:$0xff]
        %v748 = vld [vmem:[#allocation5 + $0x6c8] sm:$0xff]
        %v749 = vld [vmem:[#allocation5 + $0x6d0] sm:$0xff]
        %v750 = vld [vmem:[#allocation5 + $0x6d8] sm:$0xff]
        %v751 = vld [vmem:[#allocation5 + $0x6e0] sm:$0xff]
        %v752 = vld [vmem:[#allocation5 + $0x6e8] sm:$0xff]
        %v753 = vld [vmem:[#allocation5 + $0x6f0] sm:$0xff]
        %v754 = vld [vmem:[#allocation5 + $0x6f8] sm:$0xff]
        %v755 = vld [vmem:[%s2] sm:$0xf]
        %v757 = vlaneseq
        %v758 = vshrl.u32 %v757, 7
        %v759 = vsub.s32 0, %v758
        %v760 = vrot.slane %v755, %v759
        %v761 = vlaneseq
        %v762 = vshrl.u32 %v761, 7
        %v763 = vsub.s32 1, %v762
        %v764 = vrot.slane %v755, %v763
        %v765 = vlaneseq
        %v766 = vshrl.u32 %v765, 7
        %v767 = vsub.s32 2, %v766
        %v768 = vrot.slane %v755, %v767
        %v769 = vlaneseq
        %v770 = vshrl.u32 %v769, 7
        %v771 = vsub.s32 3, %v770
        %v772 = vrot.slane %v755, %v771
        %v905 = vunpack.c.l.b16 %v403
        %v906 = vunpack.c.h.b16 %v403
        %v907 = vunpack.c.l.b16 %v404
        %v908 = vunpack.c.h.b16 %v404
        %v909 = vunpack.c.l.b16 %v405
        %v910 = vunpack.c.h.b16 %v405
        %v911 = vunpack.c.l.b16 %v406
        %v912 = vunpack.c.l.b16 %v407
        %v913 = vunpack.c.h.b16 %v407
        %v914 = vunpack.c.l.b16 %v408
        %v915 = vunpack.c.h.b16 %v408
        %v916 = vunpack.c.l.b16 %v409
        %v917 = vunpack.c.h.b16 %v409
        %v918 = vunpack.c.l.b16 %v410
        %v919 = vunpack.c.l.b16 %v411
        %v920 = vunpack.c.h.b16 %v411
        %v921 = vunpack.c.l.b16 %v412
        %v922 = vunpack.c.h.b16 %v412
        %v923 = vunpack.c.l.b16 %v413
        %v924 = vunpack.c.h.b16 %v413
        %v925 = vunpack.c.l.b16 %v414
        %v926 = vunpack.c.l.b16 %v415
        %v927 = vunpack.c.h.b16 %v415
        %v928 = vunpack.c.l.b16 %v416
        %v929 = vunpack.c.h.b16 %v416
        %v930 = vunpack.c.l.b16 %v417
        %v931 = vunpack.c.h.b16 %v417
        %v932 = vunpack.c.l.b16 %v418
        %v933 = vunpack.c.l.b16 %v419
        %v934 = vunpack.c.h.b16 %v419
        %v935 = vunpack.c.l.b16 %v420
        %v936 = vunpack.c.h.b16 %v420
        %v937 = vunpack.c.l.b16 %v421
        %v938 = vunpack.c.h.b16 %v421
        %v939 = vunpack.c.l.b16 %v422
        %v940 = vunpack.c.l.b16 %v423
        %v941 = vunpack.c.h.b16 %v423
        %v942 = vunpack.c.l.b16 %v424
        %v943 = vunpack.c.h.b16 %v424
        %v944 = vunpack.c.l.b16 %v425
        %v945 = vunpack.c.h.b16 %v425
        %v946 = vunpack.c.l.b16 %v426
        %v947 = vunpack.c.l.b16 %v427
        %v948 = vunpack.c.h.b16 %v427
        %v949 = vunpack.c.l.b16 %v428
        %v950 = vunpack.c.h.b16 %v428
        %v951 = vunpack.c.l.b16 %v429
        %v952 = vunpack.c.h.b16 %v429
        %v953 = vunpack.c.l.b16 %v430
        %v954 = vunpack.c.l.b16 %v431
        %v955 = vunpack.c.h.b16 %v431
        %v956 = vunpack.c.l.b16 %v432
        %v957 = vunpack.c.h.b16 %v432
        %v958 = vunpack.c.l.b16 %v433
        %v959 = vunpack.c.h.b16 %v433
        %v960 = vunpack.c.l.b16 %v434
        %v961 = vunpack.c.l.b16 %v435
        %v962 = vunpack.c.h.b16 %v435
        %v963 = vunpack.c.l.b16 %v436
        %v964 = vunpack.c.h.b16 %v436
        %v965 = vunpack.c.l.b16 %v437
        %v966 = vunpack.c.h.b16 %v437
        %v967 = vunpack.c.l.b16 %v438
        %v968 = vunpack.c.l.b16 %v439
        %v969 = vunpack.c.h.b16 %v439
        %v970 = vunpack.c.l.b16 %v440
        %v971 = vunpack.c.h.b16 %v440
        %v972 = vunpack.c.l.b16 %v441
        %v973 = vunpack.c.h.b16 %v441
        %v974 = vunpack.c.l.b16 %v442
        %v975 = vunpack.c.l.b16 %v443
        %v976 = vunpack.c.h.b16 %v443
        %v977 = vunpack.c.l.b16 %v444
        %v978 = vunpack.c.h.b16 %v444
        %v979 = vunpack.c.l.b16 %v445
        %v980 = vunpack.c.h.b16 %v445
        %v981 = vunpack.c.l.b16 %v446
        %v982 = vunpack.c.l.b16 %v447
        %v983 = vunpack.c.h.b16 %v447
        %v984 = vunpack.c.l.b16 %v448
        %v985 = vunpack.c.h.b16 %v448
        %v986 = vunpack.c.l.b16 %v449
        %v987 = vunpack.c.h.b16 %v449
        %v988 = vunpack.c.l.b16 %v450
        %v989 = vunpack.c.l.b16 %v451
        %v990 = vunpack.c.h.b16 %v451
        %v991 = vunpack.c.l.b16 %v452
        %v992 = vunpack.c.h.b16 %v452
        %v993 = vunpack.c.l.b16 %v453
        %v994 = vunpack.c.h.b16 %v453
        %v995 = vunpack.c.l.b16 %v454
        %v996 = vunpack.c.l.b16 %v455
        %v997 = vunpack.c.h.b16 %v455
        %v998 = vunpack.c.l.b16 %v456
        %v999 = vunpack.c.h.b16 %v456
        %v1000 = vunpack.c.l.b16 %v457
        %v1001 = vunpack.c.h.b16 %v457
        %v1002 = vunpack.c.l.b16 %v458
        %v1003 = vunpack.c.l.b16 %v459
        %v1004 = vunpack.c.h.b16 %v459
        %v1005 = vunpack.c.l.b16 %v460
        %v1006 = vunpack.c.h.b16 %v460
        %v1007 = vunpack.c.l.b16 %v461
        %v1008 = vunpack.c.h.b16 %v461
        %v1009 = vunpack.c.l.b16 %v462
        %v1010 = vunpack.c.l.b16 %v463
        %v1011 = vunpack.c.h.b16 %v463
        %v1012 = vunpack.c.l.b16 %v464
        %v1013 = vunpack.c.h.b16 %v464
        %v1014 = vunpack.c.l.b16 %v465
        %v1015 = vunpack.c.h.b16 %v465
        %v1016 = vunpack.c.l.b16 %v466
        %v1017 = vunpack.c.l.b16 %v467
        %v1018 = vunpack.c.h.b16 %v467
        %v1019 = vunpack.c.l.b16 %v468
        %v1020 = vunpack.c.h.b16 %v468
        %v1021 = vunpack.c.l.b16 %v469
        %v1022 = vunpack.c.h.b16 %v469
        %v1023 = vunpack.c.l.b16 %v470
        %v1024 = vunpack.c.l.b16 %v471
        %v1025 = vunpack.c.h.b16 %v471
        %v1026 = vunpack.c.l.b16 %v472
        %v1027 = vunpack.c.h.b16 %v472
        %v1028 = vunpack.c.l.b16 %v473
        %v1029 = vunpack.c.h.b16 %v473
        %v1030 = vunpack.c.l.b16 %v474
        %v1031 = vunpack.c.l.b16 %v475
        %v1032 = vunpack.c.h.b16 %v475
        %v1033 = vunpack.c.l.b16 %v476
        %v1034 = vunpack.c.h.b16 %v476
        %v1035 = vunpack.c.l.b16 %v477
        %v1036 = vunpack.c.h.b16 %v477
        %v1037 = vunpack.c.l.b16 %v478
        %v1038 = vunpack.c.l.b16 %v479
        %v1039 = vunpack.c.h.b16 %v479
        %v1040 = vunpack.c.l.b16 %v480
        %v1041 = vunpack.c.h.b16 %v480
        %v1042 = vunpack.c.l.b16 %v481
        %v1043 = vunpack.c.h.b16 %v481
        %v1044 = vunpack.c.l.b16 %v482
        %v1045 = vunpack.c.l.b16 %v483
        %v1046 = vunpack.c.h.b16 %v483
        %v1047 = vunpack.c.l.b16 %v484
        %v1048 = vunpack.c.h.b16 %v484
        %v1049 = vunpack.c.l.b16 %v485
        %v1050 = vunpack.c.h.b16 %v485
        %v1051 = vunpack.c.l.b16 %v486
        %v1052 = vunpack.c.l.b16 %v487
        %v1053 = vunpack.c.h.b16 %v487
        %v1054 = vunpack.c.l.b16 %v488
        %v1055 = vunpack.c.h.b16 %v488
        %v1056 = vunpack.c.l.b16 %v489
        %v1057 = vunpack.c.h.b16 %v489
        %v1058 = vunpack.c.l.b16 %v490
        %v1059 = vunpack.c.l.b16 %v491
        %v1060 = vunpack.c.h.b16 %v491
        %v1061 = vunpack.c.l.b16 %v492
        %v1062 = vunpack.c.h.b16 %v492
        %v1063 = vunpack.c.l.b16 %v493
        %v1064 = vunpack.c.h.b16 %v493
        %v1065 = vunpack.c.l.b16 %v494
        %v1066 = vunpack.c.l.b16 %v495
        %v1067 = vunpack.c.h.b16 %v495
        %v1068 = vunpack.c.l.b16 %v496
        %v1069 = vunpack.c.h.b16 %v496
        %v1070 = vunpack.c.l.b16 %v497
        %v1071 = vunpack.c.h.b16 %v497
        %v1072 = vunpack.c.l.b16 %v498
        %v1073 = vunpack.c.l.b16 %v499
        %v1074 = vunpack.c.h.b16 %v499
        %v1075 = vunpack.c.l.b16 %v500
        %v1076 = vunpack.c.h.b16 %v500
        %v1077 = vunpack.c.l.b16 %v501
        %v1078 = vunpack.c.h.b16 %v501
        %v1079 = vunpack.c.l.b16 %v502
        %v1080 = vunpack.c.l.b16 %v503
        %v1081 = vunpack.c.h.b16 %v503
        %v1082 = vunpack.c.l.b16 %v504
        %v1083 = vunpack.c.h.b16 %v504
        %v1084 = vunpack.c.l.b16 %v505
        %v1085 = vunpack.c.h.b16 %v505
        %v1086 = vunpack.c.l.b16 %v506
        %v1087 = vunpack.c.l.b16 %v507
        %v1088 = vunpack.c.h.b16 %v507
        %v1089 = vunpack.c.l.b16 %v508
        %v1090 = vunpack.c.h.b16 %v508
        %v1091 = vunpack.c.l.b16 %v509
        %v1092 = vunpack.c.h.b16 %v509
        %v1093 = vunpack.c.l.b16 %v510
        %v1094 = vunpack.c.l.b16 %v511
        %v1095 = vunpack.c.h.b16 %v511
        %v1096 = vunpack.c.l.b16 %v512
        %v1097 = vunpack.c.h.b16 %v512
        %v1098 = vunpack.c.l.b16 %v513
        %v1099 = vunpack.c.h.b16 %v513
        %v1100 = vunpack.c.l.b16 %v514
        %v1101 = vunpack.c.l.b16 %v515
        %v1102 = vunpack.c.h.b16 %v515
        %v1103 = vunpack.c.l.b16 %v516
        %v1104 = vunpack.c.h.b16 %v516
        %v1105 = vunpack.c.l.b16 %v517
        %v1106 = vunpack.c.h.b16 %v517
        %v1107 = vunpack.c.l.b16 %v518
        %v1108 = vunpack.c.l.b16 %v519
        %v1109 = vunpack.c.h.b16 %v519
        %v1110 = vunpack.c.l.b16 %v520
        %v1111 = vunpack.c.h.b16 %v520
        %v1112 = vunpack.c.l.b16 %v521
        %v1113 = vunpack.c.h.b16 %v521
        %v1114 = vunpack.c.l.b16 %v522
        %v1115 = vunpack.c.l.b16 %v523
        %v1116 = vunpack.c.h.b16 %v523
        %v1117 = vunpack.c.l.b16 %v524
        %v1118 = vunpack.c.h.b16 %v524
        %v1119 = vunpack.c.l.b16 %v525
        %v1120 = vunpack.c.h.b16 %v525
        %v1121 = vunpack.c.l.b16 %v526
        %v1122 = vunpack.c.l.b16 %v527
        %v1123 = vunpack.c.h.b16 %v527
        %v1124 = vunpack.c.l.b16 %v528
        %v1125 = vunpack.c.h.b16 %v528
        %v1126 = vunpack.c.l.b16 %v529
        %v1127 = vunpack.c.h.b16 %v529
        %v1128 = vunpack.c.l.b16 %v530
        %v1129 = vpack.c.b16 %v912, %v905
        %v1130 = vpack.c.b16 %v913, %v906
        %v1131 = vpack.c.b16 %v914, %v907
        %v1132 = vpack.c.b16 %v915, %v908
        %v1133 = vpack.c.b16 %v916, %v909
        %v1134 = vpack.c.b16 %v917, %v910
        %v1135 = vpack.c.b16 %v918, %v911
        %v1136 = vpack.c.b16 %v926, %v919
        %v1137 = vpack.c.b16 %v927, %v920
        %v1138 = vpack.c.b16 %v928, %v921
        %v1139 = vpack.c.b16 %v929, %v922
        %v1140 = vpack.c.b16 %v930, %v923
        %v1141 = vpack.c.b16 %v931, %v924
        %v1142 = vpack.c.b16 %v932, %v925
        %v1143 = vpack.c.b16 %v940, %v933
        %v1144 = vpack.c.b16 %v941, %v934
        %v1145 = vpack.c.b16 %v942, %v935
        %v1146 = vpack.c.b16 %v943, %v936
        %v1147 = vpack.c.b16 %v944, %v937
        %v1148 = vpack.c.b16 %v945, %v938
        %v1149 = vpack.c.b16 %v946, %v939
        %v1150 = vpack.c.b16 %v954, %v947
        %v1151 = vpack.c.b16 %v955, %v948
        %v1152 = vpack.c.b16 %v956, %v949
        %v1153 = vpack.c.b16 %v957, %v950
        %v1154 = vpack.c.b16 %v958, %v951
        %v1155 = vpack.c.b16 %v959, %v952
        %v1156 = vpack.c.b16 %v960, %v953
        %v1157 = vpack.c.b16 %v968, %v961
        %v1158 = vpack.c.b16 %v969, %v962
        %v1159 = vpack.c.b16 %v970, %v963
        %v1160 = vpack.c.b16 %v971, %v964
        %v1161 = vpack.c.b16 %v972, %v965
        %v1162 = vpack.c.b16 %v973, %v966
        %v1163 = vpack.c.b16 %v974, %v967
        %v1164 = vpack.c.b16 %v982, %v975
        %v1165 = vpack.c.b16 %v983, %v976
        %v1166 = vpack.c.b16 %v984, %v977
        %v1167 = vpack.c.b16 %v985, %v978
        %v1168 = vpack.c.b16 %v986, %v979
        %v1169 = vpack.c.b16 %v987, %v980
        %v1170 = vpack.c.b16 %v988, %v981
        %v1171 = vpack.c.b16 %v996, %v989
        %v1172 = vpack.c.b16 %v997, %v990
        %v1173 = vpack.c.b16 %v998, %v991
        %v1174 = vpack.c.b16 %v999, %v992
        %v1175 = vpack.c.b16 %v1000, %v993
        %v1176 = vpack.c.b16 %v1001, %v994
        %v1177 = vpack.c.b16 %v1002, %v995
        %v1178 = vpack.c.b16 %v1010, %v1003
        %v1179 = vpack.c.b16 %v1011, %v1004
        %v1180 = vpack.c.b16 %v1012, %v1005
        %v1181 = vpack.c.b16 %v1013, %v1006
        %v1182 = vpack.c.b16 %v1014, %v1007
        %v1183 = vpack.c.b16 %v1015, %v1008
        %v1184 = vpack.c.b16 %v1016, %v1009
        %v1185 = vpack.c.b16 %v1024, %v1017
        %v1186 = vpack.c.b16 %v1025, %v1018
        %v1187 = vpack.c.b16 %v1026, %v1019
        %v1188 = vpack.c.b16 %v1027, %v1020
        %v1189 = vpack.c.b16 %v1028, %v1021
        %v1190 = vpack.c.b16 %v1029, %v1022
        %v1191 = vpack.c.b16 %v1030, %v1023
        %v1192 = vpack.c.b16 %v1038, %v1031
        %v1193 = vpack.c.b16 %v1039, %v1032
        %v1194 = vpack.c.b16 %v1040, %v1033
        %v1195 = vpack.c.b16 %v1041, %v1034
        %v1196 = vpack.c.b16 %v1042, %v1035
        %v1197 = vpack.c.b16 %v1043, %v1036
        %v1198 = vpack.c.b16 %v1044, %v1037
        %v1199 = vpack.c.b16 %v1052, %v1045
        %v1200 = vpack.c.b16 %v1053, %v1046
        %v1201 = vpack.c.b16 %v1054, %v1047
        %v1202 = vpack.c.b16 %v1055, %v1048
        %v1203 = vpack.c.b16 %v1056, %v1049
        %v1204 = vpack.c.b16 %v1057, %v1050
        %v1205 = vpack.c.b16 %v1058, %v1051
        %v1206 = vpack.c.b16 %v1066, %v1059
        %v1207 = vpack.c.b16 %v1067, %v1060
        %v1208 = vpack.c.b16 %v1068, %v1061
        %v1209 = vpack.c.b16 %v1069, %v1062
        %v1210 = vpack.c.b16 %v1070, %v1063
        %v1211 = vpack.c.b16 %v1071, %v1064
        %v1212 = vpack.c.b16 %v1072, %v1065
        %v1213 = vpack.c.b16 %v1080, %v1073
        %v1214 = vpack.c.b16 %v1081, %v1074
        %v1215 = vpack.c.b16 %v1082, %v1075
        %v1216 = vpack.c.b16 %v1083, %v1076
        %v1217 = vpack.c.b16 %v1084, %v1077
        %v1218 = vpack.c.b16 %v1085, %v1078
        %v1219 = vpack.c.b16 %v1086, %v1079
        %v1220 = vpack.c.b16 %v1094, %v1087
        %v1221 = vpack.c.b16 %v1095, %v1088
        %v1222 = vpack.c.b16 %v1096, %v1089
        %v1223 = vpack.c.b16 %v1097, %v1090
        %v1224 = vpack.c.b16 %v1098, %v1091
        %v1225 = vpack.c.b16 %v1099, %v1092
        %v1226 = vpack.c.b16 %v1100, %v1093
        %v1227 = vpack.c.b16 %v1108, %v1101
        %v1228 = vpack.c.b16 %v1109, %v1102
        %v1229 = vpack.c.b16 %v1110, %v1103
        %v1230 = vpack.c.b16 %v1111, %v1104
        %v1231 = vpack.c.b16 %v1112, %v1105
        %v1232 = vpack.c.b16 %v1113, %v1106
        %v1233 = vpack.c.b16 %v1114, %v1107
        %v1234 = vpack.c.b16 %v1122, %v1115
        %v1235 = vpack.c.b16 %v1123, %v1116
        %v1236 = vpack.c.b16 %v1124, %v1117
        %v1237 = vpack.c.b16 %v1125, %v1118
        %v1238 = vpack.c.b16 %v1126, %v1119
        %v1239 = vpack.c.b16 %v1127, %v1120
        %v1240 = vpack.c.b16 %v1128, %v1121
        %v1577 = vunpack.c.l.b16 %v531
        %v1578 = vunpack.c.h.b16 %v531
        %v1579 = vunpack.c.l.b16 %v532
        %v1580 = vunpack.c.h.b16 %v532
        %v1581 = vunpack.c.l.b16 %v533
        %v1582 = vunpack.c.h.b16 %v533
        %v1583 = vunpack.c.l.b16 %v534
        %v1584 = vunpack.c.h.b16 %v534
        %v1585 = vunpack.c.l.b16 %v535
        %v1586 = vunpack.c.h.b16 %v535
        %v1587 = vunpack.c.l.b16 %v536
        %v1588 = vunpack.c.h.b16 %v536
        %v1589 = vunpack.c.l.b16 %v537
        %v1590 = vunpack.c.h.b16 %v537
        %v1591 = vunpack.c.l.b16 %v538
        %v1592 = vunpack.c.h.b16 %v538
        %v1593 = vunpack.c.l.b16 %v539
        %v1594 = vunpack.c.h.b16 %v539
        %v1595 = vunpack.c.l.b16 %v540
        %v1596 = vunpack.c.h.b16 %v540
        %v1597 = vunpack.c.l.b16 %v541
        %v1598 = vunpack.c.h.b16 %v541
        %v1599 = vunpack.c.l.b16 %v542
        %v1600 = vunpack.c.h.b16 %v542
        %v1601 = vunpack.c.l.b16 %v543
        %v1602 = vunpack.c.h.b16 %v543
        %v1603 = vunpack.c.l.b16 %v544
        %v1604 = vunpack.c.h.b16 %v544
        %v1605 = vunpack.c.l.b16 %v545
        %v1606 = vunpack.c.h.b16 %v545
        %v1607 = vunpack.c.l.b16 %v546
        %v1608 = vunpack.c.h.b16 %v546
        %v1609 = vunpack.c.l.b16 %v547
        %v1610 = vunpack.c.h.b16 %v547
        %v1611 = vunpack.c.l.b16 %v548
        %v1612 = vunpack.c.h.b16 %v548
        %v1613 = vunpack.c.l.b16 %v549
        %v1614 = vunpack.c.h.b16 %v549
        %v1615 = vunpack.c.l.b16 %v550
        %v1616 = vunpack.c.h.b16 %v550
        %v1617 = vunpack.c.l.b16 %v551
        %v1618 = vunpack.c.h.b16 %v551
        %v1619 = vunpack.c.l.b16 %v552
        %v1620 = vunpack.c.h.b16 %v552
        %v1621 = vunpack.c.l.b16 %v553
        %v1622 = vunpack.c.h.b16 %v553
        %v1623 = vunpack.c.l.b16 %v554
        %v1624 = vunpack.c.h.b16 %v554
        %v1625 = vunpack.c.l.b16 %v555
        %v1626 = vunpack.c.h.b16 %v555
        %v1627 = vunpack.c.l.b16 %v556
        %v1628 = vunpack.c.h.b16 %v556
        %v1629 = vunpack.c.l.b16 %v557
        %v1630 = vunpack.c.h.b16 %v557
        %v1631 = vunpack.c.l.b16 %v558
        %v1632 = vunpack.c.h.b16 %v558
        %v1633 = vunpack.c.l.b16 %v559
        %v1634 = vunpack.c.h.b16 %v559
        %v1635 = vunpack.c.l.b16 %v560
        %v1636 = vunpack.c.h.b16 %v560
        %v1637 = vunpack.c.l.b16 %v561
        %v1638 = vunpack.c.h.b16 %v561
        %v1639 = vunpack.c.l.b16 %v562
        %v1640 = vunpack.c.h.b16 %v562
        %v1641 = vunpack.c.l.b16 %v563
        %v1642 = vunpack.c.h.b16 %v563
        %v1643 = vunpack.c.l.b16 %v564
        %v1644 = vunpack.c.h.b16 %v564
        %v1645 = vunpack.c.l.b16 %v565
        %v1646 = vunpack.c.h.b16 %v565
        %v1647 = vunpack.c.l.b16 %v566
        %v1648 = vunpack.c.h.b16 %v566
        %v1649 = vunpack.c.l.b16 %v567
        %v1650 = vunpack.c.h.b16 %v567
        %v1651 = vunpack.c.l.b16 %v568
        %v1652 = vunpack.c.h.b16 %v568
        %v1653 = vunpack.c.l.b16 %v569
        %v1654 = vunpack.c.h.b16 %v569
        %v1655 = vunpack.c.l.b16 %v570
        %v1656 = vunpack.c.h.b16 %v570
        %v1657 = vunpack.c.l.b16 %v571
        %v1658 = vunpack.c.h.b16 %v571
        %v1659 = vunpack.c.l.b16 %v572
        %v1660 = vunpack.c.h.b16 %v572
        %v1661 = vunpack.c.l.b16 %v573
        %v1662 = vunpack.c.h.b16 %v573
        %v1663 = vunpack.c.l.b16 %v574
        %v1664 = vunpack.c.h.b16 %v574
        %v1665 = vunpack.c.l.b16 %v575
        %v1666 = vunpack.c.h.b16 %v575
        %v1667 = vunpack.c.l.b16 %v576
        %v1668 = vunpack.c.h.b16 %v576
        %v1669 = vunpack.c.l.b16 %v577
        %v1670 = vunpack.c.h.b16 %v577
        %v1671 = vunpack.c.l.b16 %v578
        %v1672 = vunpack.c.h.b16 %v578
        %v1673 = vunpack.c.l.b16 %v579
        %v1674 = vunpack.c.h.b16 %v579
        %v1675 = vunpack.c.l.b16 %v580
        %v1676 = vunpack.c.h.b16 %v580
        %v1677 = vunpack.c.l.b16 %v581
        %v1678 = vunpack.c.h.b16 %v581
        %v1679 = vunpack.c.l.b16 %v582
        %v1680 = vunpack.c.h.b16 %v582
        %v1681 = vunpack.c.l.b16 %v583
        %v1682 = vunpack.c.h.b16 %v583
        %v1683 = vunpack.c.l.b16 %v584
        %v1684 = vunpack.c.h.b16 %v584
        %v1685 = vunpack.c.l.b16 %v585
        %v1686 = vunpack.c.h.b16 %v585
        %v1687 = vunpack.c.l.b16 %v586
        %v1688 = vunpack.c.h.b16 %v586
        %v1689 = vunpack.c.l.b16 %v587
        %v1690 = vunpack.c.h.b16 %v587
        %v1691 = vunpack.c.l.b16 %v588
        %v1692 = vunpack.c.h.b16 %v588
        %v1693 = vunpack.c.l.b16 %v589
        %v1694 = vunpack.c.h.b16 %v589
        %v1695 = vunpack.c.l.b16 %v590
        %v1696 = vunpack.c.h.b16 %v590
        %v1697 = vunpack.c.l.b16 %v591
        %v1698 = vunpack.c.h.b16 %v591
        %v1699 = vunpack.c.l.b16 %v592
        %v1700 = vunpack.c.h.b16 %v592
        %v1701 = vunpack.c.l.b16 %v593
        %v1702 = vunpack.c.h.b16 %v593
        %v1703 = vunpack.c.l.b16 %v594
        %v1704 = vunpack.c.h.b16 %v594
        %v1705 = vunpack.c.l.b16 %v595
        %v1706 = vunpack.c.h.b16 %v595
        %v1707 = vunpack.c.l.b16 %v596
        %v1708 = vunpack.c.h.b16 %v596
        %v1709 = vunpack.c.l.b16 %v597
        %v1710 = vunpack.c.h.b16 %v597
        %v1711 = vunpack.c.l.b16 %v598
        %v1712 = vunpack.c.h.b16 %v598
        %v1713 = vunpack.c.l.b16 %v599
        %v1714 = vunpack.c.h.b16 %v599
        %v1715 = vunpack.c.l.b16 %v600
        %v1716 = vunpack.c.h.b16 %v600
        %v1717 = vunpack.c.l.b16 %v601
        %v1718 = vunpack.c.h.b16 %v601
        %v1719 = vunpack.c.l.b16 %v602
        %v1720 = vunpack.c.h.b16 %v602
        %v1721 = vunpack.c.l.b16 %v603
        %v1722 = vunpack.c.h.b16 %v603
        %v1723 = vunpack.c.l.b16 %v604
        %v1724 = vunpack.c.h.b16 %v604
        %v1725 = vunpack.c.l.b16 %v605
        %v1726 = vunpack.c.h.b16 %v605
        %v1727 = vunpack.c.l.b16 %v606
        %v1728 = vunpack.c.h.b16 %v606
        %v1729 = vunpack.c.l.b16 %v607
        %v1730 = vunpack.c.h.b16 %v607
        %v1731 = vunpack.c.l.b16 %v608
        %v1732 = vunpack.c.h.b16 %v608
        %v1733 = vunpack.c.l.b16 %v609
        %v1734 = vunpack.c.h.b16 %v609
        %v1735 = vunpack.c.l.b16 %v610
        %v1736 = vunpack.c.h.b16 %v610
        %v1737 = vunpack.c.l.b16 %v611
        %v1738 = vunpack.c.h.b16 %v611
        %v1739 = vunpack.c.l.b16 %v612
        %v1740 = vunpack.c.h.b16 %v612
        %v1741 = vunpack.c.l.b16 %v613
        %v1742 = vunpack.c.h.b16 %v613
        %v1743 = vunpack.c.l.b16 %v614
        %v1744 = vunpack.c.h.b16 %v614
        %v1745 = vunpack.c.l.b16 %v615
        %v1746 = vunpack.c.h.b16 %v615
        %v1747 = vunpack.c.l.b16 %v616
        %v1748 = vunpack.c.h.b16 %v616
        %v1749 = vunpack.c.l.b16 %v617
        %v1750 = vunpack.c.h.b16 %v617
        %v1751 = vunpack.c.l.b16 %v618
        %v1752 = vunpack.c.h.b16 %v618
        %v1753 = vunpack.c.l.b16 %v619
        %v1754 = vunpack.c.h.b16 %v619
        %v1755 = vunpack.c.l.b16 %v620
        %v1756 = vunpack.c.h.b16 %v620
        %v1757 = vunpack.c.l.b16 %v621
        %v1758 = vunpack.c.h.b16 %v621
        %v1759 = vunpack.c.l.b16 %v622
        %v1760 = vunpack.c.h.b16 %v622
        %v1761 = vunpack.c.l.b16 %v623
        %v1762 = vunpack.c.h.b16 %v623
        %v1763 = vunpack.c.l.b16 %v624
        %v1764 = vunpack.c.h.b16 %v624
        %v1765 = vunpack.c.l.b16 %v625
        %v1766 = vunpack.c.h.b16 %v625
        %v1767 = vunpack.c.l.b16 %v626
        %v1768 = vunpack.c.h.b16 %v626
        %v1769 = vunpack.c.l.b16 %v627
        %v1770 = vunpack.c.h.b16 %v627
        %v1771 = vunpack.c.l.b16 %v628
        %v1772 = vunpack.c.h.b16 %v628
        %v1773 = vunpack.c.l.b16 %v629
        %v1774 = vunpack.c.h.b16 %v629
        %v1775 = vunpack.c.l.b16 %v630
        %v1776 = vunpack.c.h.b16 %v630
        %v1777 = vunpack.c.l.b16 %v631
        %v1778 = vunpack.c.h.b16 %v631
        %v1779 = vunpack.c.l.b16 %v632
        %v1780 = vunpack.c.h.b16 %v632
        %v1781 = vunpack.c.l.b16 %v633
        %v1782 = vunpack.c.h.b16 %v633
        %v1783 = vunpack.c.l.b16 %v634
        %v1784 = vunpack.c.h.b16 %v634
        %v1785 = vunpack.c.l.b16 %v635
        %v1786 = vunpack.c.h.b16 %v635
        %v1787 = vunpack.c.l.b16 %v636
        %v1788 = vunpack.c.h.b16 %v636
        %v1789 = vunpack.c.l.b16 %v637
        %v1790 = vunpack.c.h.b16 %v637
        %v1791 = vunpack.c.l.b16 %v638
        %v1792 = vunpack.c.h.b16 %v638
        %v1793 = vunpack.c.l.b16 %v639
        %v1794 = vunpack.c.h.b16 %v639
        %v1795 = vunpack.c.l.b16 %v640
        %v1796 = vunpack.c.h.b16 %v640
        %v1797 = vunpack.c.l.b16 %v641
        %v1798 = vunpack.c.h.b16 %v641
        %v1799 = vunpack.c.l.b16 %v642
        %v1800 = vunpack.c.h.b16 %v642
        %v1801 = vunpack.c.l.b16 %v643
        %v1802 = vunpack.c.h.b16 %v643
        %v1803 = vunpack.c.l.b16 %v644
        %v1804 = vunpack.c.h.b16 %v644
        %v1805 = vunpack.c.l.b16 %v645
        %v1806 = vunpack.c.h.b16 %v645
        %v1807 = vunpack.c.l.b16 %v646
        %v1808 = vunpack.c.h.b16 %v646
        %v1809 = vunpack.c.l.b16 %v647
        %v1810 = vunpack.c.h.b16 %v647
        %v1811 = vunpack.c.l.b16 %v648
        %v1812 = vunpack.c.h.b16 %v648
        %v1813 = vunpack.c.l.b16 %v649
        %v1814 = vunpack.c.h.b16 %v649
        %v1815 = vunpack.c.l.b16 %v650
        %v1816 = vunpack.c.h.b16 %v650
        %v1817 = vunpack.c.l.b16 %v651
        %v1818 = vunpack.c.h.b16 %v651
        %v1819 = vunpack.c.l.b16 %v652
        %v1820 = vunpack.c.h.b16 %v652
        %v1821 = vunpack.c.l.b16 %v653
        %v1822 = vunpack.c.h.b16 %v653
        %v1823 = vunpack.c.l.b16 %v654
        %v1824 = vunpack.c.h.b16 %v654
        %v1825 = vunpack.c.l.b16 %v655
        %v1826 = vunpack.c.h.b16 %v655
        %v1827 = vunpack.c.l.b16 %v656
        %v1828 = vunpack.c.h.b16 %v656
        %v1829 = vunpack.c.l.b16 %v657
        %v1830 = vunpack.c.h.b16 %v657
        %v1831 = vunpack.c.l.b16 %v658
        %v1832 = vunpack.c.h.b16 %v658
        %v1833 = vunpack.c.l.b16 %v659
        %v1834 = vunpack.c.h.b16 %v659
        %v1835 = vunpack.c.l.b16 %v660
        %v1836 = vunpack.c.h.b16 %v660
        %v1837 = vunpack.c.l.b16 %v661
        %v1838 = vunpack.c.h.b16 %v661
        %v1839 = vunpack.c.l.b16 %v662
        %v1840 = vunpack.c.h.b16 %v662
        %v1841 = vunpack.c.l.b16 %v663
        %v1842 = vunpack.c.h.b16 %v663
        %v1843 = vunpack.c.l.b16 %v664
        %v1844 = vunpack.c.h.b16 %v664
        %v1845 = vunpack.c.l.b16 %v665
        %v1846 = vunpack.c.h.b16 %v665
        %v1847 = vunpack.c.l.b16 %v666
        %v1848 = vunpack.c.h.b16 %v666
        %v1849 = vunpack.c.l.b16 %v667
        %v1850 = vunpack.c.h.b16 %v667
        %v1851 = vunpack.c.l.b16 %v668
        %v1852 = vunpack.c.h.b16 %v668
        %v1853 = vunpack.c.l.b16 %v669
        %v1854 = vunpack.c.h.b16 %v669
        %v1855 = vunpack.c.l.b16 %v670
        %v1856 = vunpack.c.h.b16 %v670
        %v1857 = vunpack.c.l.b16 %v671
        %v1858 = vunpack.c.h.b16 %v671
        %v1859 = vunpack.c.l.b16 %v672
        %v1860 = vunpack.c.h.b16 %v672
        %v1861 = vunpack.c.l.b16 %v673
        %v1862 = vunpack.c.h.b16 %v673
        %v1863 = vunpack.c.l.b16 %v674
        %v1864 = vunpack.c.h.b16 %v674
        %v1865 = vunpack.c.l.b16 %v675
        %v1866 = vunpack.c.h.b16 %v675
        %v1867 = vunpack.c.l.b16 %v676
        %v1868 = vunpack.c.h.b16 %v676
        %v1869 = vunpack.c.l.b16 %v677
        %v1870 = vunpack.c.h.b16 %v677
        %v1871 = vunpack.c.l.b16 %v678
        %v1872 = vunpack.c.h.b16 %v678
        %v1873 = vunpack.c.l.b16 %v679
        %v1874 = vunpack.c.h.b16 %v679
        %v1875 = vunpack.c.l.b16 %v680
        %v1876 = vunpack.c.h.b16 %v680
        %v1877 = vunpack.c.l.b16 %v681
        %v1878 = vunpack.c.h.b16 %v681
        %v1879 = vunpack.c.l.b16 %v682
        %v1880 = vunpack.c.h.b16 %v682
        %v1881 = vunpack.c.l.b16 %v683
        %v1882 = vunpack.c.h.b16 %v683
        %v1883 = vunpack.c.l.b16 %v684
        %v1884 = vunpack.c.h.b16 %v684
        %v1885 = vunpack.c.l.b16 %v685
        %v1886 = vunpack.c.h.b16 %v685
        %v1887 = vunpack.c.l.b16 %v686
        %v1888 = vunpack.c.h.b16 %v686
        %v1889 = vunpack.c.l.b16 %v687
        %v1890 = vunpack.c.h.b16 %v687
        %v1891 = vunpack.c.l.b16 %v688
        %v1892 = vunpack.c.h.b16 %v688
        %v1893 = vunpack.c.l.b16 %v689
        %v1894 = vunpack.c.h.b16 %v689
        %v1895 = vunpack.c.l.b16 %v690
        %v1896 = vunpack.c.h.b16 %v690
        %v1897 = vunpack.c.l.b16 %v691
        %v1898 = vunpack.c.h.b16 %v691
        %v1899 = vunpack.c.l.b16 %v692
        %v1900 = vunpack.c.h.b16 %v692
        %v1901 = vunpack.c.l.b16 %v693
        %v1902 = vunpack.c.h.b16 %v693
        %v1903 = vunpack.c.l.b16 %v694
        %v1904 = vunpack.c.h.b16 %v694
        %v1905 = vunpack.c.l.b16 %v695
        %v1906 = vunpack.c.h.b16 %v695
        %v1907 = vunpack.c.l.b16 %v696
        %v1908 = vunpack.c.h.b16 %v696
        %v1909 = vunpack.c.l.b16 %v697
        %v1910 = vunpack.c.h.b16 %v697
        %v1911 = vunpack.c.l.b16 %v698
        %v1912 = vunpack.c.h.b16 %v698
        %v1913 = vunpack.c.l.b16 %v699
        %v1914 = vunpack.c.h.b16 %v699
        %v1915 = vunpack.c.l.b16 %v700
        %v1916 = vunpack.c.h.b16 %v700
        %v1917 = vunpack.c.l.b16 %v701
        %v1918 = vunpack.c.h.b16 %v701
        %v1919 = vunpack.c.l.b16 %v702
        %v1920 = vunpack.c.h.b16 %v702
        %v1921 = vunpack.c.l.b16 %v703
        %v1922 = vunpack.c.h.b16 %v703
        %v1923 = vunpack.c.l.b16 %v704
        %v1924 = vunpack.c.h.b16 %v704
        %v1925 = vunpack.c.l.b16 %v705
        %v1926 = vunpack.c.h.b16 %v705
        %v1927 = vunpack.c.l.b16 %v706
        %v1928 = vunpack.c.h.b16 %v706
        %v1929 = vunpack.c.l.b16 %v707
        %v1930 = vunpack.c.h.b16 %v707
        %v1931 = vunpack.c.l.b16 %v708
        %v1932 = vunpack.c.h.b16 %v708
        %v1933 = vunpack.c.l.b16 %v709
        %v1934 = vunpack.c.h.b16 %v709
        %v1935 = vunpack.c.l.b16 %v710
        %v1936 = vunpack.c.h.b16 %v710
        %v1937 = vunpack.c.l.b16 %v711
        %v1938 = vunpack.c.h.b16 %v711
        %v1939 = vunpack.c.l.b16 %v712
        %v1940 = vunpack.c.h.b16 %v712
        %v1941 = vunpack.c.l.b16 %v713
        %v1942 = vunpack.c.h.b16 %v713
        %v1943 = vunpack.c.l.b16 %v714
        %v1944 = vunpack.c.h.b16 %v714
        %v1945 = vunpack.c.l.b16 %v715
        %v1946 = vunpack.c.h.b16 %v715
        %v1947 = vunpack.c.l.b16 %v716
        %v1948 = vunpack.c.h.b16 %v716
        %v1949 = vunpack.c.l.b16 %v717
        %v1950 = vunpack.c.h.b16 %v717
        %v1951 = vunpack.c.l.b16 %v718
        %v1952 = vunpack.c.h.b16 %v718
        %v1953 = vunpack.c.l.b16 %v719
        %v1954 = vunpack.c.h.b16 %v719
        %v1955 = vunpack.c.l.b16 %v720
        %v1956 = vunpack.c.h.b16 %v720
        %v1957 = vunpack.c.l.b16 %v721
        %v1958 = vunpack.c.h.b16 %v721
        %v1959 = vunpack.c.l.b16 %v722
        %v1960 = vunpack.c.h.b16 %v722
        %v1961 = vunpack.c.l.b16 %v723
        %v1962 = vunpack.c.h.b16 %v723
        %v1963 = vunpack.c.l.b16 %v724
        %v1964 = vunpack.c.h.b16 %v724
        %v1965 = vunpack.c.l.b16 %v725
        %v1966 = vunpack.c.h.b16 %v725
        %v1967 = vunpack.c.l.b16 %v726
        %v1968 = vunpack.c.h.b16 %v726
        %v1969 = vunpack.c.l.b16 %v727
        %v1970 = vunpack.c.h.b16 %v727
        %v1971 = vunpack.c.l.b16 %v728
        %v1972 = vunpack.c.h.b16 %v728
        %v1973 = vunpack.c.l.b16 %v729
        %v1974 = vunpack.c.h.b16 %v729
        %v1975 = vunpack.c.l.b16 %v730
        %v1976 = vunpack.c.h.b16 %v730
        %v1977 = vunpack.c.l.b16 %v731
        %v1978 = vunpack.c.h.b16 %v731
        %v1979 = vunpack.c.l.b16 %v732
        %v1980 = vunpack.c.h.b16 %v732
        %v1981 = vunpack.c.l.b16 %v733
        %v1982 = vunpack.c.h.b16 %v733
        %v1983 = vunpack.c.l.b16 %v734
        %v1984 = vunpack.c.h.b16 %v734
        %v1985 = vunpack.c.l.b16 %v735
        %v1986 = vunpack.c.h.b16 %v735
        %v1987 = vunpack.c.l.b16 %v736
        %v1988 = vunpack.c.h.b16 %v736
        %v1989 = vunpack.c.l.b16 %v737
        %v1990 = vunpack.c.h.b16 %v737
        %v1991 = vunpack.c.l.b16 %v738
        %v1992 = vunpack.c.h.b16 %v738
        %v1993 = vunpack.c.l.b16 %v739
        %v1994 = vunpack.c.h.b16 %v739
        %v1995 = vunpack.c.l.b16 %v740
        %v1996 = vunpack.c.h.b16 %v740
        %v1997 = vunpack.c.l.b16 %v741
        %v1998 = vunpack.c.h.b16 %v741
        %v1999 = vunpack.c.l.b16 %v742
        %v2000 = vunpack.c.h.b16 %v742
        %v2001 = vunpack.c.l.b16 %v743
        %v2002 = vunpack.c.h.b16 %v743
        %v2003 = vunpack.c.l.b16 %v744
        %v2004 = vunpack.c.h.b16 %v744
        %v2005 = vunpack.c.l.b16 %v745
        %v2006 = vunpack.c.h.b16 %v745
        %v2007 = vunpack.c.l.b16 %v746
        %v2008 = vunpack.c.h.b16 %v746
        %v2009 = vunpack.c.l.b16 %v747
        %v2010 = vunpack.c.h.b16 %v747
        %v2011 = vunpack.c.l.b16 %v748
        %v2012 = vunpack.c.h.b16 %v748
        %v2013 = vunpack.c.l.b16 %v749
        %v2014 = vunpack.c.h.b16 %v749
        %v2015 = vunpack.c.l.b16 %v750
        %v2016 = vunpack.c.h.b16 %v750
        %v2017 = vunpack.c.l.b16 %v751
        %v2018 = vunpack.c.h.b16 %v751
        %v2019 = vunpack.c.l.b16 %v752
        %v2020 = vunpack.c.h.b16 %v752
        %v2021 = vunpack.c.l.b16 %v753
        %v2022 = vunpack.c.h.b16 %v753
        %v2023 = vunpack.c.l.b16 %v754
        %v2024 = vunpack.c.h.b16 %v754
        %v2025 = vpack.c.b16 %v1581, %v1577
        %v2026 = vpack.c.b16 %v1582, %v1578
        %v2027 = vpack.c.b16 %v1583, %v1579
        %v2028 = vpack.c.b16 %v1584, %v1580
        %v2029 = vpack.c.b16 %v1589, %v1585
        %v2030 = vpack.c.b16 %v1590, %v1586
        %v2031 = vpack.c.b16 %v1591, %v1587
        %v2032 = vpack.c.b16 %v1592, %v1588
        %v2033 = vpack.c.b16 %v1597, %v1593
        %v2034 = vpack.c.b16 %v1598, %v1594
        %v2035 = vpack.c.b16 %v1599, %v1595
        %v2036 = vpack.c.b16 %v1600, %v1596
        %v2037 = vpack.c.b16 %v1605, %v1601
        %v2038 = vpack.c.b16 %v1606, %v1602
        %v2039 = vpack.c.b16 %v1607, %v1603
        %v2040 = vpack.c.b16 %v1608, %v1604
        %v2041 = vpack.c.b16 %v1613, %v1609
        %v2042 = vpack.c.b16 %v1614, %v1610
        %v2043 = vpack.c.b16 %v1615, %v1611
        %v2044 = vpack.c.b16 %v1616, %v1612
        %v2045 = vpack.c.b16 %v1621, %v1617
        %v2046 = vpack.c.b16 %v1622, %v1618
        %v2047 = vpack.c.b16 %v1623, %v1619
        %v2048 = vpack.c.b16 %v1624, %v1620
        %v2049 = vpack.c.b16 %v1629, %v1625
        %v2050 = vpack.c.b16 %v1630, %v1626
        %v2051 = vpack.c.b16 %v1631, %v1627
        %v2052 = vpack.c.b16 %v1632, %v1628
        %v2053 = vpack.c.b16 %v1637, %v1633
        %v2054 = vpack.c.b16 %v1638, %v1634
        %v2055 = vpack.c.b16 %v1639, %v1635
        %v2056 = vpack.c.b16 %v1640, %v1636
        %v2057 = vpack.c.b16 %v1645, %v1641
        %v2058 = vpack.c.b16 %v1646, %v1642
        %v2059 = vpack.c.b16 %v1647, %v1643
        %v2060 = vpack.c.b16 %v1648, %v1644
        %v2061 = vpack.c.b16 %v1653, %v1649
        %v2062 = vpack.c.b16 %v1654, %v1650
        %v2063 = vpack.c.b16 %v1655, %v1651
        %v2064 = vpack.c.b16 %v1656, %v1652
        %v2065 = vpack.c.b16 %v1661, %v1657
        %v2066 = vpack.c.b16 %v1662, %v1658
        %v2067 = vpack.c.b16 %v1663, %v1659
        %v2068 = vpack.c.b16 %v1664, %v1660
        %v2069 = vpack.c.b16 %v1669, %v1665
        %v2070 = vpack.c.b16 %v1670, %v1666
        %v2071 = vpack.c.b16 %v1671, %v1667
        %v2072 = vpack.c.b16 %v1672, %v1668
        %v2073 = vpack.c.b16 %v1677, %v1673
        %v2074 = vpack.c.b16 %v1678, %v1674
        %v2075 = vpack.c.b16 %v1679, %v1675
        %v2076 = vpack.c.b16 %v1680, %v1676
        %v2077 = vpack.c.b16 %v1685, %v1681
        %v2078 = vpack.c.b16 %v1686, %v1682
        %v2079 = vpack.c.b16 %v1687, %v1683
        %v2080 = vpack.c.b16 %v1688, %v1684
        %v2081 = vpack.c.b16 %v1693, %v1689
        %v2082 = vpack.c.b16 %v1694, %v1690
        %v2083 = vpack.c.b16 %v1695, %v1691
        %v2084 = vpack.c.b16 %v1696, %v1692
        %v2085 = vpack.c.b16 %v1701, %v1697
        %v2086 = vpack.c.b16 %v1702, %v1698
        %v2087 = vpack.c.b16 %v1703, %v1699
        %v2088 = vpack.c.b16 %v1704, %v1700
        %v2089 = vpack.c.b16 %v1709, %v1705
        %v2090 = vpack.c.b16 %v1710, %v1706
        %v2091 = vpack.c.b16 %v1711, %v1707
        %v2092 = vpack.c.b16 %v1712, %v1708
        %v2093 = vpack.c.b16 %v1717, %v1713
        %v2094 = vpack.c.b16 %v1718, %v1714
        %v2095 = vpack.c.b16 %v1719, %v1715
        %v2096 = vpack.c.b16 %v1720, %v1716
        %v2097 = vpack.c.b16 %v1725, %v1721
        %v2098 = vpack.c.b16 %v1726, %v1722
        %v2099 = vpack.c.b16 %v1727, %v1723
        %v2100 = vpack.c.b16 %v1728, %v1724
        %v2101 = vpack.c.b16 %v1733, %v1729
        %v2102 = vpack.c.b16 %v1734, %v1730
        %v2103 = vpack.c.b16 %v1735, %v1731
        %v2104 = vpack.c.b16 %v1736, %v1732
        %v2105 = vpack.c.b16 %v1741, %v1737
        %v2106 = vpack.c.b16 %v1742, %v1738
        %v2107 = vpack.c.b16 %v1743, %v1739
        %v2108 = vpack.c.b16 %v1744, %v1740
        %v2109 = vpack.c.b16 %v1749, %v1745
        %v2110 = vpack.c.b16 %v1750, %v1746
        %v2111 = vpack.c.b16 %v1751, %v1747
        %v2112 = vpack.c.b16 %v1752, %v1748
        %v2113 = vpack.c.b16 %v1757, %v1753
        %v2114 = vpack.c.b16 %v1758, %v1754
        %v2115 = vpack.c.b16 %v1759, %v1755
        %v2116 = vpack.c.b16 %v1760, %v1756
        %v2117 = vpack.c.b16 %v1765, %v1761
        %v2118 = vpack.c.b16 %v1766, %v1762
        %v2119 = vpack.c.b16 %v1767, %v1763
        %v2120 = vpack.c.b16 %v1768, %v1764
        %v2121 = vpack.c.b16 %v1773, %v1769
        %v2122 = vpack.c.b16 %v1774, %v1770
        %v2123 = vpack.c.b16 %v1775, %v1771
        %v2124 = vpack.c.b16 %v1776, %v1772
        %v2125 = vpack.c.b16 %v1781, %v1777
        %v2126 = vpack.c.b16 %v1782, %v1778
        %v2127 = vpack.c.b16 %v1783, %v1779
        %v2128 = vpack.c.b16 %v1784, %v1780
        %v2129 = vpack.c.b16 %v1789, %v1785
        %v2130 = vpack.c.b16 %v1790, %v1786
        %v2131 = vpack.c.b16 %v1791, %v1787
        %v2132 = vpack.c.b16 %v1792, %v1788
        %v2133 = vpack.c.b16 %v1797, %v1793
        %v2134 = vpack.c.b16 %v1798, %v1794
        %v2135 = vpack.c.b16 %v1799, %v1795
        %v2136 = vpack.c.b16 %v1800, %v1796
        %v2137 = vpack.c.b16 %v1805, %v1801
        %v2138 = vpack.c.b16 %v1806, %v1802
        %v2139 = vpack.c.b16 %v1807, %v1803
        %v2140 = vpack.c.b16 %v1808, %v1804
        %v2141 = vpack.c.b16 %v1813, %v1809
        %v2142 = vpack.c.b16 %v1814, %v1810
        %v2143 = vpack.c.b16 %v1815, %v1811
        %v2144 = vpack.c.b16 %v1816, %v1812
        %v2145 = vpack.c.b16 %v1821, %v1817
        %v2146 = vpack.c.b16 %v1822, %v1818
        %v2147 = vpack.c.b16 %v1823, %v1819
        %v2148 = vpack.c.b16 %v1824, %v1820
        %v2149 = vpack.c.b16 %v1829, %v1825
        %v2150 = vpack.c.b16 %v1830, %v1826
        %v2151 = vpack.c.b16 %v1831, %v1827
        %v2152 = vpack.c.b16 %v1832, %v1828
        %v2153 = vpack.c.b16 %v1837, %v1833
        %v2154 = vpack.c.b16 %v1838, %v1834
        %v2155 = vpack.c.b16 %v1839, %v1835
        %v2156 = vpack.c.b16 %v1840, %v1836
        %v2157 = vpack.c.b16 %v1845, %v1841
        %v2158 = vpack.c.b16 %v1846, %v1842
        %v2159 = vpack.c.b16 %v1847, %v1843
        %v2160 = vpack.c.b16 %v1848, %v1844
        %v2161 = vpack.c.b16 %v1853, %v1849
        %v2162 = vpack.c.b16 %v1854, %v1850
        %v2163 = vpack.c.b16 %v1855, %v1851
        %v2164 = vpack.c.b16 %v1856, %v1852
        %v2165 = vpack.c.b16 %v1861, %v1857
        %v2166 = vpack.c.b16 %v1862, %v1858
        %v2167 = vpack.c.b16 %v1863, %v1859
        %v2168 = vpack.c.b16 %v1864, %v1860
        %v2169 = vpack.c.b16 %v1869, %v1865
        %v2170 = vpack.c.b16 %v1870, %v1866
        %v2171 = vpack.c.b16 %v1871, %v1867
        %v2172 = vpack.c.b16 %v1872, %v1868
        %v2173 = vpack.c.b16 %v1877, %v1873
        %v2174 = vpack.c.b16 %v1878, %v1874
        %v2175 = vpack.c.b16 %v1879, %v1875
        %v2176 = vpack.c.b16 %v1880, %v1876
        %v2177 = vpack.c.b16 %v1885, %v1881
        %v2178 = vpack.c.b16 %v1886, %v1882
        %v2179 = vpack.c.b16 %v1887, %v1883
        %v2180 = vpack.c.b16 %v1888, %v1884
        %v2181 = vpack.c.b16 %v1893, %v1889
        %v2182 = vpack.c.b16 %v1894, %v1890
        %v2183 = vpack.c.b16 %v1895, %v1891
        %v2184 = vpack.c.b16 %v1896, %v1892
        %v2185 = vpack.c.b16 %v1901, %v1897
        %v2186 = vpack.c.b16 %v1902, %v1898
        %v2187 = vpack.c.b16 %v1903, %v1899
        %v2188 = vpack.c.b16 %v1904, %v1900
        %v2189 = vpack.c.b16 %v1909, %v1905
        %v2190 = vpack.c.b16 %v1910, %v1906
        %v2191 = vpack.c.b16 %v1911, %v1907
        %v2192 = vpack.c.b16 %v1912, %v1908
        %v2193 = vpack.c.b16 %v1917, %v1913
        %v2194 = vpack.c.b16 %v1918, %v1914
        %v2195 = vpack.c.b16 %v1919, %v1915
        %v2196 = vpack.c.b16 %v1920, %v1916
        %v2197 = vpack.c.b16 %v1925, %v1921
        %v2198 = vpack.c.b16 %v1926, %v1922
        %v2199 = vpack.c.b16 %v1927, %v1923
        %v2200 = vpack.c.b16 %v1928, %v1924
        %v2201 = vpack.c.b16 %v1933, %v1929
        %v2202 = vpack.c.b16 %v1934, %v1930
        %v2203 = vpack.c.b16 %v1935, %v1931
        %v2204 = vpack.c.b16 %v1936, %v1932
        %v2205 = vpack.c.b16 %v1941, %v1937
        %v2206 = vpack.c.b16 %v1942, %v1938
        %v2207 = vpack.c.b16 %v1943, %v1939
        %v2208 = vpack.c.b16 %v1944, %v1940
        %v2209 = vpack.c.b16 %v1949, %v1945
        %v2210 = vpack.c.b16 %v1950, %v1946
        %v2211 = vpack.c.b16 %v1951, %v1947
        %v2212 = vpack.c.b16 %v1952, %v1948
        %v2213 = vpack.c.b16 %v1957, %v1953
        %v2214 = vpack.c.b16 %v1958, %v1954
        %v2215 = vpack.c.b16 %v1959, %v1955
        %v2216 = vpack.c.b16 %v1960, %v1956
        %v2217 = vpack.c.b16 %v1965, %v1961
        %v2218 = vpack.c.b16 %v1966, %v1962
        %v2219 = vpack.c.b16 %v1967, %v1963
        %v2220 = vpack.c.b16 %v1968, %v1964
        %v2221 = vpack.c.b16 %v1973, %v1969
        %v2222 = vpack.c.b16 %v1974, %v1970
        %v2223 = vpack.c.b16 %v1975, %v1971
        %v2224 = vpack.c.b16 %v1976, %v1972
        %v2225 = vpack.c.b16 %v1981, %v1977
        %v2226 = vpack.c.b16 %v1982, %v1978
        %v2227 = vpack.c.b16 %v1983, %v1979
        %v2228 = vpack.c.b16 %v1984, %v1980
        %v2229 = vpack.c.b16 %v1989, %v1985
        %v2230 = vpack.c.b16 %v1990, %v1986
        %v2231 = vpack.c.b16 %v1991, %v1987
        %v2232 = vpack.c.b16 %v1992, %v1988
        %v2233 = vpack.c.b16 %v1997, %v1993
        %v2234 = vpack.c.b16 %v1998, %v1994
        %v2235 = vpack.c.b16 %v1999, %v1995
        %v2236 = vpack.c.b16 %v2000, %v1996
        %v2237 = vpack.c.b16 %v2005, %v2001
        %v2238 = vpack.c.b16 %v2006, %v2002
        %v2239 = vpack.c.b16 %v2007, %v2003
        %v2240 = vpack.c.b16 %v2008, %v2004
        %v2241 = vpack.c.b16 %v2013, %v2009
        %v2242 = vpack.c.b16 %v2014, %v2010
        %v2243 = vpack.c.b16 %v2015, %v2011
        %v2244 = vpack.c.b16 %v2016, %v2012
        %v2245 = vpack.c.b16 %v2021, %v2017
        %v2246 = vpack.c.b16 %v2022, %v2018
        %v2247 = vpack.c.b16 %v2023, %v2019
        %v2248 = vpack.c.b16 %v2024, %v2020
        %2473 = vmatprep.subr.bf16.mxu0 %v2026
        %2474 = vmatpush1.bf16.msra.mxu0 %v2025
        %2475 = vmatprep.subr.bf16.mxu0 %v2030
        %2476 = vmatpush1.bf16.msra.mxu0 %v2029
        %2477 = vmatprep.subr.bf16.mxu0 %v2034
        %2478 = vmatpush1.bf16.msra.mxu0 %v2033
        %2479 = vmatprep.subr.bf16.mxu0 %v2038
        %2480 = vmatpush1.bf16.msra.mxu0 %v2037
        %2481 = vmatprep.subr.bf16.mxu0 %v2042
        %2482 = vmatpush1.bf16.msra.mxu0 %v2041
        %2483 = vmatprep.subr.bf16.mxu0 %v2046
        %2484 = vmatpush1.bf16.msra.mxu0 %v2045
        %2485 = vmatprep.subr.bf16.mxu0 %v2050
        %2486 = vmatpush1.bf16.msra.mxu0 %v2049
        %2487 = vmatprep.subr.bf16.mxu0 %v2054
        %2488 = vmatpush1.bf16.msra.mxu0 %v2053
        %2489 = vmatprep.subr.bf16.mxu0 %v2058
        %2490 = vmatpush1.bf16.msra.mxu0 %v2057
        %2491 = vmatprep.subr.bf16.mxu0 %v2062
        %2492 = vmatpush1.bf16.msra.mxu0 %v2061
        %2493 = vmatprep.subr.bf16.mxu0 %v2066
        %2494 = vmatpush1.bf16.msra.mxu0 %v2065
        %2495 = vmatprep.subr.bf16.mxu0 %v2070
        %2496 = vmatpush1.bf16.msra.mxu0 %v2069
        %2497 = vmatprep.subr.bf16.mxu0 %v2074
        %2498 = vmatpush1.bf16.msra.mxu0 %v2073
        %2499 = vmatprep.subr.bf16.mxu0 %v2078
        %2500 = vmatpush1.bf16.msra.mxu0 %v2077
        %2501 = vmatprep.subr.bf16.mxu0 %v2082
        %2502 = vmatpush1.bf16.msra.mxu0 %v2081
        %2503 = vmatprep.subr.bf16.mxu0 %v2086
        %2504 = vmatpush1.bf16.msra.mxu0 %v2085
        %2505 = vmatprep.mubr.bf16.mxu0 %v1130
        %2506 = vmatmul.mubr.bf16.gmra.mrb[0].mxu0 %v1129
        %v2507 = vpop.f32.mrb[0].mxu0
        %v2508 = vadd.f32 %v760, %v2507
        %v2509 = vpop.f32.mrb[0].mxu0
        %v2510 = vadd.f32 %v764, %v2509
        %v2511 = vpop.f32.mrb[0].mxu0
        %v2512 = vadd.f32 %v760, %v2511
        %v2513 = vpop.f32.mrb[0].mxu0
        %v2514 = vadd.f32 %v764, %v2513
        %2515 = vmatprep.mubr.bf16.mxu0 %v1137
        %2516 = vmatmul.mubr.bf16.gmra.mrb[0].mxu0 %v1136
        %v2517 = vpop.f32.mrb[0].mxu0
        %v2518 = vadd.f32 %v760, %v2517
        %v2519 = vpop.f32.mrb[0].mxu0
        %v2520 = vadd.f32 %v764, %v2519
        %v2521 = vpop.f32.mrb[0].mxu0
        %v2522 = vadd.f32 %v760, %v2521
        %v2523 = vpop.f32.mrb[0].mxu0
        %v2524 = vadd.f32 %v764, %v2523
        %2525 = vmatprep.mubr.bf16.mxu0 %v1144
        %2526 = vmatmul.mubr.bf16.gmra.mrb[0].mxu0 %v1143
        %v2527 = vpop.f32.mrb[0].mxu0
        %v2528 = vadd.f32 %v760, %v2527
        %v2529 = vpop.f32.mrb[0].mxu0
        %v2530 = vadd.f32 %v764, %v2529
        %v2531 = vpop.f32.mrb[0].mxu0
        %v2532 = vadd.f32 %v760, %v2531
        %v2533 = vpop.f32.mrb[0].mxu0
        %v2534 = vadd.f32 %v764, %v2533
        %2535 = vmatprep.mubr.bf16.mxu0 %v1151
        %2536 = vmatmul.mubr.bf16.gmra.mrb[0].mxu0 %v1150
        %v2537 = vpop.f32.mrb[0].mxu0
        %v2538 = vadd.f32 %v760, %v2537
        %v2539 = vpop.f32.mrb[0].mxu0
        %v2540 = vadd.f32 %v764, %v2539
        %v2541 = vpop.f32.mrb[0].mxu0
        %v2542 = vadd.f32 %v760, %v2541
        %v2543 = vpop.f32.mrb[0].mxu0
        %v2544 = vadd.f32 %v764, %v2543
        %2545 = vmatprep.mubr.bf16.mxu0 %v1158
        %2546 = vmatmul.mubr.bf16.gmra.mrb[0].mxu0 %v1157
        %v2547 = vpop.f32.mrb[0].mxu0
        %v2548 = vadd.f32 %v760, %v2547
        %v2549 = vpop.f32.mrb[0].mxu0
        %v2550 = vadd.f32 %v764, %v2549
        %v2551 = vpop.f32.mrb[0].mxu0
        %v2552 = vadd.f32 %v760, %v2551
        %v2553 = vpop.f32.mrb[0].mxu0
        %v2554 = vadd.f32 %v764, %v2553
        %2555 = vmatprep.mubr.bf16.mxu0 %v1165
        %2556 = vmatmul.mubr.bf16.gmra.mrb[0].mxu0 %v1164
        %v2557 = vpop.f32.mrb[0].mxu0
        %v2558 = vadd.f32 %v760, %v2557
        %v2559 = vpop.f32.mrb[0].mxu0
        %v2560 = vadd.f32 %v764, %v2559
        %v2561 = vpop.f32.mrb[0].mxu0
        %v2562 = vadd.f32 %v760, %v2561
        %v2563 = vpop.f32.mrb[0].mxu0
        %v2564 = vadd.f32 %v764, %v2563
        %2565 = vmatprep.mubr.bf16.mxu0 %v1172
        %2566 = vmatmul.mubr.bf16.gmra.mrb[0].mxu0 %v1171
        %v2567 = vpop.f32.mrb[0].mxu0
        %v2568 = vadd.f32 %v760, %v2567
        %v2569 = vpop.f32.mrb[0].mxu0
        %v2570 = vadd.f32 %v764, %v2569
        %v2571 = vpop.f32.mrb[0].mxu0
        %v2572 = vadd.f32 %v760, %v2571
        %v2573 = vpop.f32.mrb[0].mxu0
        %v2574 = vadd.f32 %v764, %v2573
        %2575 = vmatprep.mubr.bf16.mxu0 %v1179
        %2576 = vmatmul.mubr.bf16.gmra.mrb[0].mxu0 %v1178
        %v2577 = vpop.f32.mrb[0].mxu0
        %v2578 = vadd.f32 %v760, %v2577
        %v2579 = vpop.f32.mrb[0].mxu0
        %v2580 = vadd.f32 %v764, %v2579
        %v2581 = vpop.f32.mrb[0].mxu0
        %v2582 = vadd.f32 %v760, %v2581
        %v2583 = vpop.f32.mrb[0].mxu0
        %v2584 = vadd.f32 %v764, %v2583
        %2585 = vmatprep.mubr.bf16.mxu0 %v1186
        %2586 = vmatmul.mubr.bf16.gmra.mrb[0].mxu0 %v1185
        %v2587 = vpop.f32.mrb[0].mxu0
        %v2588 = vadd.f32 %v760, %v2587
        %v2589 = vpop.f32.mrb[0].mxu0
        %v2590 = vadd.f32 %v764, %v2589
        %v2591 = vpop.f32.mrb[0].mxu0
        %v2592 = vadd.f32 %v760, %v2591
        %v2593 = vpop.f32.mrb[0].mxu0
        %v2594 = vadd.f32 %v764, %v2593
        %2595 = vmatprep.mubr.bf16.mxu0 %v1193
        %2596 = vmatmul.mubr.bf16.gmra.mrb[0].mxu0 %v1192
        %v2597 = vpop.f32.mrb[0].mxu0
        %v2598 = vadd.f32 %v760, %v2597
        %v2599 = vpop.f32.mrb[0].mxu0
        %v2600 = vadd.f32 %v764, %v2599
        %v2601 = vpop.f32.mrb[0].mxu0
        %v2602 = vadd.f32 %v760, %v2601
        %v2603 = vpop.f32.mrb[0].mxu0
        %v2604 = vadd.f32 %v764, %v2603
        %2605 = vmatprep.mubr.bf16.mxu0 %v1200
        %2606 = vmatmul.mubr.bf16.gmra.mrb[0].mxu0 %v1199
        %v2607 = vpop.f32.mrb[0].mxu0
        %v2608 = vadd.f32 %v760, %v2607
        %v2609 = vpop.f32.mrb[0].mxu0
        %v2610 = vadd.f32 %v764, %v2609
        %v2611 = vpop.f32.mrb[0].mxu0
        %v2612 = vadd.f32 %v760, %v2611
        %v2613 = vpop.f32.mrb[0].mxu0
        %v2614 = vadd.f32 %v764, %v2613
        %2615 = vmatprep.mubr.bf16.mxu0 %v1207
        %2616 = vmatmul.mubr.bf16.gmra.mrb[0].mxu0 %v1206
        %v2617 = vpop.f32.mrb[0].mxu0
        %v2618 = vadd.f32 %v760, %v2617
        %v2619 = vpop.f32.mrb[0].mxu0
        %v2620 = vadd.f32 %v764, %v2619
        %v2621 = vpop.f32.mrb[0].mxu0
        %v2622 = vadd.f32 %v760, %v2621
        %v2623 = vpop.f32.mrb[0].mxu0
        %v2624 = vadd.f32 %v764, %v2623
        %2625 = vmatprep.mubr.bf16.mxu0 %v1214
        %2626 = vmatmul.mubr.bf16.gmra.mrb[0].mxu0 %v1213
        %v2627 = vpop.f32.mrb[0].mxu0
        %v2628 = vadd.f32 %v760, %v2627
        %v2629 = vpop.f32.mrb[0].mxu0
        %v2630 = vadd.f32 %v764, %v2629
        %v2631 = vpop.f32.mrb[0].mxu0
        %v2632 = vadd.f32 %v760, %v2631
        %v2633 = vpop.f32.mrb[0].mxu0
        %v2634 = vadd.f32 %v764, %v2633
        %2635 = vmatprep.mubr.bf16.mxu0 %v1221
        %2636 = vmatmul.mubr.bf16.gmra.mrb[0].mxu0 %v1220
        %v2637 = vpop.f32.mrb[0].mxu0
        %v2638 = vadd.f32 %v760, %v2637
        %v2639 = vpop.f32.mrb[0].mxu0
        %v2640 = vadd.f32 %v764, %v2639
        %v2641 = vpop.f32.mrb[0].mxu0
        %v2642 = vadd.f32 %v760, %v2641
        %v2643 = vpop.f32.mrb[0].mxu0
        %v2644 = vadd.f32 %v764, %v2643
        %2645 = vmatprep.mubr.bf16.mxu0 %v1228
        %2646 = vmatmul.mubr.bf16.gmra.mrb[0].mxu0 %v1227
        %v2647 = vpop.f32.mrb[0].mxu0
        %v2648 = vadd.f32 %v760, %v2647
        %v2649 = vpop.f32.mrb[0].mxu0
        %v2650 = vadd.f32 %v764, %v2649
        %v2651 = vpop.f32.mrb[0].mxu0
        %v2652 = vadd.f32 %v760, %v2651
        %v2653 = vpop.f32.mrb[0].mxu0
        %v2654 = vadd.f32 %v764, %v2653
        %2655 = vmatprep.mubr.bf16.mxu0 %v1235
        %2656 = vmatmul.mubr.bf16.gmra.mrb[0].mxu0 %v1234
        %v2657 = vpop.f32.mrb[0].mxu0
        %v2658 = vadd.f32 %v760, %v2657
        %v2659 = vpop.f32.mrb[0].mxu0
        %v2660 = vadd.f32 %v764, %v2659
        %v2661 = vpop.f32.mrb[0].mxu0
        %v2662 = vadd.f32 %v760, %v2661
        %v2663 = vpop.f32.mrb[0].mxu0
        %v2664 = vadd.f32 %v764, %v2663
        %2665 = vdwg.mxu0
        %2666 = vmatprep.subr.bf16.mxu0 %v2090
        %2667 = vmatpush1.bf16.msra.mxu0 %v2089
        %2668 = vmatprep.subr.bf16.mxu0 %v2094
        %2669 = vmatpush1.bf16.msra.mxu0 %v2093
        %2670 = vmatprep.subr.bf16.mxu0 %v2098
        %2671 = vmatpush1.bf16.msra.mxu0 %v2097
        %2672 = vmatprep.subr.bf16.mxu0 %v2102
        %2673 = vmatpush1.bf16.msra.mxu0 %v2101
        %2674 = vmatprep.subr.bf16.mxu0 %v2106
        %2675 = vmatpush1.bf16.msra.mxu0 %v2105
        %2676 = vmatprep.subr.bf16.mxu0 %v2110
        %2677 = vmatpush1.bf16.msra.mxu0 %v2109
        %2678 = vmatprep.subr.bf16.mxu0 %v2114
        %2679 = vmatpush1.bf16.msra.mxu0 %v2113
        %2680 = vmatprep.subr.bf16.mxu0 %v2118
        %2681 = vmatpush1.bf16.msra.mxu0 %v2117
        %2682 = vmatprep.subr.bf16.mxu0 %v2122
        %2683 = vmatpush1.bf16.msra.mxu0 %v2121
        %2684 = vmatprep.subr.bf16.mxu0 %v2126
        %2685 = vmatpush1.bf16.msra.mxu0 %v2125
        %2686 = vmatprep.subr.bf16.mxu0 %v2130
        %2687 = vmatpush1.bf16.msra.mxu0 %v2129
        %2688 = vmatprep.subr.bf16.mxu0 %v2134
        %2689 = vmatpush1.bf16.msra.mxu0 %v2133
        %2690 = vmatprep.subr.bf16.mxu0 %v2138
        %2691 = vmatpush1.bf16.msra.mxu0 %v2137
        %2692 = vmatprep.subr.bf16.mxu0 %v2142
        %2693 = vmatpush1.bf16.msra.mxu0 %v2141
        %2694 = vmatprep.subr.bf16.mxu0 %v2146
        %2695 = vmatpush1.bf16.msra.mxu0 %v2145
        %2696 = vmatprep.subr.bf16.mxu0 %v2150
        %2697 = vmatpush1.bf16.msra.mxu0 %v2149
        %2698 = vmatprep.mubr.bf16.mxu0 %v1132
        %2699 = vmatmul.mubr.bf16.gmra.mrb[0].mxu0 %v1131
        %v2700 = vpop.f32.mrb[0].mxu0
        %v2701 = vadd.f32 %v2508, %v2700
        %v2702 = vpop.f32.mrb[0].mxu0
        %v2703 = vadd.f32 %v2510, %v2702
        %v2704 = vpop.f32.mrb[0].mxu0
        %v2705 = vadd.f32 %v2512, %v2704
        %v2706 = vpop.f32.mrb[0].mxu0
        %v2707 = vadd.f32 %v2514, %v2706
        %2708 = vmatprep.mubr.bf16.mxu0 %v1139
        %2709 = vmatmul.mubr.bf16.gmra.mrb[0].mxu0 %v1138
        %v2710 = vpop.f32.mrb[0].mxu0
        %v2711 = vadd.f32 %v2518, %v2710
        %v2712 = vpop.f32.mrb[0].mxu0
        %v2713 = vadd.f32 %v2520, %v2712
        %v2714 = vpop.f32.mrb[0].mxu0
        %v2715 = vadd.f32 %v2522, %v2714
        %v2716 = vpop.f32.mrb[0].mxu0
        %v2717 = vadd.f32 %v2524, %v2716
        %2718 = vmatprep.mubr.bf16.mxu0 %v1146
        %2719 = vmatmul.mubr.bf16.gmra.mrb[0].mxu0 %v1145
        %v2720 = vpop.f32.mrb[0].mxu0
        %v2721 = vadd.f32 %v2528, %v2720
        %v2722 = vpop.f32.mrb[0].mxu0
        %v2723 = vadd.f32 %v2530, %v2722
        %v2724 = vpop.f32.mrb[0].mxu0
        %v2725 = vadd.f32 %v2532, %v2724
        %v2726 = vpop.f32.mrb[0].mxu0
        %v2727 = vadd.f32 %v2534, %v2726
        %2728 = vmatprep.mubr.bf16.mxu0 %v1153
        %2729 = vmatmul.mubr.bf16.gmra.mrb[0].mxu0 %v1152
        %v2730 = vpop.f32.mrb[0].mxu0
        %v2731 = vadd.f32 %v2538, %v2730
        %v2732 = vpop.f32.mrb[0].mxu0
        %v2733 = vadd.f32 %v2540, %v2732
        %v2734 = vpop.f32.mrb[0].mxu0
        %v2735 = vadd.f32 %v2542, %v2734
        %v2736 = vpop.f32.mrb[0].mxu0
        %v2737 = vadd.f32 %v2544, %v2736
        %2738 = vmatprep.mubr.bf16.mxu0 %v1160
        %2739 = vmatmul.mubr.bf16.gmra.mrb[0].mxu0 %v1159
        %v2740 = vpop.f32.mrb[0].mxu0
        %v2741 = vadd.f32 %v2548, %v2740
        %v2742 = vpop.f32.mrb[0].mxu0
        %v2743 = vadd.f32 %v2550, %v2742
        %v2744 = vpop.f32.mrb[0].mxu0
        %v2745 = vadd.f32 %v2552, %v2744
        %v2746 = vpop.f32.mrb[0].mxu0
        %v2747 = vadd.f32 %v2554, %v2746
        %2748 = vmatprep.mubr.bf16.mxu0 %v1167
        %2749 = vmatmul.mubr.bf16.gmra.mrb[0].mxu0 %v1166
        %v2750 = vpop.f32.mrb[0].mxu0
        %v2751 = vadd.f32 %v2558, %v2750
        %v2752 = vpop.f32.mrb[0].mxu0
        %v2753 = vadd.f32 %v2560, %v2752
        %v2754 = vpop.f32.mrb[0].mxu0
        %v2755 = vadd.f32 %v2562, %v2754
        %v2756 = vpop.f32.mrb[0].mxu0
        %v2757 = vadd.f32 %v2564, %v2756
        %2758 = vmatprep.mubr.bf16.mxu0 %v1174
        %2759 = vmatmul.mubr.bf16.gmra.mrb[0].mxu0 %v1173
        %v2760 = vpop.f32.mrb[0].mxu0
        %v2761 = vadd.f32 %v2568, %v2760
        %v2762 = vpop.f32.mrb[0].mxu0
        %v2763 = vadd.f32 %v2570, %v2762
        %v2764 = vpop.f32.mrb[0].mxu0
        %v2765 = vadd.f32 %v2572, %v2764
        %v2766 = vpop.f32.mrb[0].mxu0
        %v2767 = vadd.f32 %v2574, %v2766
        %2768 = vmatprep.mubr.bf16.mxu0 %v1181
        %2769 = vmatmul.mubr.bf16.gmra.mrb[0].mxu0 %v1180
        %v2770 = vpop.f32.mrb[0].mxu0
        %v2771 = vadd.f32 %v2578, %v2770
        %v2772 = vpop.f32.mrb[0].mxu0
        %v2773 = vadd.f32 %v2580, %v2772
        %v2774 = vpop.f32.mrb[0].mxu0
        %v2775 = vadd.f32 %v2582, %v2774
        %v2776 = vpop.f32.mrb[0].mxu0
        %v2777 = vadd.f32 %v2584, %v2776
        %2778 = vmatprep.mubr.bf16.mxu0 %v1188
        %2779 = vmatmul.mubr.bf16.gmra.mrb[0].mxu0 %v1187
        %v2780 = vpop.f32.mrb[0].mxu0
        %v2781 = vadd.f32 %v2588, %v2780
        %v2782 = vpop.f32.mrb[0].mxu0
        %v2783 = vadd.f32 %v2590, %v2782
        %v2784 = vpop.f32.mrb[0].mxu0
        %v2785 = vadd.f32 %v2592, %v2784
        %v2786 = vpop.f32.mrb[0].mxu0
        %v2787 = vadd.f32 %v2594, %v2786
        %2788 = vmatprep.mubr.bf16.mxu0 %v1195
        %2789 = vmatmul.mubr.bf16.gmra.mrb[0].mxu0 %v1194
        %v2790 = vpop.f32.mrb[0].mxu0
        %v2791 = vadd.f32 %v2598, %v2790
        %v2792 = vpop.f32.mrb[0].mxu0
        %v2793 = vadd.f32 %v2600, %v2792
        %v2794 = vpop.f32.mrb[0].mxu0
        %v2795 = vadd.f32 %v2602, %v2794
        %v2796 = vpop.f32.mrb[0].mxu0
        %v2797 = vadd.f32 %v2604, %v2796
        %2798 = vmatprep.mubr.bf16.mxu0 %v1202
        %2799 = vmatmul.mubr.bf16.gmra.mrb[0].mxu0 %v1201
        %v2800 = vpop.f32.mrb[0].mxu0
        %v2801 = vadd.f32 %v2608, %v2800
        %v2802 = vpop.f32.mrb[0].mxu0
        %v2803 = vadd.f32 %v2610, %v2802
        %v2804 = vpop.f32.mrb[0].mxu0
        %v2805 = vadd.f32 %v2612, %v2804
        %v2806 = vpop.f32.mrb[0].mxu0
        %v2807 = vadd.f32 %v2614, %v2806
        %2808 = vmatprep.mubr.bf16.mxu0 %v1209
        %2809 = vmatmul.mubr.bf16.gmra.mrb[0].mxu0 %v1208
        %v2810 = vpop.f32.mrb[0].mxu0
        %v2811 = vadd.f32 %v2618, %v2810
        %v2812 = vpop.f32.mrb[0].mxu0
        %v2813 = vadd.f32 %v2620, %v2812
        %v2814 = vpop.f32.mrb[0].mxu0
        %v2815 = vadd.f32 %v2622, %v2814
        %v2816 = vpop.f32.mrb[0].mxu0
        %v2817 = vadd.f32 %v2624, %v2816
        %2818 = vmatprep.mubr.bf16.mxu0 %v1216
        %2819 = vmatmul.mubr.bf16.gmra.mrb[0].mxu0 %v1215
        %v2820 = vpop.f32.mrb[0].mxu0
        %v2821 = vadd.f32 %v2628, %v2820
        %v2822 = vpop.f32.mrb[0].mxu0
        %v2823 = vadd.f32 %v2630, %v2822
        %v2824 = vpop.f32.mrb[0].mxu0
        %v2825 = vadd.f32 %v2632, %v2824
        %v2826 = vpop.f32.mrb[0].mxu0
        %v2827 = vadd.f32 %v2634, %v2826
        %2828 = vmatprep.mubr.bf16.mxu0 %v1223
        %2829 = vmatmul.mubr.bf16.gmra.mrb[0].mxu0 %v1222
        %v2830 = vpop.f32.mrb[0].mxu0
        %v2831 = vadd.f32 %v2638, %v2830
        %v2832 = vpop.f32.mrb[0].mxu0
        %v2833 = vadd.f32 %v2640, %v2832
        %v2834 = vpop.f32.mrb[0].mxu0
        %v2835 = vadd.f32 %v2642, %v2834
        %v2836 = vpop.f32.mrb[0].mxu0
        %v2837 = vadd.f32 %v2644, %v2836
        %2838 = vmatprep.mubr.bf16.mxu0 %v1230
        %2839 = vmatmul.mubr.bf16.gmra.mrb[0].mxu0 %v1229
        %v2840 = vpop.f32.mrb[0].mxu0
        %v2841 = vadd.f32 %v2648, %v2840
        %v2842 = vpop.f32.mrb[0].mxu0
        %v2843 = vadd.f32 %v2650, %v2842
        %v2844 = vpop.f32.mrb[0].mxu0
        %v2845 = vadd.f32 %v2652, %v2844
        %v2846 = vpop.f32.mrb[0].mxu0
        %v2847 = vadd.f32 %v2654, %v2846
        %2848 = vmatprep.mubr.bf16.mxu0 %v1237
        %2849 = vmatmul.mubr.bf16.gmra.mrb[0].mxu0 %v1236
        %v2850 = vpop.f32.mrb[0].mxu0
        %v2851 = vadd.f32 %v2658, %v2850
        %v2852 = vpop.f32.mrb[0].mxu0
        %v2853 = vadd.f32 %v2660, %v2852
        %v2854 = vpop.f32.mrb[0].mxu0
        %v2855 = vadd.f32 %v2662, %v2854
        %v2856 = vpop.f32.mrb[0].mxu0
        %v2857 = vadd.f32 %v2664, %v2856
        %2858 = vdwg.mxu0
        %2859 = vmatprep.subr.bf16.mxu0 %v2154
        %2860 = vmatpush1.bf16.msra.mxu0 %v2153
        %2861 = vmatprep.subr.bf16.mxu0 %v2158
        %2862 = vmatpush1.bf16.msra.mxu0 %v2157
        %2863 = vmatprep.subr.bf16.mxu0 %v2162
        %2864 = vmatpush1.bf16.msra.mxu0 %v2161
        %2865 = vmatprep.subr.bf16.mxu0 %v2166
        %2866 = vmatpush1.bf16.msra.mxu0 %v2165
        %2867 = vmatprep.subr.bf16.mxu0 %v2170
        %2868 = vmatpush1.bf16.msra.mxu0 %v2169
        %2869 = vmatprep.subr.bf16.mxu0 %v2174
        %2870 = vmatpush1.bf16.msra.mxu0 %v2173
        %2871 = vmatprep.subr.bf16.mxu0 %v2178
        %2872 = vmatpush1.bf16.msra.mxu0 %v2177
        %2873 = vmatprep.subr.bf16.mxu0 %v2182
        %2874 = vmatpush1.bf16.msra.mxu0 %v2181
        %2875 = vmatprep.subr.bf16.mxu0 %v2186
        %2876 = vmatpush1.bf16.msra.mxu0 %v2185
        %2877 = vmatprep.subr.bf16.mxu0 %v2190
        %2878 = vmatpush1.bf16.msra.mxu0 %v2189
        %2879 = vmatprep.subr.bf16.mxu0 %v2194
        %2880 = vmatpush1.bf16.msra.mxu0 %v2193
        %2881 = vmatprep.subr.bf16.mxu0 %v2198
        %2882 = vmatpush1.bf16.msra.mxu0 %v2197
        %2883 = vmatprep.subr.bf16.mxu0 %v2202
        %2884 = vmatpush1.bf16.msra.mxu0 %v2201
        %2885 = vmatprep.subr.bf16.mxu0 %v2206
        %2886 = vmatpush1.bf16.msra.mxu0 %v2205
        %2887 = vmatprep.subr.bf16.mxu0 %v2210
        %2888 = vmatpush1.bf16.msra.mxu0 %v2209
        %2889 = vmatprep.subr.bf16.mxu0 %v2214
        %2890 = vmatpush1.bf16.msra.mxu0 %v2213
        %2891 = vmatprep.mubr.bf16.mxu0 %v1134
        %2892 = vmatmul.mubr.bf16.gmra.mrb[0].mxu0 %v1133
        %v2893 = vpop.f32.mrb[0].mxu0
        %v2894 = vadd.f32 %v2701, %v2893
        %v2895 = vpop.f32.mrb[0].mxu0
        %v2896 = vadd.f32 %v2703, %v2895
        %v2897 = vpop.f32.mrb[0].mxu0
        %v2898 = vadd.f32 %v2705, %v2897
        %v2899 = vpop.f32.mrb[0].mxu0
        %v2900 = vadd.f32 %v2707, %v2899
        %2901 = vmatprep.mubr.bf16.mxu0 %v1141
        %2902 = vmatmul.mubr.bf16.gmra.mrb[0].mxu0 %v1140
        %v2903 = vpop.f32.mrb[0].mxu0
        %v2904 = vadd.f32 %v2711, %v2903
        %v2905 = vpop.f32.mrb[0].mxu0
        %v2906 = vadd.f32 %v2713, %v2905
        %v2907 = vpop.f32.mrb[0].mxu0
        %v2908 = vadd.f32 %v2715, %v2907
        %v2909 = vpop.f32.mrb[0].mxu0
        %v2910 = vadd.f32 %v2717, %v2909
        %2911 = vmatprep.mubr.bf16.mxu0 %v1148
        %2912 = vmatmul.mubr.bf16.gmra.mrb[0].mxu0 %v1147
        %v2913 = vpop.f32.mrb[0].mxu0
        %v2914 = vadd.f32 %v2721, %v2913
        %v2915 = vpop.f32.mrb[0].mxu0
        %v2916 = vadd.f32 %v2723, %v2915
        %v2917 = vpop.f32.mrb[0].mxu0
        %v2918 = vadd.f32 %v2725, %v2917
        %v2919 = vpop.f32.mrb[0].mxu0
        %v2920 = vadd.f32 %v2727, %v2919
        %2921 = vmatprep.mubr.bf16.mxu0 %v1155
        %2922 = vmatmul.mubr.bf16.gmra.mrb[0].mxu0 %v1154
        %v2923 = vpop.f32.mrb[0].mxu0
        %v2924 = vadd.f32 %v2731, %v2923
        %v2925 = vpop.f32.mrb[0].mxu0
        %v2926 = vadd.f32 %v2733, %v2925
        %v2927 = vpop.f32.mrb[0].mxu0
        %v2928 = vadd.f32 %v2735, %v2927
        %v2929 = vpop.f32.mrb[0].mxu0
        %v2930 = vadd.f32 %v2737, %v2929
        %2931 = vmatprep.mubr.bf16.mxu0 %v1162
        %2932 = vmatmul.mubr.bf16.gmra.mrb[0].mxu0 %v1161
        %v2933 = vpop.f32.mrb[0].mxu0
        %v2934 = vadd.f32 %v2741, %v2933
        %v2935 = vpop.f32.mrb[0].mxu0
        %v2936 = vadd.f32 %v2743, %v2935
        %v2937 = vpop.f32.mrb[0].mxu0
        %v2938 = vadd.f32 %v2745, %v2937
        %v2939 = vpop.f32.mrb[0].mxu0
        %v2940 = vadd.f32 %v2747, %v2939
        %2941 = vmatprep.mubr.bf16.mxu0 %v1169
        %2942 = vmatmul.mubr.bf16.gmra.mrb[0].mxu0 %v1168
        %v2943 = vpop.f32.mrb[0].mxu0
        %v2944 = vadd.f32 %v2751, %v2943
        %v2945 = vpop.f32.mrb[0].mxu0
        %v2946 = vadd.f32 %v2753, %v2945
        %v2947 = vpop.f32.mrb[0].mxu0
        %v2948 = vadd.f32 %v2755, %v2947
        %v2949 = vpop.f32.mrb[0].mxu0
        %v2950 = vadd.f32 %v2757, %v2949
        %2951 = vmatprep.mubr.bf16.mxu0 %v1176
        %2952 = vmatmul.mubr.bf16.gmra.mrb[0].mxu0 %v1175
        %v2953 = vpop.f32.mrb[0].mxu0
        %v2954 = vadd.f32 %v2761, %v2953
        %v2955 = vpop.f32.mrb[0].mxu0
        %v2956 = vadd.f32 %v2763, %v2955
        %v2957 = vpop.f32.mrb[0].mxu0
        %v2958 = vadd.f32 %v2765, %v2957
        %v2959 = vpop.f32.mrb[0].mxu0
        %v2960 = vadd.f32 %v2767, %v2959
        %2961 = vmatprep.mubr.bf16.mxu0 %v1183
        %2962 = vmatmul.mubr.bf16.gmra.mrb[0].mxu0 %v1182
        %v2963 = vpop.f32.mrb[0].mxu0
        %v2964 = vadd.f32 %v2771, %v2963
        %v2965 = vpop.f32.mrb[0].mxu0
        %v2966 = vadd.f32 %v2773, %v2965
        %v2967 = vpop.f32.mrb[0].mxu0
        %v2968 = vadd.f32 %v2775, %v2967
        %v2969 = vpop.f32.mrb[0].mxu0
        %v2970 = vadd.f32 %v2777, %v2969
        %2971 = vmatprep.mubr.bf16.mxu0 %v1190
        %2972 = vmatmul.mubr.bf16.gmra.mrb[0].mxu0 %v1189
        %v2973 = vpop.f32.mrb[0].mxu0
        %v2974 = vadd.f32 %v2781, %v2973
        %v2975 = vpop.f32.mrb[0].mxu0
        %v2976 = vadd.f32 %v2783, %v2975
        %v2977 = vpop.f32.mrb[0].mxu0
        %v2978 = vadd.f32 %v2785, %v2977
        %v2979 = vpop.f32.mrb[0].mxu0
        %v2980 = vadd.f32 %v2787, %v2979
        %2981 = vmatprep.mubr.bf16.mxu0 %v1197
        %2982 = vmatmul.mubr.bf16.gmra.mrb[0].mxu0 %v1196
        %v2983 = vpop.f32.mrb[0].mxu0
        %v2984 = vadd.f32 %v2791, %v2983
        %v2985 = vpop.f32.mrb[0].mxu0
        %v2986 = vadd.f32 %v2793, %v2985
        %v2987 = vpop.f32.mrb[0].mxu0
        %v2988 = vadd.f32 %v2795, %v2987
        %v2989 = vpop.f32.mrb[0].mxu0
        %v2990 = vadd.f32 %v2797, %v2989
        %2991 = vmatprep.mubr.bf16.mxu0 %v1204
        %2992 = vmatmul.mubr.bf16.gmra.mrb[0].mxu0 %v1203
        %v2993 = vpop.f32.mrb[0].mxu0
        %v2994 = vadd.f32 %v2801, %v2993
        %v2995 = vpop.f32.mrb[0].mxu0
        %v2996 = vadd.f32 %v2803, %v2995
        %v2997 = vpop.f32.mrb[0].mxu0
        %v2998 = vadd.f32 %v2805, %v2997
        %v2999 = vpop.f32.mrb[0].mxu0
        %v3000 = vadd.f32 %v2807, %v2999
        %3001 = vmatprep.mubr.bf16.mxu0 %v1211
        %3002 = vmatmul.mubr.bf16.gmra.mrb[0].mxu0 %v1210
        %v3003 = vpop.f32.mrb[0].mxu0
        %v3004 = vadd.f32 %v2811, %v3003
        %v3005 = vpop.f32.mrb[0].mxu0
        %v3006 = vadd.f32 %v2813, %v3005
        %v3007 = vpop.f32.mrb[0].mxu0
        %v3008 = vadd.f32 %v2815, %v3007
        %v3009 = vpop.f32.mrb[0].mxu0
        %v3010 = vadd.f32 %v2817, %v3009
        %3011 = vmatprep.mubr.bf16.mxu0 %v1218
        %3012 = vmatmul.mubr.bf16.gmra.mrb[0].mxu0 %v1217
        %v3013 = vpop.f32.mrb[0].mxu0
        %v3014 = vadd.f32 %v2821, %v3013
        %v3015 = vpop.f32.mrb[0].mxu0
        %v3016 = vadd.f32 %v2823, %v3015
        %v3017 = vpop.f32.mrb[0].mxu0
        %v3018 = vadd.f32 %v2825, %v3017
        %v3019 = vpop.f32.mrb[0].mxu0
        %v3020 = vadd.f32 %v2827, %v3019
        %3021 = vmatprep.mubr.bf16.mxu0 %v1225
        %3022 = vmatmul.mubr.bf16.gmra.mrb[0].mxu0 %v1224
        %v3023 = vpop.f32.mrb[0].mxu0
        %v3024 = vadd.f32 %v2831, %v3023
        %v3025 = vpop.f32.mrb[0].mxu0
        %v3026 = vadd.f32 %v2833, %v3025
        %v3027 = vpop.f32.mrb[0].mxu0
        %v3028 = vadd.f32 %v2835, %v3027
        %v3029 = vpop.f32.mrb[0].mxu0
        %v3030 = vadd.f32 %v2837, %v3029
        %3031 = vmatprep.mubr.bf16.mxu0 %v1232
        %3032 = vmatmul.mubr.bf16.gmra.mrb[0].mxu0 %v1231
        %v3033 = vpop.f32.mrb[0].mxu0
        %v3034 = vadd.f32 %v2841, %v3033
        %v3035 = vpop.f32.mrb[0].mxu0
        %v3036 = vadd.f32 %v2843, %v3035
        %v3037 = vpop.f32.mrb[0].mxu0
        %v3038 = vadd.f32 %v2845, %v3037
        %v3039 = vpop.f32.mrb[0].mxu0
        %v3040 = vadd.f32 %v2847, %v3039
        %3041 = vmatprep.mubr.bf16.mxu0 %v1239
        %3042 = vmatmul.mubr.bf16.gmra.mrb[0].mxu0 %v1238
        %v3043 = vpop.f32.mrb[0].mxu0
        %v3044 = vadd.f32 %v2851, %v3043
        %v3045 = vpop.f32.mrb[0].mxu0
        %v3046 = vadd.f32 %v2853, %v3045
        %v3047 = vpop.f32.mrb[0].mxu0
        %v3048 = vadd.f32 %v2855, %v3047
        %v3049 = vpop.f32.mrb[0].mxu0
        %v3050 = vadd.f32 %v2857, %v3049
        %3051 = vdwg.mxu0
        %3052 = vmatprep.subr.bf16.mxu0 %v2218
        %3053 = vmatpush1.bf16.msra.mxu0 %v2217
        %3054 = vmatprep.subr.bf16.mxu0 %v2222
        %3055 = vmatpush1.bf16.msra.mxu0 %v2221
        %3056 = vmatprep.subr.bf16.mxu0 %v2226
        %3057 = vmatpush1.bf16.msra.mxu0 %v2225
        %3058 = vmatprep.subr.bf16.mxu0 %v2230
        %3059 = vmatpush1.bf16.msra.mxu0 %v2229
        %3060 = vmatprep.subr.bf16.mxu0 %v2234
        %3061 = vmatpush1.bf16.msra.mxu0 %v2233
        %3062 = vmatprep.subr.bf16.mxu0 %v2238
        %3063 = vmatpush1.bf16.msra.mxu0 %v2237
        %3064 = vmatprep.subr.bf16.mxu0 %v2242
        %3065 = vmatpush1.bf16.msra.mxu0 %v2241
        %3066 = vmatprep.subr.bf16.mxu0 %v2246
        %3067 = vmatpush1.bf16.msra.mxu0 %v2245
        %3068 = vmatprep.subr.bf16.mxu0 0
        %3069 = vmatpush1.bf16.msra.mxu0 0
        %3070 = vmatprep.subr.bf16.mxu0 0
        %3071 = vmatpush1.bf16.msra.mxu0 0
        %3072 = vmatprep.subr.bf16.mxu0 0
        %3073 = vmatpush1.bf16.msra.mxu0 0
        %3074 = vmatprep.subr.bf16.mxu0 0
        %3075 = vmatpush1.bf16.msra.mxu0 0
        %3076 = vmatprep.subr.bf16.mxu0 0
        %3077 = vmatpush1.bf16.msra.mxu0 0
        %3078 = vmatprep.subr.bf16.mxu0 0
        %3079 = vmatpush1.bf16.msra.mxu0 0
        %3080 = vmatprep.subr.bf16.mxu0 0
        %3081 = vmatpush1.bf16.msra.mxu0 0
        %3082 = vmatprep.subr.bf16.mxu0 0
        %3083 = vmatpush1.bf16.msra.mxu0 0
        %3084 = vmatprep.mubr.bf16.mxu0 0
        %3085 = vmatmul.mubr.bf16.gmra.mrb[0].mxu0 %v1135
        %v3086 = vpop.f32.mrb[0].mxu0
        %v3087 = vadd.f32 %v2894, %v3086
        %v3088 = vpop.f32.mrb[0].mxu0
        %v3089 = vadd.f32 %v2896, %v3088
        %v3090 = vpop.f32.mrb[0].mxu0
        %v3091 = vadd.f32 %v2898, %v3090
        %v3092 = vpop.f32.mrb[0].mxu0
        %v3093 = vadd.f32 %v2900, %v3092
        %3094 = vmatprep.mubr.bf16.mxu0 0
        %3095 = vmatmul.mubr.bf16.gmra.mrb[0].mxu0 %v1142
        %v3096 = vpop.f32.mrb[0].mxu0
        %v3097 = vadd.f32 %v2904, %v3096
        %v3098 = vpop.f32.mrb[0].mxu0
        %v3099 = vadd.f32 %v2906, %v3098
        %v3100 = vpop.f32.mrb[0].mxu0
        %v3101 = vadd.f32 %v2908, %v3100
        %v3102 = vpop.f32.mrb[0].mxu0
        %v3103 = vadd.f32 %v2910, %v3102
        %3104 = vmatprep.mubr.bf16.mxu0 0
        %3105 = vmatmul.mubr.bf16.gmra.mrb[0].mxu0 %v1149
        %v3106 = vpop.f32.mrb[0].mxu0
        %v3107 = vadd.f32 %v2914, %v3106
        %v3108 = vpop.f32.mrb[0].mxu0
        %v3109 = vadd.f32 %v2916, %v3108
        %v3110 = vpop.f32.mrb[0].mxu0
        %v3111 = vadd.f32 %v2918, %v3110
        %v3112 = vpop.f32.mrb[0].mxu0
        %v3113 = vadd.f32 %v2920, %v3112
        %3114 = vmatprep.mubr.bf16.mxu0 0
        %3115 = vmatmul.mubr.bf16.gmra.mrb[0].mxu0 %v1156
        %v3116 = vpop.f32.mrb[0].mxu0
        %v3117 = vadd.f32 %v2924, %v3116
        %v3118 = vpop.f32.mrb[0].mxu0
        %v3119 = vadd.f32 %v2926, %v3118
        %v3120 = vpop.f32.mrb[0].mxu0
        %v3121 = vadd.f32 %v2928, %v3120
        %v3122 = vpop.f32.mrb[0].mxu0
        %v3123 = vadd.f32 %v2930, %v3122
        %3124 = vmatprep.mubr.bf16.mxu0 0
        %3125 = vmatmul.mubr.bf16.gmra.mrb[0].mxu0 %v1163
        %v3126 = vpop.f32.mrb[0].mxu0
        %v3127 = vadd.f32 %v2934, %v3126
        %v3128 = vpop.f32.mrb[0].mxu0
        %v3129 = vadd.f32 %v2936, %v3128
        %v3130 = vpop.f32.mrb[0].mxu0
        %v3131 = vadd.f32 %v2938, %v3130
        %v3132 = vpop.f32.mrb[0].mxu0
        %v3133 = vadd.f32 %v2940, %v3132
        %3134 = vmatprep.mubr.bf16.mxu0 0
        %3135 = vmatmul.mubr.bf16.gmra.mrb[0].mxu0 %v1170
        %v3136 = vpop.f32.mrb[0].mxu0
        %v3137 = vadd.f32 %v2944, %v3136
        %v3138 = vpop.f32.mrb[0].mxu0
        %v3139 = vadd.f32 %v2946, %v3138
        %v3140 = vpop.f32.mrb[0].mxu0
        %v3141 = vadd.f32 %v2948, %v3140
        %v3142 = vpop.f32.mrb[0].mxu0
        %v3143 = vadd.f32 %v2950, %v3142
        %3144 = vmatprep.mubr.bf16.mxu0 0
        %3145 = vmatmul.mubr.bf16.gmra.mrb[0].mxu0 %v1177
        %v3146 = vpop.f32.mrb[0].mxu0
        %v3147 = vadd.f32 %v2954, %v3146
        %v3148 = vpop.f32.mrb[0].mxu0
        %v3149 = vadd.f32 %v2956, %v3148
        %v3150 = vpop.f32.mrb[0].mxu0
        %v3151 = vadd.f32 %v2958, %v3150
        %v3152 = vpop.f32.mrb[0].mxu0
        %v3153 = vadd.f32 %v2960, %v3152
        %3154 = vmatprep.mubr.bf16.mxu0 0
        %3155 = vmatmul.mubr.bf16.gmra.mrb[0].mxu0 %v1184
        %v3156 = vpop.f32.mrb[0].mxu0
        %v3157 = vadd.f32 %v2964, %v3156
        %v3158 = vpop.f32.mrb[0].mxu0
        %v3159 = vadd.f32 %v2966, %v3158
        %v3160 = vpop.f32.mrb[0].mxu0
        %v3161 = vadd.f32 %v2968, %v3160
        %v3162 = vpop.f32.mrb[0].mxu0
        %v3163 = vadd.f32 %v2970, %v3162
        %3164 = vmatprep.mubr.bf16.mxu0 0
        %3165 = vmatmul.mubr.bf16.gmra.mrb[0].mxu0 %v1191
        %v3166 = vpop.f32.mrb[0].mxu0
        %v3167 = vadd.f32 %v2974, %v3166
        %v3168 = vpop.f32.mrb[0].mxu0
        %v3169 = vadd.f32 %v2976, %v3168
        %v3170 = vpop.f32.mrb[0].mxu0
        %v3171 = vadd.f32 %v2978, %v3170
        %v3172 = vpop.f32.mrb[0].mxu0
        %v3173 = vadd.f32 %v2980, %v3172
        %3174 = vmatprep.mubr.bf16.mxu0 0
        %3175 = vmatmul.mubr.bf16.gmra.mrb[0].mxu0 %v1198
        %v3176 = vpop.f32.mrb[0].mxu0
        %v3177 = vadd.f32 %v2984, %v3176
        %v3178 = vpop.f32.mrb[0].mxu0
        %v3179 = vadd.f32 %v2986, %v3178
        %v3180 = vpop.f32.mrb[0].mxu0
        %v3181 = vadd.f32 %v2988, %v3180
        %v3182 = vpop.f32.mrb[0].mxu0
        %v3183 = vadd.f32 %v2990, %v3182
        %3184 = vmatprep.mubr.bf16.mxu0 0
        %3185 = vmatmul.mubr.bf16.gmra.mrb[0].mxu0 %v1205
        %v3186 = vpop.f32.mrb[0].mxu0
        %v3187 = vadd.f32 %v2994, %v3186
        %v3188 = vpop.f32.mrb[0].mxu0
        %v3189 = vadd.f32 %v2996, %v3188
        %v3190 = vpop.f32.mrb[0].mxu0
        %v3191 = vadd.f32 %v2998, %v3190
        %v3192 = vpop.f32.mrb[0].mxu0
        %v3193 = vadd.f32 %v3000, %v3192
        %3194 = vmatprep.mubr.bf16.mxu0 0
        %3195 = vmatmul.mubr.bf16.gmra.mrb[0].mxu0 %v1212
        %v3196 = vpop.f32.mrb[0].mxu0
        %v3197 = vadd.f32 %v3004, %v3196
        %v3198 = vpop.f32.mrb[0].mxu0
        %v3199 = vadd.f32 %v3006, %v3198
        %v3200 = vpop.f32.mrb[0].mxu0
        %v3201 = vadd.f32 %v3008, %v3200
        %v3202 = vpop.f32.mrb[0].mxu0
        %v3203 = vadd.f32 %v3010, %v3202
        %3204 = vmatprep.mubr.bf16.mxu0 0
        %3205 = vmatmul.mubr.bf16.gmra.mrb[0].mxu0 %v1219
        %v3206 = vpop.f32.mrb[0].mxu0
        %v3207 = vadd.f32 %v3014, %v3206
        %v3208 = vpop.f32.mrb[0].mxu0
        %v3209 = vadd.f32 %v3016, %v3208
        %v3210 = vpop.f32.mrb[0].mxu0
        %v3211 = vadd.f32 %v3018, %v3210
        %v3212 = vpop.f32.mrb[0].mxu0
        %v3213 = vadd.f32 %v3020, %v3212
        %3214 = vmatprep.mubr.bf16.mxu0 0
        %3215 = vmatmul.mubr.bf16.gmra.mrb[0].mxu0 %v1226
        %v3216 = vpop.f32.mrb[0].mxu0
        %v3217 = vadd.f32 %v3024, %v3216
        %v3218 = vpop.f32.mrb[0].mxu0
        %v3219 = vadd.f32 %v3026, %v3218
        %v3220 = vpop.f32.mrb[0].mxu0
        %v3221 = vadd.f32 %v3028, %v3220
        %v3222 = vpop.f32.mrb[0].mxu0
        %v3223 = vadd.f32 %v3030, %v3222
        %3224 = vmatprep.mubr.bf16.mxu0 0
        %3225 = vmatmul.mubr.bf16.gmra.mrb[0].mxu0 %v1233
        %v3226 = vpop.f32.mrb[0].mxu0
        %v3227 = vadd.f32 %v3034, %v3226
        %v3228 = vpop.f32.mrb[0].mxu0
        %v3229 = vadd.f32 %v3036, %v3228
        %v3230 = vpop.f32.mrb[0].mxu0
        %v3231 = vadd.f32 %v3038, %v3230
        %v3232 = vpop.f32.mrb[0].mxu0
        %v3233 = vadd.f32 %v3040, %v3232
        %3234 = vmatprep.mubr.bf16.mxu0 0
        %3235 = vmatmul.mubr.bf16.gmra.mrb[0].mxu0 %v1240
        %v3236 = vpop.f32.mrb[0].mxu0
        %v3237 = vadd.f32 %v3044, %v3236
        %v3238 = vpop.f32.mrb[0].mxu0
        %v3239 = vadd.f32 %v3046, %v3238
        %v3240 = vpop.f32.mrb[0].mxu0
        %v3241 = vadd.f32 %v3048, %v3240
        %v3242 = vpop.f32.mrb[0].mxu0
        %v3243 = vadd.f32 %v3050, %v3242
        %3244 = vdwg.mxu0
        %3245 = vmatprep.subr.bf16.mxu0 %v2028
        %3246 = vmatpush1.bf16.msra.mxu0 %v2027
        %3247 = vmatprep.subr.bf16.mxu0 %v2032
        %3248 = vmatpush1.bf16.msra.mxu0 %v2031
        %3249 = vmatprep.subr.bf16.mxu0 %v2036
        %3250 = vmatpush1.bf16.msra.mxu0 %v2035
        %3251 = vmatprep.subr.bf16.mxu0 %v2040
        %3252 = vmatpush1.bf16.msra.mxu0 %v2039
        %3253 = vmatprep.subr.bf16.mxu0 %v2044
        %3254 = vmatpush1.bf16.msra.mxu0 %v2043
        %3255 = vmatprep.subr.bf16.mxu0 %v2048
        %3256 = vmatpush1.bf16.msra.mxu0 %v2047
        %3257 = vmatprep.subr.bf16.mxu0 %v2052
        %3258 = vmatpush1.bf16.msra.mxu0 %v2051
        %3259 = vmatprep.subr.bf16.mxu0 %v2056
        %3260 = vmatpush1.bf16.msra.mxu0 %v2055
        %3261 = vmatprep.subr.bf16.mxu0 %v2060
        %3262 = vmatpush1.bf16.msra.mxu0 %v2059
        %3263 = vmatprep.subr.bf16.mxu0 %v2064
        %3264 = vmatpush1.bf16.msra.mxu0 %v2063
        %3265 = vmatprep.subr.bf16.mxu0 %v2068
        %3266 = vmatpush1.bf16.msra.mxu0 %v2067
        %3267 = vmatprep.subr.bf16.mxu0 %v2072
        %3268 = vmatpush1.bf16.msra.mxu0 %v2071
        %3269 = vmatprep.subr.bf16.mxu0 %v2076
        %3270 = vmatpush1.bf16.msra.mxu0 %v2075
        %3271 = vmatprep.subr.bf16.mxu0 %v2080
        %3272 = vmatpush1.bf16.msra.mxu0 %v2079
        %3273 = vmatprep.subr.bf16.mxu0 %v2084
        %3274 = vmatpush1.bf16.msra.mxu0 %v2083
        %3275 = vmatprep.subr.bf16.mxu0 %v2088
        %3276 = vmatpush1.bf16.msra.mxu0 %v2087
        %3277 = vmatprep.mubr.bf16.mxu0 %v1130
        %3278 = vmatmul.mubr.bf16.gmra.mrb[0].mxu0 %v1129
        %v3279 = vpop.f32.mrb[0].mxu0
        %v3280 = vadd.f32 %v768, %v3279
        %v3281 = vpop.f32.mrb[0].mxu0
        %v3282 = vadd.f32 %v772, %v3281
        %v3283 = vpop.f32.mrb[0].mxu0
        %v3284 = vadd.f32 %v768, %v3283
        %v3285 = vpop.f32.mrb[0].mxu0
        %v3286 = vadd.f32 %v772, %v3285
        %3287 = vmatprep.mubr.bf16.mxu0 %v1137
        %3288 = vmatmul.mubr.bf16.gmra.mrb[0].mxu0 %v1136
        %v3289 = vpop.f32.mrb[0].mxu0
        %v3290 = vadd.f32 %v768, %v3289
        %v3291 = vpop.f32.mrb[0].mxu0
        %v3292 = vadd.f32 %v772, %v3291
        %v3293 = vpop.f32.mrb[0].mxu0
        %v3294 = vadd.f32 %v768, %v3293
        %v3295 = vpop.f32.mrb[0].mxu0
        %v3296 = vadd.f32 %v772, %v3295
        %3297 = vmatprep.mubr.bf16.mxu0 %v1144
        %3298 = vmatmul.mubr.bf16.gmra.mrb[0].mxu0 %v1143
        %v3299 = vpop.f32.mrb[0].mxu0
        %v3300 = vadd.f32 %v768, %v3299
        %v3301 = vpop.f32.mrb[0].mxu0
        %v3302 = vadd.f32 %v772, %v3301
        %v3303 = vpop.f32.mrb[0].mxu0
        %v3304 = vadd.f32 %v768, %v3303
        %v3305 = vpop.f32.mrb[0].mxu0
        %v3306 = vadd.f32 %v772, %v3305
        %3307 = vmatprep.mubr.bf16.mxu0 %v1151
        %3308 = vmatmul.mubr.bf16.gmra.mrb[0].mxu0 %v1150
        %v3309 = vpop.f32.mrb[0].mxu0
        %v3310 = vadd.f32 %v768, %v3309
        %v3311 = vpop.f32.mrb[0].mxu0
        %v3312 = vadd.f32 %v772, %v3311
        %v3313 = vpop.f32.mrb[0].mxu0
        %v3314 = vadd.f32 %v768, %v3313
        %v3315 = vpop.f32.mrb[0].mxu0
        %v3316 = vadd.f32 %v772, %v3315
        %3317 = vmatprep.mubr.bf16.mxu0 %v1158
        %3318 = vmatmul.mubr.bf16.gmra.mrb[0].mxu0 %v1157
        %v3319 = vpop.f32.mrb[0].mxu0
        %v3320 = vadd.f32 %v768, %v3319
        %v3321 = vpop.f32.mrb[0].mxu0
        %v3322 = vadd.f32 %v772, %v3321
        %v3323 = vpop.f32.mrb[0].mxu0
        %v3324 = vadd.f32 %v768, %v3323
        %v3325 = vpop.f32.mrb[0].mxu0
        %v3326 = vadd.f32 %v772, %v3325
        %3327 = vmatprep.mubr.bf16.mxu0 %v1165
        %3328 = vmatmul.mubr.bf16.gmra.mrb[0].mxu0 %v1164
        %v3329 = vpop.f32.mrb[0].mxu0
        %v3330 = vadd.f32 %v768, %v3329
        %v3331 = vpop.f32.mrb[0].mxu0
        %v3332 = vadd.f32 %v772, %v3331
        %v3333 = vpop.f32.mrb[0].mxu0
        %v3334 = vadd.f32 %v768, %v3333
        %v3335 = vpop.f32.mrb[0].mxu0
        %v3336 = vadd.f32 %v772, %v3335
        %3337 = vmatprep.mubr.bf16.mxu0 %v1172
        %3338 = vmatmul.mubr.bf16.gmra.mrb[0].mxu0 %v1171
        %v3339 = vpop.f32.mrb[0].mxu0
        %v3340 = vadd.f32 %v768, %v3339
        %v3341 = vpop.f32.mrb[0].mxu0
        %v3342 = vadd.f32 %v772, %v3341
        %v3343 = vpop.f32.mrb[0].mxu0
        %v3344 = vadd.f32 %v768, %v3343
        %v3345 = vpop.f32.mrb[0].mxu0
        %v3346 = vadd.f32 %v772, %v3345
        %3347 = vmatprep.mubr.bf16.mxu0 %v1179
        %3348 = vmatmul.mubr.bf16.gmra.mrb[0].mxu0 %v1178
        %v3349 = vpop.f32.mrb[0].mxu0
        %v3350 = vadd.f32 %v768, %v3349
        %v3351 = vpop.f32.mrb[0].mxu0
        %v3352 = vadd.f32 %v772, %v3351
        %v3353 = vpop.f32.mrb[0].mxu0
        %v3354 = vadd.f32 %v768, %v3353
        %v3355 = vpop.f32.mrb[0].mxu0
        %v3356 = vadd.f32 %v772, %v3355
        %3357 = vmatprep.mubr.bf16.mxu0 %v1186
        %3358 = vmatmul.mubr.bf16.gmra.mrb[0].mxu0 %v1185
        %v3359 = vpop.f32.mrb[0].mxu0
        %v3360 = vadd.f32 %v768, %v3359
        %v3361 = vpop.f32.mrb[0].mxu0
        %v3362 = vadd.f32 %v772, %v3361
        %v3363 = vpop.f32.mrb[0].mxu0
        %v3364 = vadd.f32 %v768, %v3363
        %v3365 = vpop.f32.mrb[0].mxu0
        %v3366 = vadd.f32 %v772, %v3365
        %3367 = vmatprep.mubr.bf16.mxu0 %v1193
        %3368 = vmatmul.mubr.bf16.gmra.mrb[0].mxu0 %v1192
        %v3369 = vpop.f32.mrb[0].mxu0
        %v3370 = vadd.f32 %v768, %v3369
        %v3371 = vpop.f32.mrb[0].mxu0
        %v3372 = vadd.f32 %v772, %v3371
        %v3373 = vpop.f32.mrb[0].mxu0
        %v3374 = vadd.f32 %v768, %v3373
        %v3375 = vpop.f32.mrb[0].mxu0
        %v3376 = vadd.f32 %v772, %v3375
        %3377 = vmatprep.mubr.bf16.mxu0 %v1200
        %3378 = vmatmul.mubr.bf16.gmra.mrb[0].mxu0 %v1199
        %v3379 = vpop.f32.mrb[0].mxu0
        %v3380 = vadd.f32 %v768, %v3379
        %v3381 = vpop.f32.mrb[0].mxu0
        %v3382 = vadd.f32 %v772, %v3381
        %v3383 = vpop.f32.mrb[0].mxu0
        %v3384 = vadd.f32 %v768, %v3383
        %v3385 = vpop.f32.mrb[0].mxu0
        %v3386 = vadd.f32 %v772, %v3385
        %3387 = vmatprep.mubr.bf16.mxu0 %v1207
        %3388 = vmatmul.mubr.bf16.gmra.mrb[0].mxu0 %v1206
        %v3389 = vpop.f32.mrb[0].mxu0
        %v3390 = vadd.f32 %v768, %v3389
        %v3391 = vpop.f32.mrb[0].mxu0
        %v3392 = vadd.f32 %v772, %v3391
        %v3393 = vpop.f32.mrb[0].mxu0
        %v3394 = vadd.f32 %v768, %v3393
        %v3395 = vpop.f32.mrb[0].mxu0
        %v3396 = vadd.f32 %v772, %v3395
        %3397 = vmatprep.mubr.bf16.mxu0 %v1214
        %3398 = vmatmul.mubr.bf16.gmra.mrb[0].mxu0 %v1213
        %v3399 = vpop.f32.mrb[0].mxu0
        %v3400 = vadd.f32 %v768, %v3399
        %v3401 = vpop.f32.mrb[0].mxu0
        %v3402 = vadd.f32 %v772, %v3401
        %v3403 = vpop.f32.mrb[0].mxu0
        %v3404 = vadd.f32 %v768, %v3403
        %v3405 = vpop.f32.mrb[0].mxu0
        %v3406 = vadd.f32 %v772, %v3405
        %3407 = vmatprep.mubr.bf16.mxu0 %v1221
        %3408 = vmatmul.mubr.bf16.gmra.mrb[0].mxu0 %v1220
        %v3409 = vpop.f32.mrb[0].mxu0
        %v3410 = vadd.f32 %v768, %v3409
        %v3411 = vpop.f32.mrb[0].mxu0
        %v3412 = vadd.f32 %v772, %v3411
        %v3413 = vpop.f32.mrb[0].mxu0
        %v3414 = vadd.f32 %v768, %v3413
        %v3415 = vpop.f32.mrb[0].mxu0
        %v3416 = vadd.f32 %v772, %v3415
        %3417 = vmatprep.mubr.bf16.mxu0 %v1228
        %3418 = vmatmul.mubr.bf16.gmra.mrb[0].mxu0 %v1227
        %v3419 = vpop.f32.mrb[0].mxu0
        %v3420 = vadd.f32 %v768, %v3419
        %v3421 = vpop.f32.mrb[0].mxu0
        %v3422 = vadd.f32 %v772, %v3421
        %v3423 = vpop.f32.mrb[0].mxu0
        %v3424 = vadd.f32 %v768, %v3423
        %v3425 = vpop.f32.mrb[0].mxu0
        %v3426 = vadd.f32 %v772, %v3425
        %3427 = vmatprep.mubr.bf16.mxu0 %v1235
        %3428 = vmatmul.mubr.bf16.gmra.mrb[0].mxu0 %v1234
        %v3429 = vpop.f32.mrb[0].mxu0
        %v3430 = vadd.f32 %v768, %v3429
        %v3431 = vpop.f32.mrb[0].mxu0
        %v3432 = vadd.f32 %v772, %v3431
        %v3433 = vpop.f32.mrb[0].mxu0
        %v3434 = vadd.f32 %v768, %v3433
        %v3435 = vpop.f32.mrb[0].mxu0
        %v3436 = vadd.f32 %v772, %v3435
        %3437 = vdwg.mxu0
        %3438 = vmatprep.subr.bf16.mxu0 %v2092
        %3439 = vmatpush1.bf16.msra.mxu0 %v2091
        %3440 = vmatprep.subr.bf16.mxu0 %v2096
        %3441 = vmatpush1.bf16.msra.mxu0 %v2095
        %3442 = vmatprep.subr.bf16.mxu0 %v2100
        %3443 = vmatpush1.bf16.msra.mxu0 %v2099
        %3444 = vmatprep.subr.bf16.mxu0 %v2104
        %3445 = vmatpush1.bf16.msra.mxu0 %v2103
        %3446 = vmatprep.subr.bf16.mxu0 %v2108
        %3447 = vmatpush1.bf16.msra.mxu0 %v2107
        %3448 = vmatprep.subr.bf16.mxu0 %v2112
        %3449 = vmatpush1.bf16.msra.mxu0 %v2111
        %3450 = vmatprep.subr.bf16.mxu0 %v2116
        %3451 = vmatpush1.bf16.msra.mxu0 %v2115
        %3452 = vmatprep.subr.bf16.mxu0 %v2120
        %3453 = vmatpush1.bf16.msra.mxu0 %v2119
        %3454 = vmatprep.subr.bf16.mxu0 %v2124
        %3455 = vmatpush1.bf16.msra.mxu0 %v2123
        %3456 = vmatprep.subr.bf16.mxu0 %v2128
        %3457 = vmatpush1.bf16.msra.mxu0 %v2127
        %3458 = vmatprep.subr.bf16.mxu0 %v2132
        %3459 = vmatpush1.bf16.msra.mxu0 %v2131
        %3460 = vmatprep.subr.bf16.mxu0 %v2136
        %3461 = vmatpush1.bf16.msra.mxu0 %v2135
        %3462 = vmatprep.subr.bf16.mxu0 %v2140
        %3463 = vmatpush1.bf16.msra.mxu0 %v2139
        %3464 = vmatprep.subr.bf16.mxu0 %v2144
        %3465 = vmatpush1.bf16.msra.mxu0 %v2143
        %3466 = vmatprep.subr.bf16.mxu0 %v2148
        %3467 = vmatpush1.bf16.msra.mxu0 %v2147
        %3468 = vmatprep.subr.bf16.mxu0 %v2152
        %3469 = vmatpush1.bf16.msra.mxu0 %v2151
        %3470 = vmatprep.mubr.bf16.mxu0 %v1132
        %3471 = vmatmul.mubr.bf16.gmra.mrb[0].mxu0 %v1131
        %v3472 = vpop.f32.mrb[0].mxu0
        %v3473 = vadd.f32 %v3280, %v3472
        %v3474 = vpop.f32.mrb[0].mxu0
        %v3475 = vadd.f32 %v3282, %v3474
        %v3476 = vpop.f32.mrb[0].mxu0
        %v3477 = vadd.f32 %v3284, %v3476
        %v3478 = vpop.f32.mrb[0].mxu0
        %v3479 = vadd.f32 %v3286, %v3478
        %3480 = vmatprep.mubr.bf16.mxu0 %v1139
        %3481 = vmatmul.mubr.bf16.gmra.mrb[0].mxu0 %v1138
        %v3482 = vpop.f32.mrb[0].mxu0
        %v3483 = vadd.f32 %v3290, %v3482
        %v3484 = vpop.f32.mrb[0].mxu0
        %v3485 = vadd.f32 %v3292, %v3484
        %v3486 = vpop.f32.mrb[0].mxu0
        %v3487 = vadd.f32 %v3294, %v3486
        %v3488 = vpop.f32.mrb[0].mxu0
        %v3489 = vadd.f32 %v3296, %v3488
        %3490 = vmatprep.mubr.bf16.mxu0 %v1146
        %3491 = vmatmul.mubr.bf16.gmra.mrb[0].mxu0 %v1145
        %v3492 = vpop.f32.mrb[0].mxu0
        %v3493 = vadd.f32 %v3300, %v3492
        %v3494 = vpop.f32.mrb[0].mxu0
        %v3495 = vadd.f32 %v3302, %v3494
        %v3496 = vpop.f32.mrb[0].mxu0
        %v3497 = vadd.f32 %v3304, %v3496
        %v3498 = vpop.f32.mrb[0].mxu0
        %v3499 = vadd.f32 %v3306, %v3498
        %3500 = vmatprep.mubr.bf16.mxu0 %v1153
        %3501 = vmatmul.mubr.bf16.gmra.mrb[0].mxu0 %v1152
        %v3502 = vpop.f32.mrb[0].mxu0
        %v3503 = vadd.f32 %v3310, %v3502
        %v3504 = vpop.f32.mrb[0].mxu0
        %v3505 = vadd.f32 %v3312, %v3504
        %v3506 = vpop.f32.mrb[0].mxu0
        %v3507 = vadd.f32 %v3314, %v3506
        %v3508 = vpop.f32.mrb[0].mxu0
        %v3509 = vadd.f32 %v3316, %v3508
        %3510 = vmatprep.mubr.bf16.mxu0 %v1160
        %3511 = vmatmul.mubr.bf16.gmra.mrb[0].mxu0 %v1159
        %v3512 = vpop.f32.mrb[0].mxu0
        %v3513 = vadd.f32 %v3320, %v3512
        %v3514 = vpop.f32.mrb[0].mxu0
        %v3515 = vadd.f32 %v3322, %v3514
        %v3516 = vpop.f32.mrb[0].mxu0
        %v3517 = vadd.f32 %v3324, %v3516
        %v3518 = vpop.f32.mrb[0].mxu0
        %v3519 = vadd.f32 %v3326, %v3518
        %3520 = vmatprep.mubr.bf16.mxu0 %v1167
        %3521 = vmatmul.mubr.bf16.gmra.mrb[0].mxu0 %v1166
        %v3522 = vpop.f32.mrb[0].mxu0
        %v3523 = vadd.f32 %v3330, %v3522
        %v3524 = vpop.f32.mrb[0].mxu0
        %v3525 = vadd.f32 %v3332, %v3524
        %v3526 = vpop.f32.mrb[0].mxu0
        %v3527 = vadd.f32 %v3334, %v3526
        %v3528 = vpop.f32.mrb[0].mxu0
        %v3529 = vadd.f32 %v3336, %v3528
        %3530 = vmatprep.mubr.bf16.mxu0 %v1174
        %3531 = vmatmul.mubr.bf16.gmra.mrb[0].mxu0 %v1173
        %v3532 = vpop.f32.mrb[0].mxu0
        %v3533 = vadd.f32 %v3340, %v3532
        %v3534 = vpop.f32.mrb[0].mxu0
        %v3535 = vadd.f32 %v3342, %v3534
        %v3536 = vpop.f32.mrb[0].mxu0
        %v3537 = vadd.f32 %v3344, %v3536
        %v3538 = vpop.f32.mrb[0].mxu0
        %v3539 = vadd.f32 %v3346, %v3538
        %3540 = vmatprep.mubr.bf16.mxu0 %v1181
        %3541 = vmatmul.mubr.bf16.gmra.mrb[0].mxu0 %v1180
        %v3542 = vpop.f32.mrb[0].mxu0
        %v3543 = vadd.f32 %v3350, %v3542
        %v3544 = vpop.f32.mrb[0].mxu0
        %v3545 = vadd.f32 %v3352, %v3544
        %v3546 = vpop.f32.mrb[0].mxu0
        %v3547 = vadd.f32 %v3354, %v3546
        %v3548 = vpop.f32.mrb[0].mxu0
        %v3549 = vadd.f32 %v3356, %v3548
        %3550 = vmatprep.mubr.bf16.mxu0 %v1188
        %3551 = vmatmul.mubr.bf16.gmra.mrb[0].mxu0 %v1187
        %v3552 = vpop.f32.mrb[0].mxu0
        %v3553 = vadd.f32 %v3360, %v3552
        %v3554 = vpop.f32.mrb[0].mxu0
        %v3555 = vadd.f32 %v3362, %v3554
        %v3556 = vpop.f32.mrb[0].mxu0
        %v3557 = vadd.f32 %v3364, %v3556
        %v3558 = vpop.f32.mrb[0].mxu0
        %v3559 = vadd.f32 %v3366, %v3558
        %3560 = vmatprep.mubr.bf16.mxu0 %v1195
        %3561 = vmatmul.mubr.bf16.gmra.mrb[0].mxu0 %v1194
        %v3562 = vpop.f32.mrb[0].mxu0
        %v3563 = vadd.f32 %v3370, %v3562
        %v3564 = vpop.f32.mrb[0].mxu0
        %v3565 = vadd.f32 %v3372, %v3564
        %v3566 = vpop.f32.mrb[0].mxu0
        %v3567 = vadd.f32 %v3374, %v3566
        %v3568 = vpop.f32.mrb[0].mxu0
        %v3569 = vadd.f32 %v3376, %v3568
        %3570 = vmatprep.mubr.bf16.mxu0 %v1202
        %3571 = vmatmul.mubr.bf16.gmra.mrb[0].mxu0 %v1201
        %v3572 = vpop.f32.mrb[0].mxu0
        %v3573 = vadd.f32 %v3380, %v3572
        %v3574 = vpop.f32.mrb[0].mxu0
        %v3575 = vadd.f32 %v3382, %v3574
        %v3576 = vpop.f32.mrb[0].mxu0
        %v3577 = vadd.f32 %v3384, %v3576
        %v3578 = vpop.f32.mrb[0].mxu0
        %v3579 = vadd.f32 %v3386, %v3578
        %3580 = vmatprep.mubr.bf16.mxu0 %v1209
        %3581 = vmatmul.mubr.bf16.gmra.mrb[0].mxu0 %v1208
        %v3582 = vpop.f32.mrb[0].mxu0
        %v3583 = vadd.f32 %v3390, %v3582
        %v3584 = vpop.f32.mrb[0].mxu0
        %v3585 = vadd.f32 %v3392, %v3584
        %v3586 = vpop.f32.mrb[0].mxu0
        %v3587 = vadd.f32 %v3394, %v3586
        %v3588 = vpop.f32.mrb[0].mxu0
        %v3589 = vadd.f32 %v3396, %v3588
        %3590 = vmatprep.mubr.bf16.mxu0 %v1216
        %3591 = vmatmul.mubr.bf16.gmra.mrb[0].mxu0 %v1215
        %v3592 = vpop.f32.mrb[0].mxu0
        %v3593 = vadd.f32 %v3400, %v3592
        %v3594 = vpop.f32.mrb[0].mxu0
        %v3595 = vadd.f32 %v3402, %v3594
        %v3596 = vpop.f32.mrb[0].mxu0
        %v3597 = vadd.f32 %v3404, %v3596
        %v3598 = vpop.f32.mrb[0].mxu0
        %v3599 = vadd.f32 %v3406, %v3598
        %3600 = vmatprep.mubr.bf16.mxu0 %v1223
        %3601 = vmatmul.mubr.bf16.gmra.mrb[0].mxu0 %v1222
        %v3602 = vpop.f32.mrb[0].mxu0
        %v3603 = vadd.f32 %v3410, %v3602
        %v3604 = vpop.f32.mrb[0].mxu0
        %v3605 = vadd.f32 %v3412, %v3604
        %v3606 = vpop.f32.mrb[0].mxu0
        %v3607 = vadd.f32 %v3414, %v3606
        %v3608 = vpop.f32.mrb[0].mxu0
        %v3609 = vadd.f32 %v3416, %v3608
        %3610 = vmatprep.mubr.bf16.mxu0 %v1230
        %3611 = vmatmul.mubr.bf16.gmra.mrb[0].mxu0 %v1229
        %v3612 = vpop.f32.mrb[0].mxu0
        %v3613 = vadd.f32 %v3420, %v3612
        %v3614 = vpop.f32.mrb[0].mxu0
        %v3615 = vadd.f32 %v3422, %v3614
        %v3616 = vpop.f32.mrb[0].mxu0
        %v3617 = vadd.f32 %v3424, %v3616
        %v3618 = vpop.f32.mrb[0].mxu0
        %v3619 = vadd.f32 %v3426, %v3618
        %3620 = vmatprep.mubr.bf16.mxu0 %v1237
        %3621 = vmatmul.mubr.bf16.gmra.mrb[0].mxu0 %v1236
        %v3622 = vpop.f32.mrb[0].mxu0
        %v3623 = vadd.f32 %v3430, %v3622
        %v3624 = vpop.f32.mrb[0].mxu0
        %v3625 = vadd.f32 %v3432, %v3624
        %v3626 = vpop.f32.mrb[0].mxu0
        %v3627 = vadd.f32 %v3434, %v3626
        %v3628 = vpop.f32.mrb[0].mxu0
        %v3629 = vadd.f32 %v3436, %v3628
        %3630 = vdwg.mxu0
        %3631 = vmatprep.subr.bf16.mxu0 %v2156
        %3632 = vmatpush1.bf16.msra.mxu0 %v2155
        %3633 = vmatprep.subr.bf16.mxu0 %v2160
        %3634 = vmatpush1.bf16.msra.mxu0 %v2159
        %3635 = vmatprep.subr.bf16.mxu0 %v2164
        %3636 = vmatpush1.bf16.msra.mxu0 %v2163
        %3637 = vmatprep.subr.bf16.mxu0 %v2168
        %3638 = vmatpush1.bf16.msra.mxu0 %v2167
        %3639 = vmatprep.subr.bf16.mxu0 %v2172
        %3640 = vmatpush1.bf16.msra.mxu0 %v2171
        %3641 = vmatprep.subr.bf16.mxu0 %v2176
        %3642 = vmatpush1.bf16.msra.mxu0 %v2175
        %3643 = vmatprep.subr.bf16.mxu0 %v2180
        %3644 = vmatpush1.bf16.msra.mxu0 %v2179
        %3645 = vmatprep.subr.bf16.mxu0 %v2184
        %3646 = vmatpush1.bf16.msra.mxu0 %v2183
        %3647 = vmatprep.subr.bf16.mxu0 %v2188
        %3648 = vmatpush1.bf16.msra.mxu0 %v2187
        %3649 = vmatprep.subr.bf16.mxu0 %v2192
        %3650 = vmatpush1.bf16.msra.mxu0 %v2191
        %3651 = vmatprep.subr.bf16.mxu0 %v2196
        %3652 = vmatpush1.bf16.msra.mxu0 %v2195
        %3653 = vmatprep.subr.bf16.mxu0 %v2200
        %3654 = vmatpush1.bf16.msra.mxu0 %v2199
        %3655 = vmatprep.subr.bf16.mxu0 %v2204
        %3656 = vmatpush1.bf16.msra.mxu0 %v2203
        %3657 = vmatprep.subr.bf16.mxu0 %v2208
        %3658 = vmatpush1.bf16.msra.mxu0 %v2207
        %3659 = vmatprep.subr.bf16.mxu0 %v2212
        %3660 = vmatpush1.bf16.msra.mxu0 %v2211
        %3661 = vmatprep.subr.bf16.mxu0 %v2216
        %3662 = vmatpush1.bf16.msra.mxu0 %v2215
        %3663 = vmatprep.mubr.bf16.mxu0 %v1134
        %3664 = vmatmul.mubr.bf16.gmra.mrb[0].mxu0 %v1133
        %v3665 = vpop.f32.mrb[0].mxu0
        %v3666 = vadd.f32 %v3473, %v3665
        %v3667 = vpop.f32.mrb[0].mxu0
        %v3668 = vadd.f32 %v3475, %v3667
        %v3669 = vpop.f32.mrb[0].mxu0
        %v3670 = vadd.f32 %v3477, %v3669
        %v3671 = vpop.f32.mrb[0].mxu0
        %v3672 = vadd.f32 %v3479, %v3671
        %3673 = vmatprep.mubr.bf16.mxu0 %v1141
        %3674 = vmatmul.mubr.bf16.gmra.mrb[0].mxu0 %v1140
        %v3675 = vpop.f32.mrb[0].mxu0
        %v3676 = vadd.f32 %v3483, %v3675
        %v3677 = vpop.f32.mrb[0].mxu0
        %v3678 = vadd.f32 %v3485, %v3677
        %v3679 = vpop.f32.mrb[0].mxu0
        %v3680 = vadd.f32 %v3487, %v3679
        %v3681 = vpop.f32.mrb[0].mxu0
        %v3682 = vadd.f32 %v3489, %v3681
        %3683 = vmatprep.mubr.bf16.mxu0 %v1148
        %3684 = vmatmul.mubr.bf16.gmra.mrb[0].mxu0 %v1147
        %v3685 = vpop.f32.mrb[0].mxu0
        %v3686 = vadd.f32 %v3493, %v3685
        %v3687 = vpop.f32.mrb[0].mxu0
        %v3688 = vadd.f32 %v3495, %v3687
        %v3689 = vpop.f32.mrb[0].mxu0
        %v3690 = vadd.f32 %v3497, %v3689
        %v3691 = vpop.f32.mrb[0].mxu0
        %v3692 = vadd.f32 %v3499, %v3691
        %3693 = vmatprep.mubr.bf16.mxu0 %v1155
        %3694 = vmatmul.mubr.bf16.gmra.mrb[0].mxu0 %v1154
        %v3695 = vpop.f32.mrb[0].mxu0
        %v3696 = vadd.f32 %v3503, %v3695
        %v3697 = vpop.f32.mrb[0].mxu0
        %v3698 = vadd.f32 %v3505, %v3697
        %v3699 = vpop.f32.mrb[0].mxu0
        %v3700 = vadd.f32 %v3507, %v3699
        %v3701 = vpop.f32.mrb[0].mxu0
        %v3702 = vadd.f32 %v3509, %v3701
        %3703 = vmatprep.mubr.bf16.mxu0 %v1162
        %3704 = vmatmul.mubr.bf16.gmra.mrb[0].mxu0 %v1161
        %v3705 = vpop.f32.mrb[0].mxu0
        %v3706 = vadd.f32 %v3513, %v3705
        %v3707 = vpop.f32.mrb[0].mxu0
        %v3708 = vadd.f32 %v3515, %v3707
        %v3709 = vpop.f32.mrb[0].mxu0
        %v3710 = vadd.f32 %v3517, %v3709
        %v3711 = vpop.f32.mrb[0].mxu0
        %v3712 = vadd.f32 %v3519, %v3711
        %3713 = vmatprep.mubr.bf16.mxu0 %v1169
        %3714 = vmatmul.mubr.bf16.gmra.mrb[0].mxu0 %v1168
        %v3715 = vpop.f32.mrb[0].mxu0
        %v3716 = vadd.f32 %v3523, %v3715
        %v3717 = vpop.f32.mrb[0].mxu0
        %v3718 = vadd.f32 %v3525, %v3717
        %v3719 = vpop.f32.mrb[0].mxu0
        %v3720 = vadd.f32 %v3527, %v3719
        %v3721 = vpop.f32.mrb[0].mxu0
        %v3722 = vadd.f32 %v3529, %v3721
        %3723 = vmatprep.mubr.bf16.mxu0 %v1176
        %3724 = vmatmul.mubr.bf16.gmra.mrb[0].mxu0 %v1175
        %v3725 = vpop.f32.mrb[0].mxu0
        %v3726 = vadd.f32 %v3533, %v3725
        %v3727 = vpop.f32.mrb[0].mxu0
        %v3728 = vadd.f32 %v3535, %v3727
        %v3729 = vpop.f32.mrb[0].mxu0
        %v3730 = vadd.f32 %v3537, %v3729
        %v3731 = vpop.f32.mrb[0].mxu0
        %v3732 = vadd.f32 %v3539, %v3731
        %3733 = vmatprep.mubr.bf16.mxu0 %v1183
        %3734 = vmatmul.mubr.bf16.gmra.mrb[0].mxu0 %v1182
        %v3735 = vpop.f32.mrb[0].mxu0
        %v3736 = vadd.f32 %v3543, %v3735
        %v3737 = vpop.f32.mrb[0].mxu0
        %v3738 = vadd.f32 %v3545, %v3737
        %v3739 = vpop.f32.mrb[0].mxu0
        %v3740 = vadd.f32 %v3547, %v3739
        %v3741 = vpop.f32.mrb[0].mxu0
        %v3742 = vadd.f32 %v3549, %v3741
        %3743 = vmatprep.mubr.bf16.mxu0 %v1190
        %3744 = vmatmul.mubr.bf16.gmra.mrb[0].mxu0 %v1189
        %v3745 = vpop.f32.mrb[0].mxu0
        %v3746 = vadd.f32 %v3553, %v3745
        %v3747 = vpop.f32.mrb[0].mxu0
        %v3748 = vadd.f32 %v3555, %v3747
        %v3749 = vpop.f32.mrb[0].mxu0
        %v3750 = vadd.f32 %v3557, %v3749
        %v3751 = vpop.f32.mrb[0].mxu0
        %v3752 = vadd.f32 %v3559, %v3751
        %3753 = vmatprep.mubr.bf16.mxu0 %v1197
        %3754 = vmatmul.mubr.bf16.gmra.mrb[0].mxu0 %v1196
        %v3755 = vpop.f32.mrb[0].mxu0
        %v3756 = vadd.f32 %v3563, %v3755
        %v3757 = vpop.f32.mrb[0].mxu0
        %v3758 = vadd.f32 %v3565, %v3757
        %v3759 = vpop.f32.mrb[0].mxu0
        %v3760 = vadd.f32 %v3567, %v3759
        %v3761 = vpop.f32.mrb[0].mxu0
        %v3762 = vadd.f32 %v3569, %v3761
        %3763 = vmatprep.mubr.bf16.mxu0 %v1204
        %3764 = vmatmul.mubr.bf16.gmra.mrb[0].mxu0 %v1203
        %v3765 = vpop.f32.mrb[0].mxu0
        %v3766 = vadd.f32 %v3573, %v3765
        %v3767 = vpop.f32.mrb[0].mxu0
        %v3768 = vadd.f32 %v3575, %v3767
        %v3769 = vpop.f32.mrb[0].mxu0
        %v3770 = vadd.f32 %v3577, %v3769
        %v3771 = vpop.f32.mrb[0].mxu0
        %v3772 = vadd.f32 %v3579, %v3771
        %3773 = vmatprep.mubr.bf16.mxu0 %v1211
        %3774 = vmatmul.mubr.bf16.gmra.mrb[0].mxu0 %v1210
        %v3775 = vpop.f32.mrb[0].mxu0
        %v3776 = vadd.f32 %v3583, %v3775
        %v3777 = vpop.f32.mrb[0].mxu0
        %v3778 = vadd.f32 %v3585, %v3777
        %v3779 = vpop.f32.mrb[0].mxu0
        %v3780 = vadd.f32 %v3587, %v3779
        %v3781 = vpop.f32.mrb[0].mxu0
        %v3782 = vadd.f32 %v3589, %v3781
        %3783 = vmatprep.mubr.bf16.mxu0 %v1218
        %3784 = vmatmul.mubr.bf16.gmra.mrb[0].mxu0 %v1217
        %v3785 = vpop.f32.mrb[0].mxu0
        %v3786 = vadd.f32 %v3593, %v3785
        %v3787 = vpop.f32.mrb[0].mxu0
        %v3788 = vadd.f32 %v3595, %v3787
        %v3789 = vpop.f32.mrb[0].mxu0
        %v3790 = vadd.f32 %v3597, %v3789
        %v3791 = vpop.f32.mrb[0].mxu0
        %v3792 = vadd.f32 %v3599, %v3791
        %3793 = vmatprep.mubr.bf16.mxu0 %v1225
        %3794 = vmatmul.mubr.bf16.gmra.mrb[0].mxu0 %v1224
        %v3795 = vpop.f32.mrb[0].mxu0
        %v3796 = vadd.f32 %v3603, %v3795
        %v3797 = vpop.f32.mrb[0].mxu0
        %v3798 = vadd.f32 %v3605, %v3797
        %v3799 = vpop.f32.mrb[0].mxu0
        %v3800 = vadd.f32 %v3607, %v3799
        %v3801 = vpop.f32.mrb[0].mxu0
        %v3802 = vadd.f32 %v3609, %v3801
        %3803 = vmatprep.mubr.bf16.mxu0 %v1232
        %3804 = vmatmul.mubr.bf16.gmra.mrb[0].mxu0 %v1231
        %v3805 = vpop.f32.mrb[0].mxu0
        %v3806 = vadd.f32 %v3613, %v3805
        %v3807 = vpop.f32.mrb[0].mxu0
        %v3808 = vadd.f32 %v3615, %v3807
        %v3809 = vpop.f32.mrb[0].mxu0
        %v3810 = vadd.f32 %v3617, %v3809
        %v3811 = vpop.f32.mrb[0].mxu0
        %v3812 = vadd.f32 %v3619, %v3811
        %3813 = vmatprep.mubr.bf16.mxu0 %v1239
        %3814 = vmatmul.mubr.bf16.gmra.mrb[0].mxu0 %v1238
        %v3815 = vpop.f32.mrb[0].mxu0
        %v3816 = vadd.f32 %v3623, %v3815
        %v3817 = vpop.f32.mrb[0].mxu0
        %v3818 = vadd.f32 %v3625, %v3817
        %v3819 = vpop.f32.mrb[0].mxu0
        %v3820 = vadd.f32 %v3627, %v3819
        %v3821 = vpop.f32.mrb[0].mxu0
        %v3822 = vadd.f32 %v3629, %v3821
        %3823 = vdwg.mxu0
        %3824 = vmatprep.subr.bf16.mxu0 %v2220
        %3825 = vmatpush1.bf16.msra.mxu0 %v2219
        %3826 = vmatprep.subr.bf16.mxu0 %v2224
        %3827 = vmatpush1.bf16.msra.mxu0 %v2223
        %3828 = vmatprep.subr.bf16.mxu0 %v2228
        %3829 = vmatpush1.bf16.msra.mxu0 %v2227
        %3830 = vmatprep.subr.bf16.mxu0 %v2232
        %3831 = vmatpush1.bf16.msra.mxu0 %v2231
        %3832 = vmatprep.subr.bf16.mxu0 %v2236
        %3833 = vmatpush1.bf16.msra.mxu0 %v2235
        %3834 = vmatprep.subr.bf16.mxu0 %v2240
        %3835 = vmatpush1.bf16.msra.mxu0 %v2239
        %3836 = vmatprep.subr.bf16.mxu0 %v2244
        %3837 = vmatpush1.bf16.msra.mxu0 %v2243
        %3838 = vmatprep.subr.bf16.mxu0 %v2248
        %3839 = vmatpush1.bf16.msra.mxu0 %v2247
        %3840 = vmatprep.subr.bf16.mxu0 0
        %3841 = vmatpush1.bf16.msra.mxu0 0
        %3842 = vmatprep.subr.bf16.mxu0 0
        %3843 = vmatpush1.bf16.msra.mxu0 0
        %3844 = vmatprep.subr.bf16.mxu0 0
        %3845 = vmatpush1.bf16.msra.mxu0 0
        %3846 = vmatprep.subr.bf16.mxu0 0
        %3847 = vmatpush1.bf16.msra.mxu0 0
        %3848 = vmatprep.subr.bf16.mxu0 0
        %3849 = vmatpush1.bf16.msra.mxu0 0
        %3850 = vmatprep.subr.bf16.mxu0 0
        %3851 = vmatpush1.bf16.msra.mxu0 0
        %3852 = vmatprep.subr.bf16.mxu0 0
        %3853 = vmatpush1.bf16.msra.mxu0 0
        %3854 = vmatprep.subr.bf16.mxu0 0
        %3855 = vmatpush1.bf16.msra.mxu0 0
        %3856 = vmatprep.mubr.bf16.mxu0 0
        %3857 = vmatmul.mubr.bf16.gmra.mrb[0].mxu0 %v1135
        %v3858 = vpop.f32.mrb[0].mxu0
        %v3859 = vadd.f32 %v3666, %v3858
        %v3860 = vpop.f32.mrb[0].mxu0
        %v3861 = vadd.f32 %v3668, %v3860
        %v3862 = vpop.f32.mrb[0].mxu0
        %v3863 = vadd.f32 %v3670, %v3862
        %v3864 = vpop.f32.mrb[0].mxu0
        %v3865 = vadd.f32 %v3672, %v3864
        %3866 = vmatprep.mubr.bf16.mxu0 0
        %3867 = vmatmul.mubr.bf16.gmra.mrb[0].mxu0 %v1142
        %v3868 = vpop.f32.mrb[0].mxu0
        %v3869 = vadd.f32 %v3676, %v3868
        %v3870 = vpop.f32.mrb[0].mxu0
        %v3871 = vadd.f32 %v3678, %v3870
        %v3872 = vpop.f32.mrb[0].mxu0
        %v3873 = vadd.f32 %v3680, %v3872
        %v3874 = vpop.f32.mrb[0].mxu0
        %v3875 = vadd.f32 %v3682, %v3874
        %3876 = vmatprep.mubr.bf16.mxu0 0
        %3877 = vmatmul.mubr.bf16.gmra.mrb[0].mxu0 %v1149
        %v3878 = vpop.f32.mrb[0].mxu0
        %v3879 = vadd.f32 %v3686, %v3878
        %v3880 = vpop.f32.mrb[0].mxu0
        %v3881 = vadd.f32 %v3688, %v3880
        %v3882 = vpop.f32.mrb[0].mxu0
        %v3883 = vadd.f32 %v3690, %v3882
        %v3884 = vpop.f32.mrb[0].mxu0
        %v3885 = vadd.f32 %v3692, %v3884
        %3886 = vmatprep.mubr.bf16.mxu0 0
        %3887 = vmatmul.mubr.bf16.gmra.mrb[0].mxu0 %v1156
        %v3888 = vpop.f32.mrb[0].mxu0
        %v3889 = vadd.f32 %v3696, %v3888
        %v3890 = vpop.f32.mrb[0].mxu0
        %v3891 = vadd.f32 %v3698, %v3890
        %v3892 = vpop.f32.mrb[0].mxu0
        %v3893 = vadd.f32 %v3700, %v3892
        %v3894 = vpop.f32.mrb[0].mxu0
        %v3895 = vadd.f32 %v3702, %v3894
        %3896 = vmatprep.mubr.bf16.mxu0 0
        %3897 = vmatmul.mubr.bf16.gmra.mrb[0].mxu0 %v1163
        %v3898 = vpop.f32.mrb[0].mxu0
        %v3899 = vadd.f32 %v3706, %v3898
        %v3900 = vpop.f32.mrb[0].mxu0
        %v3901 = vadd.f32 %v3708, %v3900
        %v3902 = vpop.f32.mrb[0].mxu0
        %v3903 = vadd.f32 %v3710, %v3902
        %v3904 = vpop.f32.mrb[0].mxu0
        %v3905 = vadd.f32 %v3712, %v3904
        %3906 = vmatprep.mubr.bf16.mxu0 0
        %3907 = vmatmul.mubr.bf16.gmra.mrb[0].mxu0 %v1170
        %v3908 = vpop.f32.mrb[0].mxu0
        %v3909 = vadd.f32 %v3716, %v3908
        %v3910 = vpop.f32.mrb[0].mxu0
        %v3911 = vadd.f32 %v3718, %v3910
        %v3912 = vpop.f32.mrb[0].mxu0
        %v3913 = vadd.f32 %v3720, %v3912
        %v3914 = vpop.f32.mrb[0].mxu0
        %v3915 = vadd.f32 %v3722, %v3914
        %3916 = vmatprep.mubr.bf16.mxu0 0
        %3917 = vmatmul.mubr.bf16.gmra.mrb[0].mxu0 %v1177
        %v3918 = vpop.f32.mrb[0].mxu0
        %v3919 = vadd.f32 %v3726, %v3918
        %v3920 = vpop.f32.mrb[0].mxu0
        %v3921 = vadd.f32 %v3728, %v3920
        %v3922 = vpop.f32.mrb[0].mxu0
        %v3923 = vadd.f32 %v3730, %v3922
        %v3924 = vpop.f32.mrb[0].mxu0
        %v3925 = vadd.f32 %v3732, %v3924
        %3926 = vmatprep.mubr.bf16.mxu0 0
        %3927 = vmatmul.mubr.bf16.gmra.mrb[0].mxu0 %v1184
        %v3928 = vpop.f32.mrb[0].mxu0
        %v3929 = vadd.f32 %v3736, %v3928
        %v3930 = vpop.f32.mrb[0].mxu0
        %v3931 = vadd.f32 %v3738, %v3930
        %v3932 = vpop.f32.mrb[0].mxu0
        %v3933 = vadd.f32 %v3740, %v3932
        %v3934 = vpop.f32.mrb[0].mxu0
        %v3935 = vadd.f32 %v3742, %v3934
        %3936 = vmatprep.mubr.bf16.mxu0 0
        %3937 = vmatmul.mubr.bf16.gmra.mrb[0].mxu0 %v1191
        %v3938 = vpop.f32.mrb[0].mxu0
        %v3939 = vadd.f32 %v3746, %v3938
        %v3940 = vpop.f32.mrb[0].mxu0
        %v3941 = vadd.f32 %v3748, %v3940
        %v3942 = vpop.f32.mrb[0].mxu0
        %v3943 = vadd.f32 %v3750, %v3942
        %v3944 = vpop.f32.mrb[0].mxu0
        %v3945 = vadd.f32 %v3752, %v3944
        %3946 = vmatprep.mubr.bf16.mxu0 0
        %3947 = vmatmul.mubr.bf16.gmra.mrb[0].mxu0 %v1198
        %v3948 = vpop.f32.mrb[0].mxu0
        %v3949 = vadd.f32 %v3756, %v3948
        %v3950 = vpop.f32.mrb[0].mxu0
        %v3951 = vadd.f32 %v3758, %v3950
        %v3952 = vpop.f32.mrb[0].mxu0
        %v3953 = vadd.f32 %v3760, %v3952
        %v3954 = vpop.f32.mrb[0].mxu0
        %v3955 = vadd.f32 %v3762, %v3954
        %3956 = vmatprep.mubr.bf16.mxu0 0
        %3957 = vmatmul.mubr.bf16.gmra.mrb[0].mxu0 %v1205
        %v3958 = vpop.f32.mrb[0].mxu0
        %v3959 = vadd.f32 %v3766, %v3958
        %v3960 = vpop.f32.mrb[0].mxu0
        %v3961 = vadd.f32 %v3768, %v3960
        %v3962 = vpop.f32.mrb[0].mxu0
        %v3963 = vadd.f32 %v3770, %v3962
        %v3964 = vpop.f32.mrb[0].mxu0
        %v3965 = vadd.f32 %v3772, %v3964
        %3966 = vmatprep.mubr.bf16.mxu0 0
        %3967 = vmatmul.mubr.bf16.gmra.mrb[0].mxu0 %v1212
        %v3968 = vpop.f32.mrb[0].mxu0
        %v3969 = vadd.f32 %v3776, %v3968
        %v3970 = vpop.f32.mrb[0].mxu0
        %v3971 = vadd.f32 %v3778, %v3970
        %v3972 = vpop.f32.mrb[0].mxu0
        %v3973 = vadd.f32 %v3780, %v3972
        %v3974 = vpop.f32.mrb[0].mxu0
        %v3975 = vadd.f32 %v3782, %v3974
        %3976 = vmatprep.mubr.bf16.mxu0 0
        %3977 = vmatmul.mubr.bf16.gmra.mrb[0].mxu0 %v1219
        %v3978 = vpop.f32.mrb[0].mxu0
        %v3979 = vadd.f32 %v3786, %v3978
        %v3980 = vpop.f32.mrb[0].mxu0
        %v3981 = vadd.f32 %v3788, %v3980
        %v3982 = vpop.f32.mrb[0].mxu0
        %v3983 = vadd.f32 %v3790, %v3982
        %v3984 = vpop.f32.mrb[0].mxu0
        %v3985 = vadd.f32 %v3792, %v3984
        %3986 = vmatprep.mubr.bf16.mxu0 0
        %3987 = vmatmul.mubr.bf16.gmra.mrb[0].mxu0 %v1226
        %v3988 = vpop.f32.mrb[0].mxu0
        %v3989 = vadd.f32 %v3796, %v3988
        %v3990 = vpop.f32.mrb[0].mxu0
        %v3991 = vadd.f32 %v3798, %v3990
        %v3992 = vpop.f32.mrb[0].mxu0
        %v3993 = vadd.f32 %v3800, %v3992
        %v3994 = vpop.f32.mrb[0].mxu0
        %v3995 = vadd.f32 %v3802, %v3994
        %3996 = vmatprep.mubr.bf16.mxu0 0
        %3997 = vmatmul.mubr.bf16.gmra.mrb[0].mxu0 %v1233
        %v3998 = vpop.f32.mrb[0].mxu0
        %v3999 = vadd.f32 %v3806, %v3998
        %v4000 = vpop.f32.mrb[0].mxu0
        %v4001 = vadd.f32 %v3808, %v4000
        %v4002 = vpop.f32.mrb[0].mxu0
        %v4003 = vadd.f32 %v3810, %v4002
        %v4004 = vpop.f32.mrb[0].mxu0
        %v4005 = vadd.f32 %v3812, %v4004
        %4006 = vmatprep.mubr.bf16.mxu0 0
        %4007 = vmatmul.mubr.bf16.gmra.mrb[0].mxu0 %v1240
        %v4008 = vpop.f32.mrb[0].mxu0
        %v4009 = vadd.f32 %v3816, %v4008
        %v4010 = vpop.f32.mrb[0].mxu0
        %v4011 = vadd.f32 %v3818, %v4010
        %v4012 = vpop.f32.mrb[0].mxu0
        %v4013 = vadd.f32 %v3820, %v4012
        %v4014 = vpop.f32.mrb[0].mxu0
        %v4015 = vadd.f32 %v3822, %v4014
        %4016 = vdwg.mxu0
        %vm4017 = vcmp.gt.f32.partialorder %v3087, 0.0
        %vm4018 = vcmp.gt.f32.partialorder %v3089, 0.0
        %vm4019 = vcmp.gt.f32.partialorder %v3859, 0.0
        %vm4020 = vcmp.gt.f32.partialorder %v3861, 0.0
        %vm4021 = vcmp.gt.f32.partialorder %v3091, 0.0
        %vm4022 = vcmp.gt.f32.partialorder %v3093, 0.0
        %vm4023 = vcmp.gt.f32.partialorder %v3863, 0.0
        %vm4024 = vcmp.gt.f32.partialorder %v3865, 0.0
        %vm4025 = vcmp.gt.f32.partialorder %v3097, 0.0
        %vm4026 = vcmp.gt.f32.partialorder %v3099, 0.0
        %vm4027 = vcmp.gt.f32.partialorder %v3869, 0.0
        %vm4028 = vcmp.gt.f32.partialorder %v3871, 0.0
        %vm4029 = vcmp.gt.f32.partialorder %v3101, 0.0
        %vm4030 = vcmp.gt.f32.partialorder %v3103, 0.0
        %vm4031 = vcmp.gt.f32.partialorder %v3873, 0.0
        %vm4032 = vcmp.gt.f32.partialorder %v3875, 0.0
        %vm4033 = vcmp.gt.f32.partialorder %v3107, 0.0
        %vm4034 = vcmp.gt.f32.partialorder %v3109, 0.0
        %vm4035 = vcmp.gt.f32.partialorder %v3879, 0.0
        %vm4036 = vcmp.gt.f32.partialorder %v3881, 0.0
        %vm4037 = vcmp.gt.f32.partialorder %v3111, 0.0
        %vm4038 = vcmp.gt.f32.partialorder %v3113, 0.0
        %vm4039 = vcmp.gt.f32.partialorder %v3883, 0.0
        %vm4040 = vcmp.gt.f32.partialorder %v3885, 0.0
        %vm4041 = vcmp.gt.f32.partialorder %v3117, 0.0
        %vm4042 = vcmp.gt.f32.partialorder %v3119, 0.0
        %vm4043 = vcmp.gt.f32.partialorder %v3889, 0.0
        %vm4044 = vcmp.gt.f32.partialorder %v3891, 0.0
        %vm4045 = vcmp.gt.f32.partialorder %v3121, 0.0
        %vm4046 = vcmp.gt.f32.partialorder %v3123, 0.0
        %vm4047 = vcmp.gt.f32.partialorder %v3893, 0.0
        %vm4048 = vcmp.gt.f32.partialorder %v3895, 0.0
        %vm4049 = vcmp.gt.f32.partialorder %v3127, 0.0
        %vm4050 = vcmp.gt.f32.partialorder %v3129, 0.0
        %vm4051 = vcmp.gt.f32.partialorder %v3899, 0.0
        %vm4052 = vcmp.gt.f32.partialorder %v3901, 0.0
        %vm4053 = vcmp.gt.f32.partialorder %v3131, 0.0
        %vm4054 = vcmp.gt.f32.partialorder %v3133, 0.0
        %vm4055 = vcmp.gt.f32.partialorder %v3903, 0.0
        %vm4056 = vcmp.gt.f32.partialorder %v3905, 0.0
        %vm4057 = vcmp.gt.f32.partialorder %v3137, 0.0
        %vm4058 = vcmp.gt.f32.partialorder %v3139, 0.0
        %vm4059 = vcmp.gt.f32.partialorder %v3909, 0.0
        %vm4060 = vcmp.gt.f32.partialorder %v3911, 0.0
        %vm4061 = vcmp.gt.f32.partialorder %v3141, 0.0
        %vm4062 = vcmp.gt.f32.partialorder %v3143, 0.0
        %vm4063 = vcmp.gt.f32.partialorder %v3913, 0.0
        %vm4064 = vcmp.gt.f32.partialorder %v3915, 0.0
        %vm4065 = vcmp.gt.f32.partialorder %v3147, 0.0
        %vm4066 = vcmp.gt.f32.partialorder %v3149, 0.0
        %vm4067 = vcmp.gt.f32.partialorder %v3919, 0.0
        %vm4068 = vcmp.gt.f32.partialorder %v3921, 0.0
        %vm4069 = vcmp.gt.f32.partialorder %v3151, 0.0
        %vm4070 = vcmp.gt.f32.partialorder %v3153, 0.0
        %vm4071 = vcmp.gt.f32.partialorder %v3923, 0.0
        %vm4072 = vcmp.gt.f32.partialorder %v3925, 0.0
        %vm4073 = vcmp.gt.f32.partialorder %v3157, 0.0
        %vm4074 = vcmp.gt.f32.partialorder %v3159, 0.0
        %vm4075 = vcmp.gt.f32.partialorder %v3929, 0.0
        %vm4076 = vcmp.gt.f32.partialorder %v3931, 0.0
        %vm4077 = vcmp.gt.f32.partialorder %v3161, 0.0
        %vm4078 = vcmp.gt.f32.partialorder %v3163, 0.0
        %vm4079 = vcmp.gt.f32.partialorder %v3933, 0.0
        %vm4080 = vcmp.gt.f32.partialorder %v3935, 0.0
        %vm4081 = vcmp.gt.f32.partialorder %v3167, 0.0
        %vm4082 = vcmp.gt.f32.partialorder %v3169, 0.0
        %vm4083 = vcmp.gt.f32.partialorder %v3939, 0.0
        %vm4084 = vcmp.gt.f32.partialorder %v3941, 0.0
        %vm4085 = vcmp.gt.f32.partialorder %v3171, 0.0
        %vm4086 = vcmp.gt.f32.partialorder %v3173, 0.0
        %vm4087 = vcmp.gt.f32.partialorder %v3943, 0.0
        %vm4088 = vcmp.gt.f32.partialorder %v3945, 0.0
        %vm4089 = vcmp.gt.f32.partialorder %v3177, 0.0
        %vm4090 = vcmp.gt.f32.partialorder %v3179, 0.0
        %vm4091 = vcmp.gt.f32.partialorder %v3949, 0.0
        %vm4092 = vcmp.gt.f32.partialorder %v3951, 0.0
        %vm4093 = vcmp.gt.f32.partialorder %v3181, 0.0
        %vm4094 = vcmp.gt.f32.partialorder %v3183, 0.0
        %vm4095 = vcmp.gt.f32.partialorder %v3953, 0.0
        %vm4096 = vcmp.gt.f32.partialorder %v3955, 0.0
        %vm4097 = vcmp.gt.f32.partialorder %v3187, 0.0
        %vm4098 = vcmp.gt.f32.partialorder %v3189, 0.0
        %vm4099 = vcmp.gt.f32.partialorder %v3959, 0.0
        %vm4100 = vcmp.gt.f32.partialorder %v3961, 0.0
        %vm4101 = vcmp.gt.f32.partialorder %v3191, 0.0
        %vm4102 = vcmp.gt.f32.partialorder %v3193, 0.0
        %vm4103 = vcmp.gt.f32.partialorder %v3963, 0.0
        %vm4104 = vcmp.gt.f32.partialorder %v3965, 0.0
        %vm4105 = vcmp.gt.f32.partialorder %v3197, 0.0
        %vm4106 = vcmp.gt.f32.partialorder %v3199, 0.0
        %vm4107 = vcmp.gt.f32.partialorder %v3969, 0.0
        %vm4108 = vcmp.gt.f32.partialorder %v3971, 0.0
        %vm4109 = vcmp.gt.f32.partialorder %v3201, 0.0
        %vm4110 = vcmp.gt.f32.partialorder %v3203, 0.0
        %vm4111 = vcmp.gt.f32.partialorder %v3973, 0.0
        %vm4112 = vcmp.gt.f32.partialorder %v3975, 0.0
        %vm4113 = vcmp.gt.f32.partialorder %v3207, 0.0
        %vm4114 = vcmp.gt.f32.partialorder %v3209, 0.0
        %vm4115 = vcmp.gt.f32.partialorder %v3979, 0.0
        %vm4116 = vcmp.gt.f32.partialorder %v3981, 0.0
        %vm4117 = vcmp.gt.f32.partialorder %v3211, 0.0
        %vm4118 = vcmp.gt.f32.partialorder %v3213, 0.0
        %vm4119 = vcmp.gt.f32.partialorder %v3983, 0.0
        %vm4120 = vcmp.gt.f32.partialorder %v3985, 0.0
        %vm4121 = vcmp.gt.f32.partialorder %v3217, 0.0
        %vm4122 = vcmp.gt.f32.partialorder %v3219, 0.0
        %vm4123 = vcmp.gt.f32.partialorder %v3989, 0.0
        %vm4124 = vcmp.gt.f32.partialorder %v3991, 0.0
        %vm4125 = vcmp.gt.f32.partialorder %v3221, 0.0
        %vm4126 = vcmp.gt.f32.partialorder %v3223, 0.0
        %vm4127 = vcmp.gt.f32.partialorder %v3993, 0.0
        %vm4128 = vcmp.gt.f32.partialorder %v3995, 0.0
        %vm4129 = vcmp.gt.f32.partialorder %v3227, 0.0
        %vm4130 = vcmp.gt.f32.partialorder %v3229, 0.0
        %vm4131 = vcmp.gt.f32.partialorder %v3999, 0.0
        %vm4132 = vcmp.gt.f32.partialorder %v4001, 0.0
        %vm4133 = vcmp.gt.f32.partialorder %v3231, 0.0
        %vm4134 = vcmp.gt.f32.partialorder %v3233, 0.0
        %vm4135 = vcmp.gt.f32.partialorder %v4003, 0.0
        %vm4136 = vcmp.gt.f32.partialorder %v4005, 0.0
        %vm4137 = vcmp.gt.f32.partialorder %v3237, 0.0
        %vm4138 = vcmp.gt.f32.partialorder %v3239, 0.0
        %vm4139 = vcmp.gt.f32.partialorder %v4009, 0.0
        %vm4140 = vcmp.gt.f32.partialorder %v4011, 0.0
        %vm4141 = vcmp.gt.f32.partialorder %v3241, 0.0
        %vm4142 = vcmp.gt.f32.partialorder %v3243, 0.0
        %vm4143 = vcmp.gt.f32.partialorder %v4013, 0.0
        %vm4144 = vcmp.gt.f32.partialorder %v4015, 0.0
        %v4145 = vmul.f32 %v3087, 0.2
        %v4146 = vmul.f32 %v3089, 0.2
        %v4147 = vmul.f32 %v3859, 0.2
        %v4148 = vmul.f32 %v3861, 0.2
        %v4149 = vmul.f32 %v3091, 0.2
        %v4150 = vmul.f32 %v3093, 0.2
        %v4151 = vmul.f32 %v3863, 0.2
        %v4152 = vmul.f32 %v3865, 0.2
        %v4153 = vmul.f32 %v3097, 0.2
        %v4154 = vmul.f32 %v3099, 0.2
        %v4155 = vmul.f32 %v3869, 0.2
        %v4156 = vmul.f32 %v3871, 0.2
        %v4157 = vmul.f32 %v3101, 0.2
        %v4158 = vmul.f32 %v3103, 0.2
        %v4159 = vmul.f32 %v3873, 0.2
        %v4160 = vmul.f32 %v3875, 0.2
        %v4161 = vmul.f32 %v3107, 0.2
        %v4162 = vmul.f32 %v3109, 0.2
        %v4163 = vmul.f32 %v3879, 0.2
        %v4164 = vmul.f32 %v3881, 0.2
        %v4165 = vmul.f32 %v3111, 0.2
        %v4166 = vmul.f32 %v3113, 0.2
        %v4167 = vmul.f32 %v3883, 0.2
        %v4168 = vmul.f32 %v3885, 0.2
        %v4169 = vmul.f32 %v3117, 0.2
        %v4170 = vmul.f32 %v3119, 0.2
        %v4171 = vmul.f32 %v3889, 0.2
        %v4172 = vmul.f32 %v3891, 0.2
        %v4173 = vmul.f32 %v3121, 0.2
        %v4174 = vmul.f32 %v3123, 0.2
        %v4175 = vmul.f32 %v3893, 0.2
        %v4176 = vmul.f32 %v3895, 0.2
        %v4177 = vmul.f32 %v3127, 0.2
        %v4178 = vmul.f32 %v3129, 0.2
        %v4179 = vmul.f32 %v3899, 0.2
        %v4180 = vmul.f32 %v3901, 0.2
        %v4181 = vmul.f32 %v3131, 0.2
        %v4182 = vmul.f32 %v3133, 0.2
        %v4183 = vmul.f32 %v3903, 0.2
        %v4184 = vmul.f32 %v3905, 0.2
        %v4185 = vmul.f32 %v3137, 0.2
        %v4186 = vmul.f32 %v3139, 0.2
        %v4187 = vmul.f32 %v3909, 0.2
        %v4188 = vmul.f32 %v3911, 0.2
        %v4189 = vmul.f32 %v3141, 0.2
        %v4190 = vmul.f32 %v3143, 0.2
        %v4191 = vmul.f32 %v3913, 0.2
        %v4192 = vmul.f32 %v3915, 0.2
        %v4193 = vmul.f32 %v3147, 0.2
        %v4194 = vmul.f32 %v3149, 0.2
        %v4195 = vmul.f32 %v3919, 0.2
        %v4196 = vmul.f32 %v3921, 0.2
        %v4197 = vmul.f32 %v3151, 0.2
        %v4198 = vmul.f32 %v3153, 0.2
        %v4199 = vmul.f32 %v3923, 0.2
        %v4200 = vmul.f32 %v3925, 0.2
        %v4201 = vmul.f32 %v3157, 0.2
        %v4202 = vmul.f32 %v3159, 0.2
        %v4203 = vmul.f32 %v3929, 0.2
        %v4204 = vmul.f32 %v3931, 0.2
        %v4205 = vmul.f32 %v3161, 0.2
        %v4206 = vmul.f32 %v3163, 0.2
        %v4207 = vmul.f32 %v3933, 0.2
        %v4208 = vmul.f32 %v3935, 0.2
        %v4209 = vmul.f32 %v3167, 0.2
        %v4210 = vmul.f32 %v3169, 0.2
        %v4211 = vmul.f32 %v3939, 0.2
        %v4212 = vmul.f32 %v3941, 0.2
        %v4213 = vmul.f32 %v3171, 0.2
        %v4214 = vmul.f32 %v3173, 0.2
        %v4215 = vmul.f32 %v3943, 0.2
        %v4216 = vmul.f32 %v3945, 0.2
        %v4217 = vmul.f32 %v3177, 0.2
        %v4218 = vmul.f32 %v3179, 0.2
        %v4219 = vmul.f32 %v3949, 0.2
        %v4220 = vmul.f32 %v3951, 0.2
        %v4221 = vmul.f32 %v3181, 0.2
        %v4222 = vmul.f32 %v3183, 0.2
        %v4223 = vmul.f32 %v3953, 0.2
        %v4224 = vmul.f32 %v3955, 0.2
        %v4225 = vmul.f32 %v3187, 0.2
        %v4226 = vmul.f32 %v3189, 0.2
        %v4227 = vmul.f32 %v3959, 0.2
        %v4228 = vmul.f32 %v3961, 0.2
        %v4229 = vmul.f32 %v3191, 0.2
        %v4230 = vmul.f32 %v3193, 0.2
        %v4231 = vmul.f32 %v3963, 0.2
        %v4232 = vmul.f32 %v3965, 0.2
        %v4233 = vmul.f32 %v3197, 0.2
        %v4234 = vmul.f32 %v3199, 0.2
        %v4235 = vmul.f32 %v3969, 0.2
        %v4236 = vmul.f32 %v3971, 0.2
        %v4237 = vmul.f32 %v3201, 0.2
        %v4238 = vmul.f32 %v3203, 0.2
        %v4239 = vmul.f32 %v3973, 0.2
        %v4240 = vmul.f32 %v3975, 0.2
        %v4241 = vmul.f32 %v3207, 0.2
        %v4242 = vmul.f32 %v3209, 0.2
        %v4243 = vmul.f32 %v3979, 0.2
        %v4244 = vmul.f32 %v3981, 0.2
        %v4245 = vmul.f32 %v3211, 0.2
        %v4246 = vmul.f32 %v3213, 0.2
        %v4247 = vmul.f32 %v3983, 0.2
        %v4248 = vmul.f32 %v3985, 0.2
        %v4249 = vmul.f32 %v3217, 0.2
        %v4250 = vmul.f32 %v3219, 0.2
        %v4251 = vmul.f32 %v3989, 0.2
        %v4252 = vmul.f32 %v3991, 0.2
        %v4253 = vmul.f32 %v3221, 0.2
        %v4254 = vmul.f32 %v3223, 0.2
        %v4255 = vmul.f32 %v3993, 0.2
        %v4256 = vmul.f32 %v3995, 0.2
        %v4257 = vmul.f32 %v3227, 0.2
        %v4258 = vmul.f32 %v3229, 0.2
        %v4259 = vmul.f32 %v3999, 0.2
        %v4260 = vmul.f32 %v4001, 0.2
        %v4261 = vmul.f32 %v3231, 0.2
        %v4262 = vmul.f32 %v3233, 0.2
        %v4263 = vmul.f32 %v4003, 0.2
        %v4264 = vmul.f32 %v4005, 0.2
        %v4265 = vmul.f32 %v3237, 0.2
        %v4266 = vmul.f32 %v3239, 0.2
        %v4267 = vmul.f32 %v4009, 0.2
        %v4268 = vmul.f32 %v4011, 0.2
        %v4269 = vmul.f32 %v3241, 0.2
        %v4270 = vmul.f32 %v3243, 0.2
        %v4271 = vmul.f32 %v4013, 0.2
        %v4272 = vmul.f32 %v4015, 0.2
        %v4273 = vsel %vm4017, %v3087, %v4145
        %v4274 = vsel %vm4018, %v3089, %v4146
        %v4275 = vsel %vm4019, %v3859, %v4147
        %v4276 = vsel %vm4020, %v3861, %v4148
        %v4277 = vsel %vm4021, %v3091, %v4149
        %v4278 = vsel %vm4022, %v3093, %v4150
        %v4279 = vsel %vm4023, %v3863, %v4151
        %v4280 = vsel %vm4024, %v3865, %v4152
        %v4281 = vsel %vm4025, %v3097, %v4153
        %v4282 = vsel %vm4026, %v3099, %v4154
        %v4283 = vsel %vm4027, %v3869, %v4155
        %v4284 = vsel %vm4028, %v3871, %v4156
        %v4285 = vsel %vm4029, %v3101, %v4157
        %v4286 = vsel %vm4030, %v3103, %v4158
        %v4287 = vsel %vm4031, %v3873, %v4159
        %v4288 = vsel %vm4032, %v3875, %v4160
        %v4289 = vsel %vm4033, %v3107, %v4161
        %v4290 = vsel %vm4034, %v3109, %v4162
        %v4291 = vsel %vm4035, %v3879, %v4163
        %v4292 = vsel %vm4036, %v3881, %v4164
        %v4293 = vsel %vm4037, %v3111, %v4165
        %v4294 = vsel %vm4038, %v3113, %v4166
        %v4295 = vsel %vm4039, %v3883, %v4167
        %v4296 = vsel %vm4040, %v3885, %v4168
        %v4297 = vsel %vm4041, %v3117, %v4169
        %v4298 = vsel %vm4042, %v3119, %v4170
        %v4299 = vsel %vm4043, %v3889, %v4171
        %v4300 = vsel %vm4044, %v3891, %v4172
        %v4301 = vsel %vm4045, %v3121, %v4173
        %v4302 = vsel %vm4046, %v3123, %v4174
        %v4303 = vsel %vm4047, %v3893, %v4175
        %v4304 = vsel %vm4048, %v3895, %v4176
        %v4305 = vsel %vm4049, %v3127, %v4177
        %v4306 = vsel %vm4050, %v3129, %v4178
        %v4307 = vsel %vm4051, %v3899, %v4179
        %v4308 = vsel %vm4052, %v3901, %v4180
        %v4309 = vsel %vm4053, %v3131, %v4181
        %v4310 = vsel %vm4054, %v3133, %v4182
        %v4311 = vsel %vm4055, %v3903, %v4183
        %v4312 = vsel %vm4056, %v3905, %v4184
        %v4313 = vsel %vm4057, %v3137, %v4185
        %v4314 = vsel %vm4058, %v3139, %v4186
        %v4315 = vsel %vm4059, %v3909, %v4187
        %v4316 = vsel %vm4060, %v3911, %v4188
        %v4317 = vsel %vm4061, %v3141, %v4189
        %v4318 = vsel %vm4062, %v3143, %v4190
        %v4319 = vsel %vm4063, %v3913, %v4191
        %v4320 = vsel %vm4064, %v3915, %v4192
        %v4321 = vsel %vm4065, %v3147, %v4193
        %v4322 = vsel %vm4066, %v3149, %v4194
        %v4323 = vsel %vm4067, %v3919, %v4195
        %v4324 = vsel %vm4068, %v3921, %v4196
        %v4325 = vsel %vm4069, %v3151, %v4197
        %v4326 = vsel %vm4070, %v3153, %v4198
        %v4327 = vsel %vm4071, %v3923, %v4199
        %v4328 = vsel %vm4072, %v3925, %v4200
        %v4329 = vsel %vm4073, %v3157, %v4201
        %v4330 = vsel %vm4074, %v3159, %v4202
        %v4331 = vsel %vm4075, %v3929, %v4203
        %v4332 = vsel %vm4076, %v3931, %v4204
        %v4333 = vsel %vm4077, %v3161, %v4205
        %v4334 = vsel %vm4078, %v3163, %v4206
        %v4335 = vsel %vm4079, %v3933, %v4207
        %v4336 = vsel %vm4080, %v3935, %v4208
        %v4337 = vsel %vm4081, %v3167, %v4209
        %v4338 = vsel %vm4082, %v3169, %v4210
        %v4339 = vsel %vm4083, %v3939, %v4211
        %v4340 = vsel %vm4084, %v3941, %v4212
        %v4341 = vsel %vm4085, %v3171, %v4213
        %v4342 = vsel %vm4086, %v3173, %v4214
        %v4343 = vsel %vm4087, %v3943, %v4215
        %v4344 = vsel %vm4088, %v3945, %v4216
        %v4345 = vsel %vm4089, %v3177, %v4217
        %v4346 = vsel %vm4090, %v3179, %v4218
        %v4347 = vsel %vm4091, %v3949, %v4219
        %v4348 = vsel %vm4092, %v3951, %v4220
        %v4349 = vsel %vm4093, %v3181, %v4221
        %v4350 = vsel %vm4094, %v3183, %v4222
        %v4351 = vsel %vm4095, %v3953, %v4223
        %v4352 = vsel %vm4096, %v3955, %v4224
        %v4353 = vsel %vm4097, %v3187, %v4225
        %v4354 = vsel %vm4098, %v3189, %v4226
        %v4355 = vsel %vm4099, %v3959, %v4227
        %v4356 = vsel %vm4100, %v3961, %v4228
        %v4357 = vsel %vm4101, %v3191, %v4229
        %v4358 = vsel %vm4102, %v3193, %v4230
        %v4359 = vsel %vm4103, %v3963, %v4231
        %v4360 = vsel %vm4104, %v3965, %v4232
        %v4361 = vsel %vm4105, %v3197, %v4233
        %v4362 = vsel %vm4106, %v3199, %v4234
        %v4363 = vsel %vm4107, %v3969, %v4235
        %v4364 = vsel %vm4108, %v3971, %v4236
        %v4365 = vsel %vm4109, %v3201, %v4237
        %v4366 = vsel %vm4110, %v3203, %v4238
        %v4367 = vsel %vm4111, %v3973, %v4239
        %v4368 = vsel %vm4112, %v3975, %v4240
        %v4369 = vsel %vm4113, %v3207, %v4241
        %v4370 = vsel %vm4114, %v3209, %v4242
        %v4371 = vsel %vm4115, %v3979, %v4243
        %v4372 = vsel %vm4116, %v3981, %v4244
        %v4373 = vsel %vm4117, %v3211, %v4245
        %v4374 = vsel %vm4118, %v3213, %v4246
        %v4375 = vsel %vm4119, %v3983, %v4247
        %v4376 = vsel %vm4120, %v3985, %v4248
        %v4377 = vsel %vm4121, %v3217, %v4249
        %v4378 = vsel %vm4122, %v3219, %v4250
        %v4379 = vsel %vm4123, %v3989, %v4251
        %v4380 = vsel %vm4124, %v3991, %v4252
        %v4381 = vsel %vm4125, %v3221, %v4253
        %v4382 = vsel %vm4126, %v3223, %v4254
        %v4383 = vsel %vm4127, %v3993, %v4255
        %v4384 = vsel %vm4128, %v3995, %v4256
        %v4385 = vsel %vm4129, %v3227, %v4257
        %v4386 = vsel %vm4130, %v3229, %v4258
        %v4387 = vsel %vm4131, %v3999, %v4259
        %v4388 = vsel %vm4132, %v4001, %v4260
        %v4389 = vsel %vm4133, %v3231, %v4261
        %v4390 = vsel %vm4134, %v3233, %v4262
        %v4391 = vsel %vm4135, %v4003, %v4263
        %v4392 = vsel %vm4136, %v4005, %v4264
        %v4393 = vsel %vm4137, %v3237, %v4265
        %v4394 = vsel %vm4138, %v3239, %v4266
        %v4395 = vsel %vm4139, %v4009, %v4267
        %v4396 = vsel %vm4140, %v4011, %v4268
        %v4397 = vsel %vm4141, %v3241, %v4269
        %v4398 = vsel %vm4142, %v3243, %v4270
        %v4399 = vsel %vm4143, %v4013, %v4271
        %v4400 = vsel %vm4144, %v4015, %v4272
        %v4401 = vpack.c.bf16 %v4277, %v4273
        %v4402 = vpack.c.bf16 %v4278, %v4274
        %v4403 = vpack.c.bf16 %v4279, %v4275
        %v4404 = vpack.c.bf16 %v4280, %v4276
        %v4405 = vpack.c.bf16 %v4285, %v4281
        %v4406 = vpack.c.bf16 %v4286, %v4282
        %v4407 = vpack.c.bf16 %v4287, %v4283
        %v4408 = vpack.c.bf16 %v4288, %v4284
        %v4409 = vpack.c.bf16 %v4293, %v4289
        %v4410 = vpack.c.bf16 %v4294, %v4290
        %v4411 = vpack.c.bf16 %v4295, %v4291
        %v4412 = vpack.c.bf16 %v4296, %v4292
        %v4413 = vpack.c.bf16 %v4301, %v4297
        %v4414 = vpack.c.bf16 %v4302, %v4298
        %v4415 = vpack.c.bf16 %v4303, %v4299
        %v4416 = vpack.c.bf16 %v4304, %v4300
        %v4417 = vpack.c.bf16 %v4309, %v4305
        %v4418 = vpack.c.bf16 %v4310, %v4306
        %v4419 = vpack.c.bf16 %v4311, %v4307
        %v4420 = vpack.c.bf16 %v4312, %v4308
        %v4421 = vpack.c.bf16 %v4317, %v4313
        %v4422 = vpack.c.bf16 %v4318, %v4314
        %v4423 = vpack.c.bf16 %v4319, %v4315
        %v4424 = vpack.c.bf16 %v4320, %v4316
        %v4425 = vpack.c.bf16 %v4325, %v4321
        %v4426 = vpack.c.bf16 %v4326, %v4322
        %v4427 = vpack.c.bf16 %v4327, %v4323
        %v4428 = vpack.c.bf16 %v4328, %v4324
        %v4429 = vpack.c.bf16 %v4333, %v4329
        %v4430 = vpack.c.bf16 %v4334, %v4330
        %v4431 = vpack.c.bf16 %v4335, %v4331
        %v4432 = vpack.c.bf16 %v4336, %v4332
        %v4433 = vpack.c.bf16 %v4341, %v4337
        %v4434 = vpack.c.bf16 %v4342, %v4338
        %v4435 = vpack.c.bf16 %v4343, %v4339
        %v4436 = vpack.c.bf16 %v4344, %v4340
        %v4437 = vpack.c.bf16 %v4349, %v4345
        %v4438 = vpack.c.bf16 %v4350, %v4346
        %v4439 = vpack.c.bf16 %v4351, %v4347
        %v4440 = vpack.c.bf16 %v4352, %v4348
        %v4441 = vpack.c.bf16 %v4357, %v4353
        %v4442 = vpack.c.bf16 %v4358, %v4354
        %v4443 = vpack.c.bf16 %v4359, %v4355
        %v4444 = vpack.c.bf16 %v4360, %v4356
        %v4445 = vpack.c.bf16 %v4365, %v4361
        %v4446 = vpack.c.bf16 %v4366, %v4362
        %v4447 = vpack.c.bf16 %v4367, %v4363
        %v4448 = vpack.c.bf16 %v4368, %v4364
        %v4449 = vpack.c.bf16 %v4373, %v4369
        %v4450 = vpack.c.bf16 %v4374, %v4370
        %v4451 = vpack.c.bf16 %v4375, %v4371
        %v4452 = vpack.c.bf16 %v4376, %v4372
        %v4453 = vpack.c.bf16 %v4381, %v4377
        %v4454 = vpack.c.bf16 %v4382, %v4378
        %v4455 = vpack.c.bf16 %v4383, %v4379
        %v4456 = vpack.c.bf16 %v4384, %v4380
        %v4457 = vpack.c.bf16 %v4389, %v4385
        %v4458 = vpack.c.bf16 %v4390, %v4386
        %v4459 = vpack.c.bf16 %v4391, %v4387
        %v4460 = vpack.c.bf16 %v4392, %v4388
        %v4461 = vpack.c.bf16 %v4397, %v4393
        %v4462 = vpack.c.bf16 %v4398, %v4394
        %v4463 = vpack.c.bf16 %v4399, %v4395
        %v4464 = vpack.c.bf16 %v4400, %v4396
        %v4465 = vld [vmem:[#allocation7] sm:$0xff]
        %v4466 = vld [vmem:[#allocation7 + $0x8] sm:$0xff]
        %v4467 = vld [vmem:[#allocation7 + $0x10] sm:$0xff]
        %v4468 = vld [vmem:[#allocation7 + $0x18] sm:$0xff]
        %v4469 = vld [vmem:[#allocation7 + $0x20] sm:$0xff]
        %v4470 = vld [vmem:[#allocation7 + $0x28] sm:$0xff]
        %v4471 = vld [vmem:[#allocation7 + $0x30] sm:$0xff]
        %v4472 = vld [vmem:[#allocation7 + $0x38] sm:$0xff]
        %v4473 = vld [vmem:[#allocation7 + $0x40] sm:$0xff]
        %v4474 = vld [vmem:[#allocation7 + $0x48] sm:$0xff]
        %v4475 = vld [vmem:[#allocation7 + $0x50] sm:$0xff]
        %v4476 = vld [vmem:[#allocation7 + $0x58] sm:$0xff]
        %v4477 = vld [vmem:[#allocation7 + $0x60] sm:$0xff]
        %v4478 = vld [vmem:[#allocation7 + $0x68] sm:$0xff]
        %v4479 = vld [vmem:[#allocation7 + $0x70] sm:$0xff]
        %v4480 = vld [vmem:[#allocation7 + $0x78] sm:$0xff]
        %v4481 = vld [vmem:[#allocation7 + $0x80] sm:$0xff]
        %v4482 = vld [vmem:[#allocation7 + $0x88] sm:$0xff]
        %v4483 = vld [vmem:[#allocation7 + $0x90] sm:$0xff]
        %v4484 = vld [vmem:[#allocation7 + $0x98] sm:$0xff]
        %v4485 = vld [vmem:[#allocation7 + $0xa0] sm:$0xff]
        %v4486 = vld [vmem:[#allocation7 + $0xa8] sm:$0xff]
        %v4487 = vld [vmem:[#allocation7 + $0xb0] sm:$0xff]
        %v4488 = vld [vmem:[#allocation7 + $0xb8] sm:$0xff]
        %v4489 = vld [vmem:[#allocation7 + $0xc0] sm:$0xff]
        %v4490 = vld [vmem:[#allocation7 + $0xc8] sm:$0xff]
        %v4491 = vld [vmem:[#allocation7 + $0xd0] sm:$0xff]
        %v4492 = vld [vmem:[#allocation7 + $0xd8] sm:$0xff]
        %v4493 = vld [vmem:[#allocation7 + $0xe0] sm:$0xff]
        %v4494 = vld [vmem:[#allocation7 + $0xe8] sm:$0xff]
        %v4495 = vld [vmem:[#allocation7 + $0xf0] sm:$0xff]
        %v4496 = vld [vmem:[#allocation7 + $0xf8] sm:$0xff]
        %v4497 = vld [vmem:[#allocation7 + $0x100] sm:$0xff]
        %v4498 = vld [vmem:[#allocation7 + $0x108] sm:$0xff]
        %v4499 = vld [vmem:[#allocation7 + $0x110] sm:$0xff]
        %v4500 = vld [vmem:[#allocation7 + $0x118] sm:$0xff]
        %v4501 = vld [vmem:[#allocation7 + $0x120] sm:$0xff]
        %v4502 = vld [vmem:[#allocation7 + $0x128] sm:$0xff]
        %v4503 = vld [vmem:[#allocation7 + $0x130] sm:$0xff]
        %v4504 = vld [vmem:[#allocation7 + $0x138] sm:$0xff]
        %v4505 = vld [vmem:[#allocation7 + $0x140] sm:$0xff]
        %v4506 = vld [vmem:[#allocation7 + $0x148] sm:$0xff]
        %v4507 = vld [vmem:[#allocation7 + $0x150] sm:$0xff]
        %v4508 = vld [vmem:[#allocation7 + $0x158] sm:$0xff]
        %v4509 = vld [vmem:[#allocation7 + $0x160] sm:$0xff]
        %v4510 = vld [vmem:[#allocation7 + $0x168] sm:$0xff]
        %v4511 = vld [vmem:[#allocation7 + $0x170] sm:$0xff]
        %v4512 = vld [vmem:[#allocation7 + $0x178] sm:$0xff]
        %v4513 = vld [vmem:[#allocation7 + $0x180] sm:$0xff]
        %v4514 = vld [vmem:[#allocation7 + $0x188] sm:$0xff]
        %v4515 = vld [vmem:[#allocation7 + $0x190] sm:$0xff]
        %v4516 = vld [vmem:[#allocation7 + $0x198] sm:$0xff]
        %v4517 = vld [vmem:[#allocation7 + $0x1a0] sm:$0xff]
        %v4518 = vld [vmem:[#allocation7 + $0x1a8] sm:$0xff]
        %v4519 = vld [vmem:[#allocation7 + $0x1b0] sm:$0xff]
        %v4520 = vld [vmem:[#allocation7 + $0x1b8] sm:$0xff]
        %v4521 = vld [vmem:[#allocation7 + $0x1c0] sm:$0xff]
        %v4522 = vld [vmem:[#allocation7 + $0x1c8] sm:$0xff]
        %v4523 = vld [vmem:[#allocation7 + $0x1d0] sm:$0xff]
        %v4524 = vld [vmem:[#allocation7 + $0x1d8] sm:$0xff]
        %v4525 = vld [vmem:[#allocation7 + $0x1e0] sm:$0xff]
        %v4526 = vld [vmem:[#allocation7 + $0x1e8] sm:$0xff]
        %v4527 = vld [vmem:[#allocation7 + $0x1f0] sm:$0xff]
        %v4528 = vld [vmem:[#allocation7 + $0x1f8] sm:$0xff]
        %v4529 = vld [vmem:[%s4] sm:$0x3]
        %v4531 = vlaneseq
        %v4532 = vshrl.u32 %v4531, 7
        %v4533 = vsub.s32 0, %v4532
        %v4534 = vrot.slane %v4529, %v4533
        %v4535 = vlaneseq
        %v4536 = vshrl.u32 %v4535, 7
        %v4537 = vsub.s32 1, %v4536
        %v4538 = vrot.slane %v4529, %v4537
        %v4605 = vunpack.c.l.b16 %v4465
        %v4606 = vunpack.c.h.b16 %v4465
        %v4607 = vunpack.c.l.b16 %v4466
        %v4608 = vunpack.c.h.b16 %v4466
        %v4609 = vunpack.c.l.b16 %v4467
        %v4610 = vunpack.c.h.b16 %v4467
        %v4611 = vunpack.c.l.b16 %v4468
        %v4612 = vunpack.c.h.b16 %v4468
        %v4613 = vunpack.c.l.b16 %v4469
        %v4614 = vunpack.c.h.b16 %v4469
        %v4615 = vunpack.c.l.b16 %v4470
        %v4616 = vunpack.c.h.b16 %v4470
        %v4617 = vunpack.c.l.b16 %v4471
        %v4618 = vunpack.c.h.b16 %v4471
        %v4619 = vunpack.c.l.b16 %v4472
        %v4620 = vunpack.c.h.b16 %v4472
        %v4621 = vunpack.c.l.b16 %v4473
        %v4622 = vunpack.c.h.b16 %v4473
        %v4623 = vunpack.c.l.b16 %v4474
        %v4624 = vunpack.c.h.b16 %v4474
        %v4625 = vunpack.c.l.b16 %v4475
        %v4626 = vunpack.c.h.b16 %v4475
        %v4627 = vunpack.c.l.b16 %v4476
        %v4628 = vunpack.c.h.b16 %v4476
        %v4629 = vunpack.c.l.b16 %v4477
        %v4630 = vunpack.c.h.b16 %v4477
        %v4631 = vunpack.c.l.b16 %v4478
        %v4632 = vunpack.c.h.b16 %v4478
        %v4633 = vunpack.c.l.b16 %v4479
        %v4634 = vunpack.c.h.b16 %v4479
        %v4635 = vunpack.c.l.b16 %v4480
        %v4636 = vunpack.c.h.b16 %v4480
        %v4637 = vunpack.c.l.b16 %v4481
        %v4638 = vunpack.c.h.b16 %v4481
        %v4639 = vunpack.c.l.b16 %v4482
        %v4640 = vunpack.c.h.b16 %v4482
        %v4641 = vunpack.c.l.b16 %v4483
        %v4642 = vunpack.c.h.b16 %v4483
        %v4643 = vunpack.c.l.b16 %v4484
        %v4644 = vunpack.c.h.b16 %v4484
        %v4645 = vunpack.c.l.b16 %v4485
        %v4646 = vunpack.c.h.b16 %v4485
        %v4647 = vunpack.c.l.b16 %v4486
        %v4648 = vunpack.c.h.b16 %v4486
        %v4649 = vunpack.c.l.b16 %v4487
        %v4650 = vunpack.c.h.b16 %v4487
        %v4651 = vunpack.c.l.b16 %v4488
        %v4652 = vunpack.c.h.b16 %v4488
        %v4653 = vunpack.c.l.b16 %v4489
        %v4654 = vunpack.c.h.b16 %v4489
        %v4655 = vunpack.c.l.b16 %v4490
        %v4656 = vunpack.c.h.b16 %v4490
        %v4657 = vunpack.c.l.b16 %v4491
        %v4658 = vunpack.c.h.b16 %v4491
        %v4659 = vunpack.c.l.b16 %v4492
        %v4660 = vunpack.c.h.b16 %v4492
        %v4661 = vunpack.c.l.b16 %v4493
        %v4662 = vunpack.c.h.b16 %v4493
        %v4663 = vunpack.c.l.b16 %v4494
        %v4664 = vunpack.c.h.b16 %v4494
        %v4665 = vunpack.c.l.b16 %v4495
        %v4666 = vunpack.c.h.b16 %v4495
        %v4667 = vunpack.c.l.b16 %v4496
        %v4668 = vunpack.c.h.b16 %v4496
        %v4669 = vunpack.c.l.b16 %v4497
        %v4670 = vunpack.c.h.b16 %v4497
        %v4671 = vunpack.c.l.b16 %v4498
        %v4672 = vunpack.c.h.b16 %v4498
        %v4673 = vunpack.c.l.b16 %v4499
        %v4674 = vunpack.c.h.b16 %v4499
        %v4675 = vunpack.c.l.b16 %v4500
        %v4676 = vunpack.c.h.b16 %v4500
        %v4677 = vunpack.c.l.b16 %v4501
        %v4678 = vunpack.c.h.b16 %v4501
        %v4679 = vunpack.c.l.b16 %v4502
        %v4680 = vunpack.c.h.b16 %v4502
        %v4681 = vunpack.c.l.b16 %v4503
        %v4682 = vunpack.c.h.b16 %v4503
        %v4683 = vunpack.c.l.b16 %v4504
        %v4684 = vunpack.c.h.b16 %v4504
        %v4685 = vunpack.c.l.b16 %v4505
        %v4686 = vunpack.c.h.b16 %v4505
        %v4687 = vunpack.c.l.b16 %v4506
        %v4688 = vunpack.c.h.b16 %v4506
        %v4689 = vunpack.c.l.b16 %v4507
        %v4690 = vunpack.c.h.b16 %v4507
        %v4691 = vunpack.c.l.b16 %v4508
        %v4692 = vunpack.c.h.b16 %v4508
        %v4693 = vunpack.c.l.b16 %v4509
        %v4694 = vunpack.c.h.b16 %v4509
        %v4695 = vunpack.c.l.b16 %v4510
        %v4696 = vunpack.c.h.b16 %v4510
        %v4697 = vunpack.c.l.b16 %v4511
        %v4698 = vunpack.c.h.b16 %v4511
        %v4699 = vunpack.c.l.b16 %v4512
        %v4700 = vunpack.c.h.b16 %v4512
        %v4701 = vunpack.c.l.b16 %v4513
        %v4702 = vunpack.c.h.b16 %v4513
        %v4703 = vunpack.c.l.b16 %v4514
        %v4704 = vunpack.c.h.b16 %v4514
        %v4705 = vunpack.c.l.b16 %v4515
        %v4706 = vunpack.c.h.b16 %v4515
        %v4707 = vunpack.c.l.b16 %v4516
        %v4708 = vunpack.c.h.b16 %v4516
        %v4709 = vunpack.c.l.b16 %v4517
        %v4710 = vunpack.c.h.b16 %v4517
        %v4711 = vunpack.c.l.b16 %v4518
        %v4712 = vunpack.c.h.b16 %v4518
        %v4713 = vunpack.c.l.b16 %v4519
        %v4714 = vunpack.c.h.b16 %v4519
        %v4715 = vunpack.c.l.b16 %v4520
        %v4716 = vunpack.c.h.b16 %v4520
        %v4717 = vunpack.c.l.b16 %v4521
        %v4718 = vunpack.c.h.b16 %v4521
        %v4719 = vunpack.c.l.b16 %v4522
        %v4720 = vunpack.c.h.b16 %v4522
        %v4721 = vunpack.c.l.b16 %v4523
        %v4722 = vunpack.c.h.b16 %v4523
        %v4723 = vunpack.c.l.b16 %v4524
        %v4724 = vunpack.c.h.b16 %v4524
        %v4725 = vunpack.c.l.b16 %v4525
        %v4726 = vunpack.c.h.b16 %v4525
        %v4727 = vunpack.c.l.b16 %v4526
        %v4728 = vunpack.c.h.b16 %v4526
        %v4729 = vunpack.c.l.b16 %v4527
        %v4730 = vunpack.c.h.b16 %v4527
        %v4731 = vunpack.c.l.b16 %v4528
        %v4732 = vunpack.c.h.b16 %v4528
        %v4733 = vpack.c.b16 %v4607, %v4605
        %v4734 = vpack.c.b16 %v4608, %v4606
        %v4735 = vpack.c.b16 %v4611, %v4609
        %v4736 = vpack.c.b16 %v4612, %v4610
        %v4737 = vpack.c.b16 %v4615, %v4613
        %v4738 = vpack.c.b16 %v4616, %v4614
        %v4739 = vpack.c.b16 %v4619, %v4617
        %v4740 = vpack.c.b16 %v4620, %v4618
        %v4741 = vpack.c.b16 %v4623, %v4621
        %v4742 = vpack.c.b16 %v4624, %v4622
        %v4743 = vpack.c.b16 %v4627, %v4625
        %v4744 = vpack.c.b16 %v4628, %v4626
        %v4745 = vpack.c.b16 %v4631, %v4629
        %v4746 = vpack.c.b16 %v4632, %v4630
        %v4747 = vpack.c.b16 %v4635, %v4633
        %v4748 = vpack.c.b16 %v4636, %v4634
        %v4749 = vpack.c.b16 %v4639, %v4637
        %v4750 = vpack.c.b16 %v4640, %v4638
        %v4751 = vpack.c.b16 %v4643, %v4641
        %v4752 = vpack.c.b16 %v4644, %v4642
        %v4753 = vpack.c.b16 %v4647, %v4645
        %v4754 = vpack.c.b16 %v4648, %v4646
        %v4755 = vpack.c.b16 %v4651, %v4649
        %v4756 = vpack.c.b16 %v4652, %v4650
        %v4757 = vpack.c.b16 %v4655, %v4653
        %v4758 = vpack.c.b16 %v4656, %v4654
        %v4759 = vpack.c.b16 %v4659, %v4657
        %v4760 = vpack.c.b16 %v4660, %v4658
        %v4761 = vpack.c.b16 %v4663, %v4661
        %v4762 = vpack.c.b16 %v4664, %v4662
        %v4763 = vpack.c.b16 %v4667, %v4665
        %v4764 = vpack.c.b16 %v4668, %v4666
        %v4765 = vpack.c.b16 %v4671, %v4669
        %v4766 = vpack.c.b16 %v4672, %v4670
        %v4767 = vpack.c.b16 %v4675, %v4673
        %v4768 = vpack.c.b16 %v4676, %v4674
        %v4769 = vpack.c.b16 %v4679, %v4677
        %v4770 = vpack.c.b16 %v4680, %v4678
        %v4771 = vpack.c.b16 %v4683, %v4681
        %v4772 = vpack.c.b16 %v4684, %v4682
        %v4773 = vpack.c.b16 %v4687, %v4685
        %v4774 = vpack.c.b16 %v4688, %v4686
        %v4775 = vpack.c.b16 %v4691, %v4689
        %v4776 = vpack.c.b16 %v4692, %v4690
        %v4777 = vpack.c.b16 %v4695, %v4693
        %v4778 = vpack.c.b16 %v4696, %v4694
        %v4779 = vpack.c.b16 %v4699, %v4697
        %v4780 = vpack.c.b16 %v4700, %v4698
        %v4781 = vpack.c.b16 %v4703, %v4701
        %v4782 = vpack.c.b16 %v4704, %v4702
        %v4783 = vpack.c.b16 %v4707, %v4705
        %v4784 = vpack.c.b16 %v4708, %v4706
        %v4785 = vpack.c.b16 %v4711, %v4709
        %v4786 = vpack.c.b16 %v4712, %v4710
        %v4787 = vpack.c.b16 %v4715, %v4713
        %v4788 = vpack.c.b16 %v4716, %v4714
        %v4789 = vpack.c.b16 %v4719, %v4717
        %v4790 = vpack.c.b16 %v4720, %v4718
        %v4791 = vpack.c.b16 %v4723, %v4721
        %v4792 = vpack.c.b16 %v4724, %v4722
        %v4793 = vpack.c.b16 %v4727, %v4725
        %v4794 = vpack.c.b16 %v4728, %v4726
        %v4795 = vpack.c.b16 %v4731, %v4729
        %v4796 = vpack.c.b16 %v4732, %v4730
        %4861 = vmatprep.subr.bf16.mxu0 %v4734
        %4862 = vmatpush1.bf16.msra.mxu0 %v4733
        %4863 = vmatprep.subr.bf16.mxu0 %v4736
        %4864 = vmatpush1.bf16.msra.mxu0 %v4735
        %4865 = vmatprep.subr.bf16.mxu0 %v4738
        %4866 = vmatpush1.bf16.msra.mxu0 %v4737
        %4867 = vmatprep.subr.bf16.mxu0 %v4740
        %4868 = vmatpush1.bf16.msra.mxu0 %v4739
        %4869 = vmatprep.subr.bf16.mxu0 %v4742
        %4870 = vmatpush1.bf16.msra.mxu0 %v4741
        %4871 = vmatprep.subr.bf16.mxu0 %v4744
        %4872 = vmatpush1.bf16.msra.mxu0 %v4743
        %4873 = vmatprep.subr.bf16.mxu0 %v4746
        %4874 = vmatpush1.bf16.msra.mxu0 %v4745
        %4875 = vmatprep.subr.bf16.mxu0 %v4748
        %4876 = vmatpush1.bf16.msra.mxu0 %v4747
        %4877 = vmatprep.subr.bf16.mxu0 %v4750
        %4878 = vmatpush1.bf16.msra.mxu0 %v4749
        %4879 = vmatprep.subr.bf16.mxu0 %v4752
        %4880 = vmatpush1.bf16.msra.mxu0 %v4751
        %4881 = vmatprep.subr.bf16.mxu0 %v4754
        %4882 = vmatpush1.bf16.msra.mxu0 %v4753
        %4883 = vmatprep.subr.bf16.mxu0 %v4756
        %4884 = vmatpush1.bf16.msra.mxu0 %v4755
        %4885 = vmatprep.subr.bf16.mxu0 %v4758
        %4886 = vmatpush1.bf16.msra.mxu0 %v4757
        %4887 = vmatprep.subr.bf16.mxu0 %v4760
        %4888 = vmatpush1.bf16.msra.mxu0 %v4759
        %4889 = vmatprep.subr.bf16.mxu0 %v4762
        %4890 = vmatpush1.bf16.msra.mxu0 %v4761
        %4891 = vmatprep.subr.bf16.mxu0 %v4764
        %4892 = vmatpush1.bf16.msra.mxu0 %v4763
        %4893 = vmatprep.mubr.bf16.mxu0 %v4402
        %4894 = vmatmul.mubr.bf16.gmra.mrb[0].mxu0 %v4401
        %v4895 = vpop.f32.mrb[0].mxu0
        %v4896 = vadd.f32 %v4534, %v4895
        %v4897 = vpop.f32.mrb[0].mxu0
        %v4898 = vadd.f32 %v4538, %v4897
        %v4899 = vpop.f32.mrb[0].mxu0
        %v4900 = vadd.f32 %v4534, %v4899
        %v4901 = vpop.f32.mrb[0].mxu0
        %v4902 = vadd.f32 %v4538, %v4901
        %4903 = vmatprep.mubr.bf16.mxu0 %v4406
        %4904 = vmatmul.mubr.bf16.gmra.mrb[0].mxu0 %v4405
        %v4905 = vpop.f32.mrb[0].mxu0
        %v4906 = vadd.f32 %v4534, %v4905
        %v4907 = vpop.f32.mrb[0].mxu0
        %v4908 = vadd.f32 %v4538, %v4907
        %v4909 = vpop.f32.mrb[0].mxu0
        %v4910 = vadd.f32 %v4534, %v4909
        %v4911 = vpop.f32.mrb[0].mxu0
        %v4912 = vadd.f32 %v4538, %v4911
        %4913 = vmatprep.mubr.bf16.mxu0 %v4410
        %4914 = vmatmul.mubr.bf16.gmra.mrb[0].mxu0 %v4409
        %v4915 = vpop.f32.mrb[0].mxu0
        %v4916 = vadd.f32 %v4534, %v4915
        %v4917 = vpop.f32.mrb[0].mxu0
        %v4918 = vadd.f32 %v4538, %v4917
        %v4919 = vpop.f32.mrb[0].mxu0
        %v4920 = vadd.f32 %v4534, %v4919
        %v4921 = vpop.f32.mrb[0].mxu0
        %v4922 = vadd.f32 %v4538, %v4921
        %4923 = vmatprep.mubr.bf16.mxu0 %v4414
        %4924 = vmatmul.mubr.bf16.gmra.mrb[0].mxu0 %v4413
        %v4925 = vpop.f32.mrb[0].mxu0
        %v4926 = vadd.f32 %v4534, %v4925
        %v4927 = vpop.f32.mrb[0].mxu0
        %v4928 = vadd.f32 %v4538, %v4927
        %v4929 = vpop.f32.mrb[0].mxu0
        %v4930 = vadd.f32 %v4534, %v4929
        %v4931 = vpop.f32.mrb[0].mxu0
        %v4932 = vadd.f32 %v4538, %v4931
        %4933 = vmatprep.mubr.bf16.mxu0 %v4418
        %4934 = vmatmul.mubr.bf16.gmra.mrb[0].mxu0 %v4417
        %v4935 = vpop.f32.mrb[0].mxu0
        %v4936 = vadd.f32 %v4534, %v4935
        %v4937 = vpop.f32.mrb[0].mxu0
        %v4938 = vadd.f32 %v4538, %v4937
        %v4939 = vpop.f32.mrb[0].mxu0
        %v4940 = vadd.f32 %v4534, %v4939
        %v4941 = vpop.f32.mrb[0].mxu0
        %v4942 = vadd.f32 %v4538, %v4941
        %4943 = vmatprep.mubr.bf16.mxu0 %v4422
        %4944 = vmatmul.mubr.bf16.gmra.mrb[0].mxu0 %v4421
        %v4945 = vpop.f32.mrb[0].mxu0
        %v4946 = vadd.f32 %v4534, %v4945
        %v4947 = vpop.f32.mrb[0].mxu0
        %v4948 = vadd.f32 %v4538, %v4947
        %v4949 = vpop.f32.mrb[0].mxu0
        %v4950 = vadd.f32 %v4534, %v4949
        %v4951 = vpop.f32.mrb[0].mxu0
        %v4952 = vadd.f32 %v4538, %v4951
        %4953 = vmatprep.mubr.bf16.mxu0 %v4426
        %4954 = vmatmul.mubr.bf16.gmra.mrb[0].mxu0 %v4425
        %v4955 = vpop.f32.mrb[0].mxu0
        %v4956 = vadd.f32 %v4534, %v4955
        %v4957 = vpop.f32.mrb[0].mxu0
        %v4958 = vadd.f32 %v4538, %v4957
        %v4959 = vpop.f32.mrb[0].mxu0
        %v4960 = vadd.f32 %v4534, %v4959
        %v4961 = vpop.f32.mrb[0].mxu0
        %v4962 = vadd.f32 %v4538, %v4961
        %4963 = vmatprep.mubr.bf16.mxu0 %v4430
        %4964 = vmatmul.mubr.bf16.gmra.mrb[0].mxu0 %v4429
        %v4965 = vpop.f32.mrb[0].mxu0
        %v4966 = vadd.f32 %v4534, %v4965
        %v4967 = vpop.f32.mrb[0].mxu0
        %v4968 = vadd.f32 %v4538, %v4967
        %v4969 = vpop.f32.mrb[0].mxu0
        %v4970 = vadd.f32 %v4534, %v4969
        %v4971 = vpop.f32.mrb[0].mxu0
        %v4972 = vadd.f32 %v4538, %v4971
        %4973 = vmatprep.mubr.bf16.mxu0 %v4434
        %4974 = vmatmul.mubr.bf16.gmra.mrb[0].mxu0 %v4433
        %v4975 = vpop.f32.mrb[0].mxu0
        %v4976 = vadd.f32 %v4534, %v4975
        %v4977 = vpop.f32.mrb[0].mxu0
        %v4978 = vadd.f32 %v4538, %v4977
        %v4979 = vpop.f32.mrb[0].mxu0
        %v4980 = vadd.f32 %v4534, %v4979
        %v4981 = vpop.f32.mrb[0].mxu0
        %v4982 = vadd.f32 %v4538, %v4981
        %4983 = vmatprep.mubr.bf16.mxu0 %v4438
        %4984 = vmatmul.mubr.bf16.gmra.mrb[0].mxu0 %v4437
        %v4985 = vpop.f32.mrb[0].mxu0
        %v4986 = vadd.f32 %v4534, %v4985
        %v4987 = vpop.f32.mrb[0].mxu0
        %v4988 = vadd.f32 %v4538, %v4987
        %v4989 = vpop.f32.mrb[0].mxu0
        %v4990 = vadd.f32 %v4534, %v4989
        %v4991 = vpop.f32.mrb[0].mxu0
        %v4992 = vadd.f32 %v4538, %v4991
        %4993 = vmatprep.mubr.bf16.mxu0 %v4442
        %4994 = vmatmul.mubr.bf16.gmra.mrb[0].mxu0 %v4441
        %v4995 = vpop.f32.mrb[0].mxu0
        %v4996 = vadd.f32 %v4534, %v4995
        %v4997 = vpop.f32.mrb[0].mxu0
        %v4998 = vadd.f32 %v4538, %v4997
        %v4999 = vpop.f32.mrb[0].mxu0
        %v5000 = vadd.f32 %v4534, %v4999
        %v5001 = vpop.f32.mrb[0].mxu0
        %v5002 = vadd.f32 %v4538, %v5001
        %5003 = vmatprep.mubr.bf16.mxu0 %v4446
        %5004 = vmatmul.mubr.bf16.gmra.mrb[0].mxu0 %v4445
        %v5005 = vpop.f32.mrb[0].mxu0
        %v5006 = vadd.f32 %v4534, %v5005
        %v5007 = vpop.f32.mrb[0].mxu0
        %v5008 = vadd.f32 %v4538, %v5007
        %v5009 = vpop.f32.mrb[0].mxu0
        %v5010 = vadd.f32 %v4534, %v5009
        %v5011 = vpop.f32.mrb[0].mxu0
        %v5012 = vadd.f32 %v4538, %v5011
        %5013 = vmatprep.mubr.bf16.mxu0 %v4450
        %5014 = vmatmul.mubr.bf16.gmra.mrb[0].mxu0 %v4449
        %v5015 = vpop.f32.mrb[0].mxu0
        %v5016 = vadd.f32 %v4534, %v5015
        %v5017 = vpop.f32.mrb[0].mxu0
        %v5018 = vadd.f32 %v4538, %v5017
        %v5019 = vpop.f32.mrb[0].mxu0
        %v5020 = vadd.f32 %v4534, %v5019
        %v5021 = vpop.f32.mrb[0].mxu0
        %v5022 = vadd.f32 %v4538, %v5021
        %5023 = vmatprep.mubr.bf16.mxu0 %v4454
        %5024 = vmatmul.mubr.bf16.gmra.mrb[0].mxu0 %v4453
        %v5025 = vpop.f32.mrb[0].mxu0
        %v5026 = vadd.f32 %v4534, %v5025
        %v5027 = vpop.f32.mrb[0].mxu0
        %v5028 = vadd.f32 %v4538, %v5027
        %v5029 = vpop.f32.mrb[0].mxu0
        %v5030 = vadd.f32 %v4534, %v5029
        %v5031 = vpop.f32.mrb[0].mxu0
        %v5032 = vadd.f32 %v4538, %v5031
        %5033 = vmatprep.mubr.bf16.mxu0 %v4458
        %5034 = vmatmul.mubr.bf16.gmra.mrb[0].mxu0 %v4457
        %v5035 = vpop.f32.mrb[0].mxu0
        %v5036 = vadd.f32 %v4534, %v5035
        %v5037 = vpop.f32.mrb[0].mxu0
        %v5038 = vadd.f32 %v4538, %v5037
        %v5039 = vpop.f32.mrb[0].mxu0
        %v5040 = vadd.f32 %v4534, %v5039
        %v5041 = vpop.f32.mrb[0].mxu0
        %v5042 = vadd.f32 %v4538, %v5041
        %5043 = vmatprep.mubr.bf16.mxu0 %v4462
        %5044 = vmatmul.mubr.bf16.gmra.mrb[0].mxu0 %v4461
        %v5045 = vpop.f32.mrb[0].mxu0
        %v5046 = vadd.f32 %v4534, %v5045
        %v5047 = vpop.f32.mrb[0].mxu0
        %v5048 = vadd.f32 %v4538, %v5047
        %v5049 = vpop.f32.mrb[0].mxu0
        %v5050 = vadd.f32 %v4534, %v5049
        %v5051 = vpop.f32.mrb[0].mxu0
        %v5052 = vadd.f32 %v4538, %v5051
        %5053 = vdwg.mxu0
        %5054 = vmatprep.subr.bf16.mxu0 %v4766
        %5055 = vmatpush1.bf16.msra.mxu0 %v4765
        %5056 = vmatprep.subr.bf16.mxu0 %v4768
        %5057 = vmatpush1.bf16.msra.mxu0 %v4767
        %5058 = vmatprep.subr.bf16.mxu0 %v4770
        %5059 = vmatpush1.bf16.msra.mxu0 %v4769
        %5060 = vmatprep.subr.bf16.mxu0 %v4772
        %5061 = vmatpush1.bf16.msra.mxu0 %v4771
        %5062 = vmatprep.subr.bf16.mxu0 %v4774
        %5063 = vmatpush1.bf16.msra.mxu0 %v4773
        %5064 = vmatprep.subr.bf16.mxu0 %v4776
        %5065 = vmatpush1.bf16.msra.mxu0 %v4775
        %5066 = vmatprep.subr.bf16.mxu0 %v4778
        %5067 = vmatpush1.bf16.msra.mxu0 %v4777
        %5068 = vmatprep.subr.bf16.mxu0 %v4780
        %5069 = vmatpush1.bf16.msra.mxu0 %v4779
        %5070 = vmatprep.subr.bf16.mxu0 %v4782
        %5071 = vmatpush1.bf16.msra.mxu0 %v4781
        %5072 = vmatprep.subr.bf16.mxu0 %v4784
        %5073 = vmatpush1.bf16.msra.mxu0 %v4783
        %5074 = vmatprep.subr.bf16.mxu0 %v4786
        %5075 = vmatpush1.bf16.msra.mxu0 %v4785
        %5076 = vmatprep.subr.bf16.mxu0 %v4788
        %5077 = vmatpush1.bf16.msra.mxu0 %v4787
        %5078 = vmatprep.subr.bf16.mxu0 %v4790
        %5079 = vmatpush1.bf16.msra.mxu0 %v4789
        %5080 = vmatprep.subr.bf16.mxu0 %v4792
        %5081 = vmatpush1.bf16.msra.mxu0 %v4791
        %5082 = vmatprep.subr.bf16.mxu0 %v4794
        %5083 = vmatpush1.bf16.msra.mxu0 %v4793
        %5084 = vmatprep.subr.bf16.mxu0 %v4796
        %5085 = vmatpush1.bf16.msra.mxu0 %v4795
        %5086 = vmatprep.mubr.bf16.mxu0 %v4404
        %5087 = vmatmul.mubr.bf16.gmra.mrb[0].mxu0 %v4403
        %v5088 = vpop.f32.mrb[0].mxu0
        %v5089 = vadd.f32 %v4896, %v5088
        %v5090 = vpop.f32.mrb[0].mxu0
        %v5091 = vadd.f32 %v4898, %v5090
        %v5092 = vpop.f32.mrb[0].mxu0
        %v5093 = vadd.f32 %v4900, %v5092
        %v5094 = vpop.f32.mrb[0].mxu0
        %v5095 = vadd.f32 %v4902, %v5094
        %5096 = vmatprep.mubr.bf16.mxu0 %v4408
        %5097 = vmatmul.mubr.bf16.gmra.mrb[0].mxu0 %v4407
        %v5098 = vpop.f32.mrb[0].mxu0
        %v5099 = vadd.f32 %v4906, %v5098
        %v5100 = vpop.f32.mrb[0].mxu0
        %v5101 = vadd.f32 %v4908, %v5100
        %v5102 = vpop.f32.mrb[0].mxu0
        %v5103 = vadd.f32 %v4910, %v5102
        %v5104 = vpop.f32.mrb[0].mxu0
        %v5105 = vadd.f32 %v4912, %v5104
        %5106 = vmatprep.mubr.bf16.mxu0 %v4412
        %5107 = vmatmul.mubr.bf16.gmra.mrb[0].mxu0 %v4411
        %v5108 = vpop.f32.mrb[0].mxu0
        %v5109 = vadd.f32 %v4916, %v5108
        %v5110 = vpop.f32.mrb[0].mxu0
        %v5111 = vadd.f32 %v4918, %v5110
        %v5112 = vpop.f32.mrb[0].mxu0
        %v5113 = vadd.f32 %v4920, %v5112
        %v5114 = vpop.f32.mrb[0].mxu0
        %v5115 = vadd.f32 %v4922, %v5114
        %5116 = vmatprep.mubr.bf16.mxu0 %v4416
        %5117 = vmatmul.mubr.bf16.gmra.mrb[0].mxu0 %v4415
        %v5118 = vpop.f32.mrb[0].mxu0
        %v5119 = vadd.f32 %v4926, %v5118
        %v5120 = vpop.f32.mrb[0].mxu0
        %v5121 = vadd.f32 %v4928, %v5120
        %v5122 = vpop.f32.mrb[0].mxu0
        %v5123 = vadd.f32 %v4930, %v5122
        %v5124 = vpop.f32.mrb[0].mxu0
        %v5125 = vadd.f32 %v4932, %v5124
        %5126 = vmatprep.mubr.bf16.mxu0 %v4420
        %5127 = vmatmul.mubr.bf16.gmra.mrb[0].mxu0 %v4419
        %v5128 = vpop.f32.mrb[0].mxu0
        %v5129 = vadd.f32 %v4936, %v5128
        %v5130 = vpop.f32.mrb[0].mxu0
        %v5131 = vadd.f32 %v4938, %v5130
        %v5132 = vpop.f32.mrb[0].mxu0
        %v5133 = vadd.f32 %v4940, %v5132
        %v5134 = vpop.f32.mrb[0].mxu0
        %v5135 = vadd.f32 %v4942, %v5134
        %5136 = vmatprep.mubr.bf16.mxu0 %v4424
        %5137 = vmatmul.mubr.bf16.gmra.mrb[0].mxu0 %v4423
        %v5138 = vpop.f32.mrb[0].mxu0
        %v5139 = vadd.f32 %v4946, %v5138
        %v5140 = vpop.f32.mrb[0].mxu0
        %v5141 = vadd.f32 %v4948, %v5140
        %v5142 = vpop.f32.mrb[0].mxu0
        %v5143 = vadd.f32 %v4950, %v5142
        %v5144 = vpop.f32.mrb[0].mxu0
        %v5145 = vadd.f32 %v4952, %v5144
        %5146 = vmatprep.mubr.bf16.mxu0 %v4428
        %5147 = vmatmul.mubr.bf16.gmra.mrb[0].mxu0 %v4427
        %v5148 = vpop.f32.mrb[0].mxu0
        %v5149 = vadd.f32 %v4956, %v5148
        %v5150 = vpop.f32.mrb[0].mxu0
        %v5151 = vadd.f32 %v4958, %v5150
        %v5152 = vpop.f32.mrb[0].mxu0
        %v5153 = vadd.f32 %v4960, %v5152
        %v5154 = vpop.f32.mrb[0].mxu0
        %v5155 = vadd.f32 %v4962, %v5154
        %5156 = vmatprep.mubr.bf16.mxu0 %v4432
        %5157 = vmatmul.mubr.bf16.gmra.mrb[0].mxu0 %v4431
        %v5158 = vpop.f32.mrb[0].mxu0
        %v5159 = vadd.f32 %v4966, %v5158
        %v5160 = vpop.f32.mrb[0].mxu0
        %v5161 = vadd.f32 %v4968, %v5160
        %v5162 = vpop.f32.mrb[0].mxu0
        %v5163 = vadd.f32 %v4970, %v5162
        %v5164 = vpop.f32.mrb[0].mxu0
        %v5165 = vadd.f32 %v4972, %v5164
        %5166 = vmatprep.mubr.bf16.mxu0 %v4436
        %5167 = vmatmul.mubr.bf16.gmra.mrb[0].mxu0 %v4435
        %v5168 = vpop.f32.mrb[0].mxu0
        %v5169 = vadd.f32 %v4976, %v5168
        %v5170 = vpop.f32.mrb[0].mxu0
        %v5171 = vadd.f32 %v4978, %v5170
        %v5172 = vpop.f32.mrb[0].mxu0
        %v5173 = vadd.f32 %v4980, %v5172
        %v5174 = vpop.f32.mrb[0].mxu0
        %v5175 = vadd.f32 %v4982, %v5174
        %5176 = vmatprep.mubr.bf16.mxu0 %v4440
        %5177 = vmatmul.mubr.bf16.gmra.mrb[0].mxu0 %v4439
        %v5178 = vpop.f32.mrb[0].mxu0
        %v5179 = vadd.f32 %v4986, %v5178
        %v5180 = vpop.f32.mrb[0].mxu0
        %v5181 = vadd.f32 %v4988, %v5180
        %v5182 = vpop.f32.mrb[0].mxu0
        %v5183 = vadd.f32 %v4990, %v5182
        %v5184 = vpop.f32.mrb[0].mxu0
        %v5185 = vadd.f32 %v4992, %v5184
        %5186 = vmatprep.mubr.bf16.mxu0 %v4444
        %5187 = vmatmul.mubr.bf16.gmra.mrb[0].mxu0 %v4443
        %v5188 = vpop.f32.mrb[0].mxu0
        %v5189 = vadd.f32 %v4996, %v5188
        %v5190 = vpop.f32.mrb[0].mxu0
        %v5191 = vadd.f32 %v4998, %v5190
        %v5192 = vpop.f32.mrb[0].mxu0
        %v5193 = vadd.f32 %v5000, %v5192
        %v5194 = vpop.f32.mrb[0].mxu0
        %v5195 = vadd.f32 %v5002, %v5194
        %5196 = vmatprep.mubr.bf16.mxu0 %v4448
        %5197 = vmatmul.mubr.bf16.gmra.mrb[0].mxu0 %v4447
        %v5198 = vpop.f32.mrb[0].mxu0
        %v5199 = vadd.f32 %v5006, %v5198
        %v5200 = vpop.f32.mrb[0].mxu0
        %v5201 = vadd.f32 %v5008, %v5200
        %v5202 = vpop.f32.mrb[0].mxu0
        %v5203 = vadd.f32 %v5010, %v5202
        %v5204 = vpop.f32.mrb[0].mxu0
        %v5205 = vadd.f32 %v5012, %v5204
        %5206 = vmatprep.mubr.bf16.mxu0 %v4452
        %5207 = vmatmul.mubr.bf16.gmra.mrb[0].mxu0 %v4451
        %v5208 = vpop.f32.mrb[0].mxu0
        %v5209 = vadd.f32 %v5016, %v5208
        %v5210 = vpop.f32.mrb[0].mxu0
        %v5211 = vadd.f32 %v5018, %v5210
        %v5212 = vpop.f32.mrb[0].mxu0
        %v5213 = vadd.f32 %v5020, %v5212
        %v5214 = vpop.f32.mrb[0].mxu0
        %v5215 = vadd.f32 %v5022, %v5214
        %5216 = vmatprep.mubr.bf16.mxu0 %v4456
        %5217 = vmatmul.mubr.bf16.gmra.mrb[0].mxu0 %v4455
        %v5218 = vpop.f32.mrb[0].mxu0
        %v5219 = vadd.f32 %v5026, %v5218
        %v5220 = vpop.f32.mrb[0].mxu0
        %v5221 = vadd.f32 %v5028, %v5220
        %v5222 = vpop.f32.mrb[0].mxu0
        %v5223 = vadd.f32 %v5030, %v5222
        %v5224 = vpop.f32.mrb[0].mxu0
        %v5225 = vadd.f32 %v5032, %v5224
        %5226 = vmatprep.mubr.bf16.mxu0 %v4460
        %5227 = vmatmul.mubr.bf16.gmra.mrb[0].mxu0 %v4459
        %v5228 = vpop.f32.mrb[0].mxu0
        %v5229 = vadd.f32 %v5036, %v5228
        %v5230 = vpop.f32.mrb[0].mxu0
        %v5231 = vadd.f32 %v5038, %v5230
        %v5232 = vpop.f32.mrb[0].mxu0
        %v5233 = vadd.f32 %v5040, %v5232
        %v5234 = vpop.f32.mrb[0].mxu0
        %v5235 = vadd.f32 %v5042, %v5234
        %5236 = vmatprep.mubr.bf16.mxu0 %v4464
        %5237 = vmatmul.mubr.bf16.gmra.mrb[0].mxu0 %v4463
        %v5238 = vpop.f32.mrb[0].mxu0
        %v5239 = vadd.f32 %v5046, %v5238
        %v5240 = vpop.f32.mrb[0].mxu0
        %v5241 = vadd.f32 %v5048, %v5240
        %v5242 = vpop.f32.mrb[0].mxu0
        %v5243 = vadd.f32 %v5050, %v5242
        %v5244 = vpop.f32.mrb[0].mxu0
        %v5245 = vadd.f32 %v5052, %v5244
        %5246 = vdwg.mxu0
        %vm5247 = vcmp.gt.f32.partialorder %v5089, 0.0
        %vm5248 = vcmp.gt.f32.partialorder %v5091, 0.0
        %vm5249 = vcmp.gt.f32.partialorder %v5093, 0.0
        %vm5250 = vcmp.gt.f32.partialorder %v5095, 0.0
        %vm5251 = vcmp.gt.f32.partialorder %v5099, 0.0
        %vm5252 = vcmp.gt.f32.partialorder %v5101, 0.0
        %vm5253 = vcmp.gt.f32.partialorder %v5103, 0.0
        %vm5254 = vcmp.gt.f32.partialorder %v5105, 0.0
        %vm5255 = vcmp.gt.f32.partialorder %v5109, 0.0
        %vm5256 = vcmp.gt.f32.partialorder %v5111, 0.0
        %vm5257 = vcmp.gt.f32.partialorder %v5113, 0.0
        %vm5258 = vcmp.gt.f32.partialorder %v5115, 0.0
        %vm5259 = vcmp.gt.f32.partialorder %v5119, 0.0
        %vm5260 = vcmp.gt.f32.partialorder %v5121, 0.0
        %vm5261 = vcmp.gt.f32.partialorder %v5123, 0.0
        %vm5262 = vcmp.gt.f32.partialorder %v5125, 0.0
        %vm5263 = vcmp.gt.f32.partialorder %v5129, 0.0
        %vm5264 = vcmp.gt.f32.partialorder %v5131, 0.0
        %vm5265 = vcmp.gt.f32.partialorder %v5133, 0.0
        %vm5266 = vcmp.gt.f32.partialorder %v5135, 0.0
        %vm5267 = vcmp.gt.f32.partialorder %v5139, 0.0
        %vm5268 = vcmp.gt.f32.partialorder %v5141, 0.0
        %vm5269 = vcmp.gt.f32.partialorder %v5143, 0.0
        %vm5270 = vcmp.gt.f32.partialorder %v5145, 0.0
        %vm5271 = vcmp.gt.f32.partialorder %v5149, 0.0
        %vm5272 = vcmp.gt.f32.partialorder %v5151, 0.0
        %vm5273 = vcmp.gt.f32.partialorder %v5153, 0.0
        %vm5274 = vcmp.gt.f32.partialorder %v5155, 0.0
        %vm5275 = vcmp.gt.f32.partialorder %v5159, 0.0
        %vm5276 = vcmp.gt.f32.partialorder %v5161, 0.0
        %vm5277 = vcmp.gt.f32.partialorder %v5163, 0.0
        %vm5278 = vcmp.gt.f32.partialorder %v5165, 0.0
        %vm5279 = vcmp.gt.f32.partialorder %v5169, 0.0
        %vm5280 = vcmp.gt.f32.partialorder %v5171, 0.0
        %vm5281 = vcmp.gt.f32.partialorder %v5173, 0.0
        %vm5282 = vcmp.gt.f32.partialorder %v5175, 0.0
        %vm5283 = vcmp.gt.f32.partialorder %v5179, 0.0
        %vm5284 = vcmp.gt.f32.partialorder %v5181, 0.0
        %vm5285 = vcmp.gt.f32.partialorder %v5183, 0.0
        %vm5286 = vcmp.gt.f32.partialorder %v5185, 0.0
        %vm5287 = vcmp.gt.f32.partialorder %v5189, 0.0
        %vm5288 = vcmp.gt.f32.partialorder %v5191, 0.0
        %vm5289 = vcmp.gt.f32.partialorder %v5193, 0.0
        %vm5290 = vcmp.gt.f32.partialorder %v5195, 0.0
        %vm5291 = vcmp.gt.f32.partialorder %v5199, 0.0
        %vm5292 = vcmp.gt.f32.partialorder %v5201, 0.0
        %vm5293 = vcmp.gt.f32.partialorder %v5203, 0.0
        %vm5294 = vcmp.gt.f32.partialorder %v5205, 0.0
        %vm5295 = vcmp.gt.f32.partialorder %v5209, 0.0
        %vm5296 = vcmp.gt.f32.partialorder %v5211, 0.0
        %vm5297 = vcmp.gt.f32.partialorder %v5213, 0.0
        %vm5298 = vcmp.gt.f32.partialorder %v5215, 0.0
        %vm5299 = vcmp.gt.f32.partialorder %v5219, 0.0
        %vm5300 = vcmp.gt.f32.partialorder %v5221, 0.0
        %vm5301 = vcmp.gt.f32.partialorder %v5223, 0.0
        %vm5302 = vcmp.gt.f32.partialorder %v5225, 0.0
        %vm5303 = vcmp.gt.f32.partialorder %v5229, 0.0
        %vm5304 = vcmp.gt.f32.partialorder %v5231, 0.0
        %vm5305 = vcmp.gt.f32.partialorder %v5233, 0.0
        %vm5306 = vcmp.gt.f32.partialorder %v5235, 0.0
        %vm5307 = vcmp.gt.f32.partialorder %v5239, 0.0
        %vm5308 = vcmp.gt.f32.partialorder %v5241, 0.0
        %vm5309 = vcmp.gt.f32.partialorder %v5243, 0.0
        %vm5310 = vcmp.gt.f32.partialorder %v5245, 0.0
        %v5311 = vmul.f32 %v5089, 0.2
        %v5312 = vmul.f32 %v5091, 0.2
        %v5313 = vmul.f32 %v5093, 0.2
        %v5314 = vmul.f32 %v5095, 0.2
        %v5315 = vmul.f32 %v5099, 0.2
        %v5316 = vmul.f32 %v5101, 0.2
        %v5317 = vmul.f32 %v5103, 0.2
        %v5318 = vmul.f32 %v5105, 0.2
        %v5319 = vmul.f32 %v5109, 0.2
        %v5320 = vmul.f32 %v5111, 0.2
        %v5321 = vmul.f32 %v5113, 0.2
        %v5322 = vmul.f32 %v5115, 0.2
        %v5323 = vmul.f32 %v5119, 0.2
        %v5324 = vmul.f32 %v5121, 0.2
        %v5325 = vmul.f32 %v5123, 0.2
        %v5326 = vmul.f32 %v5125, 0.2
        %v5327 = vmul.f32 %v5129, 0.2
        %v5328 = vmul.f32 %v5131, 0.2
        %v5329 = vmul.f32 %v5133, 0.2
        %v5330 = vmul.f32 %v5135, 0.2
        %v5331 = vmul.f32 %v5139, 0.2
        %v5332 = vmul.f32 %v5141, 0.2
        %v5333 = vmul.f32 %v5143, 0.2
        %v5334 = vmul.f32 %v5145, 0.2
        %v5335 = vmul.f32 %v5149, 0.2
        %v5336 = vmul.f32 %v5151, 0.2
        %v5337 = vmul.f32 %v5153, 0.2
        %v5338 = vmul.f32 %v5155, 0.2
        %v5339 = vmul.f32 %v5159, 0.2
        %v5340 = vmul.f32 %v5161, 0.2
        %v5341 = vmul.f32 %v5163, 0.2
        %v5342 = vmul.f32 %v5165, 0.2
        %v5343 = vmul.f32 %v5169, 0.2
        %v5344 = vmul.f32 %v5171, 0.2
        %v5345 = vmul.f32 %v5173, 0.2
        %v5346 = vmul.f32 %v5175, 0.2
        %v5347 = vmul.f32 %v5179, 0.2
        %v5348 = vmul.f32 %v5181, 0.2
        %v5349 = vmul.f32 %v5183, 0.2
        %v5350 = vmul.f32 %v5185, 0.2
        %v5351 = vmul.f32 %v5189, 0.2
        %v5352 = vmul.f32 %v5191, 0.2
        %v5353 = vmul.f32 %v5193, 0.2
        %v5354 = vmul.f32 %v5195, 0.2
        %v5355 = vmul.f32 %v5199, 0.2
        %v5356 = vmul.f32 %v5201, 0.2
        %v5357 = vmul.f32 %v5203, 0.2
        %v5358 = vmul.f32 %v5205, 0.2
        %v5359 = vmul.f32 %v5209, 0.2
        %v5360 = vmul.f32 %v5211, 0.2
        %v5361 = vmul.f32 %v5213, 0.2
        %v5362 = vmul.f32 %v5215, 0.2
        %v5363 = vmul.f32 %v5219, 0.2
        %v5364 = vmul.f32 %v5221, 0.2
        %v5365 = vmul.f32 %v5223, 0.2
        %v5366 = vmul.f32 %v5225, 0.2
        %v5367 = vmul.f32 %v5229, 0.2
        %v5368 = vmul.f32 %v5231, 0.2
        %v5369 = vmul.f32 %v5233, 0.2
        %v5370 = vmul.f32 %v5235, 0.2
        %v5371 = vmul.f32 %v5239, 0.2
        %v5372 = vmul.f32 %v5241, 0.2
        %v5373 = vmul.f32 %v5243, 0.2
        %v5374 = vmul.f32 %v5245, 0.2
        %v5375 = vsel %vm5247, %v5089, %v5311
        %v5376 = vsel %vm5248, %v5091, %v5312
        %v5377 = vsel %vm5249, %v5093, %v5313
        %v5378 = vsel %vm5250, %v5095, %v5314
        %v5379 = vsel %vm5251, %v5099, %v5315
        %v5380 = vsel %vm5252, %v5101, %v5316
        %v5381 = vsel %vm5253, %v5103, %v5317
        %v5382 = vsel %vm5254, %v5105, %v5318
        %v5383 = vsel %vm5255, %v5109, %v5319
        %v5384 = vsel %vm5256, %v5111, %v5320
        %v5385 = vsel %vm5257, %v5113, %v5321
        %v5386 = vsel %vm5258, %v5115, %v5322
        %v5387 = vsel %vm5259, %v5119, %v5323
        %v5388 = vsel %vm5260, %v5121, %v5324
        %v5389 = vsel %vm5261, %v5123, %v5325
        %v5390 = vsel %vm5262, %v5125, %v5326
        %v5391 = vsel %vm5263, %v5129, %v5327
        %v5392 = vsel %vm5264, %v5131, %v5328
        %v5393 = vsel %vm5265, %v5133, %v5329
        %v5394 = vsel %vm5266, %v5135, %v5330
        %v5395 = vsel %vm5267, %v5139, %v5331
        %v5396 = vsel %vm5268, %v5141, %v5332
        %v5397 = vsel %vm5269, %v5143, %v5333
        %v5398 = vsel %vm5270, %v5145, %v5334
        %v5399 = vsel %vm5271, %v5149, %v5335
        %v5400 = vsel %vm5272, %v5151, %v5336
        %v5401 = vsel %vm5273, %v5153, %v5337
        %v5402 = vsel %vm5274, %v5155, %v5338
        %v5403 = vsel %vm5275, %v5159, %v5339
        %v5404 = vsel %vm5276, %v5161, %v5340
        %v5405 = vsel %vm5277, %v5163, %v5341
        %v5406 = vsel %vm5278, %v5165, %v5342
        %v5407 = vsel %vm5279, %v5169, %v5343
        %v5408 = vsel %vm5280, %v5171, %v5344
        %v5409 = vsel %vm5281, %v5173, %v5345
        %v5410 = vsel %vm5282, %v5175, %v5346
        %v5411 = vsel %vm5283, %v5179, %v5347
        %v5412 = vsel %vm5284, %v5181, %v5348
        %v5413 = vsel %vm5285, %v5183, %v5349
        %v5414 = vsel %vm5286, %v5185, %v5350
        %v5415 = vsel %vm5287, %v5189, %v5351
        %v5416 = vsel %vm5288, %v5191, %v5352
        %v5417 = vsel %vm5289, %v5193, %v5353
        %v5418 = vsel %vm5290, %v5195, %v5354
        %v5419 = vsel %vm5291, %v5199, %v5355
        %v5420 = vsel %vm5292, %v5201, %v5356
        %v5421 = vsel %vm5293, %v5203, %v5357
        %v5422 = vsel %vm5294, %v5205, %v5358
        %v5423 = vsel %vm5295, %v5209, %v5359
        %v5424 = vsel %vm5296, %v5211, %v5360
        %v5425 = vsel %vm5297, %v5213, %v5361
        %v5426 = vsel %vm5298, %v5215, %v5362
        %v5427 = vsel %vm5299, %v5219, %v5363
        %v5428 = vsel %vm5300, %v5221, %v5364
        %v5429 = vsel %vm5301, %v5223, %v5365
        %v5430 = vsel %vm5302, %v5225, %v5366
        %v5431 = vsel %vm5303, %v5229, %v5367
        %v5432 = vsel %vm5304, %v5231, %v5368
        %v5433 = vsel %vm5305, %v5233, %v5369
        %v5434 = vsel %vm5306, %v5235, %v5370
        %v5435 = vsel %vm5307, %v5239, %v5371
        %v5436 = vsel %vm5308, %v5241, %v5372
        %v5437 = vsel %vm5309, %v5243, %v5373
        %v5438 = vsel %vm5310, %v5245, %v5374
        %v5439 = vpack.c.bf16 %v5377, %v5375
        %v5440 = vpack.c.bf16 %v5378, %v5376
        %v5441 = vpack.c.bf16 %v5381, %v5379
        %v5442 = vpack.c.bf16 %v5382, %v5380
        %v5443 = vpack.c.bf16 %v5385, %v5383
        %v5444 = vpack.c.bf16 %v5386, %v5384
        %v5445 = vpack.c.bf16 %v5389, %v5387
        %v5446 = vpack.c.bf16 %v5390, %v5388
        %v5447 = vpack.c.bf16 %v5393, %v5391
        %v5448 = vpack.c.bf16 %v5394, %v5392
        %v5449 = vpack.c.bf16 %v5397, %v5395
        %v5450 = vpack.c.bf16 %v5398, %v5396
        %v5451 = vpack.c.bf16 %v5401, %v5399
        %v5452 = vpack.c.bf16 %v5402, %v5400
        %v5453 = vpack.c.bf16 %v5405, %v5403
        %v5454 = vpack.c.bf16 %v5406, %v5404
        %v5455 = vpack.c.bf16 %v5409, %v5407
        %v5456 = vpack.c.bf16 %v5410, %v5408
        %v5457 = vpack.c.bf16 %v5413, %v5411
        %v5458 = vpack.c.bf16 %v5414, %v5412
        %v5459 = vpack.c.bf16 %v5417, %v5415
        %v5460 = vpack.c.bf16 %v5418, %v5416
        %v5461 = vpack.c.bf16 %v5421, %v5419
        %v5462 = vpack.c.bf16 %v5422, %v5420
        %v5463 = vpack.c.bf16 %v5425, %v5423
        %v5464 = vpack.c.bf16 %v5426, %v5424
        %v5465 = vpack.c.bf16 %v5429, %v5427
        %v5466 = vpack.c.bf16 %v5430, %v5428
        %v5467 = vpack.c.bf16 %v5433, %v5431
        %v5468 = vpack.c.bf16 %v5434, %v5432
        %v5469 = vpack.c.bf16 %v5437, %v5435
        %v5470 = vpack.c.bf16 %v5438, %v5436
        %v5471 = vld [vmem:[#allocation8] sm:$0xf]
        %v5472 = vld [vmem:[#allocation8 + $0x4] sm:$0xf]
        %v5473 = vld [vmem:[#allocation8 + $0x8] sm:$0xf]
        %v5474 = vld [vmem:[#allocation8 + $0xc] sm:$0xf]
        %v5475 = vld [vmem:[#allocation8 + $0x10] sm:$0xf]
        %v5476 = vld [vmem:[#allocation8 + $0x14] sm:$0xf]
        %v5477 = vld [vmem:[#allocation8 + $0x18] sm:$0xf]
        %v5478 = vld [vmem:[#allocation8 + $0x1c] sm:$0xf]
        %v5479 = vld [vmem:[#allocation8 + $0x20] sm:$0xf]
        %v5480 = vld [vmem:[#allocation8 + $0x24] sm:$0xf]
        %v5481 = vld [vmem:[#allocation8 + $0x28] sm:$0xf]
        %v5482 = vld [vmem:[#allocation8 + $0x2c] sm:$0xf]
        %v5483 = vld [vmem:[#allocation8 + $0x30] sm:$0xf]
        %v5484 = vld [vmem:[#allocation8 + $0x34] sm:$0xf]
        %v5485 = vld [vmem:[#allocation8 + $0x38] sm:$0xf]
        %v5486 = vld [vmem:[#allocation8 + $0x3c] sm:$0xf]
        %v5487 = vld [vmem:[#allocation8 + $0x40] sm:$0xf]
        %v5488 = vld [vmem:[#allocation8 + $0x44] sm:$0xf]
        %v5489 = vld [vmem:[#allocation8 + $0x48] sm:$0xf]
        %v5490 = vld [vmem:[#allocation8 + $0x4c] sm:$0xf]
        %v5491 = vld [vmem:[#allocation8 + $0x50] sm:$0xf]
        %v5492 = vld [vmem:[#allocation8 + $0x54] sm:$0xf]
        %v5493 = vld [vmem:[#allocation8 + $0x58] sm:$0xf]
        %v5494 = vld [vmem:[#allocation8 + $0x5c] sm:$0xf]
        %v5495 = vld [vmem:[#allocation8 + $0x60] sm:$0xf]
        %v5496 = vld [vmem:[#allocation8 + $0x64] sm:$0xf]
        %v5497 = vld [vmem:[#allocation8 + $0x68] sm:$0xf]
        %v5498 = vld [vmem:[#allocation8 + $0x6c] sm:$0xf]
        %v5499 = vld [vmem:[#allocation8 + $0x70] sm:$0xf]
        %v5500 = vld [vmem:[#allocation8 + $0x74] sm:$0xf]
        %v5501 = vld [vmem:[#allocation8 + $0x78] sm:$0xf]
        %v5502 = vld [vmem:[#allocation8 + $0x7c] sm:$0xf]
        %v5503 = vld [vmem:[%s6] sm:$0x1]
        %v5505 = vlaneseq
        %v5506 = vshrl.u32 %v5505, 7
        %v5507 = vsub.s32 0, %v5506
        %v5508 = vrot.slane %v5503, %v5507
        %v5542 = vunpack.c.l.b16 %v5471
        %v5543 = vunpack.c.l.b16 %v5472
        %v5544 = vunpack.c.l.b16 %v5473
        %v5545 = vunpack.c.l.b16 %v5474
        %v5546 = vunpack.c.l.b16 %v5475
        %v5547 = vunpack.c.l.b16 %v5476
        %v5548 = vunpack.c.l.b16 %v5477
        %v5549 = vunpack.c.l.b16 %v5478
        %v5550 = vunpack.c.l.b16 %v5479
        %v5551 = vunpack.c.l.b16 %v5480
        %v5552 = vunpack.c.l.b16 %v5481
        %v5553 = vunpack.c.l.b16 %v5482
        %v5554 = vunpack.c.l.b16 %v5483
        %v5555 = vunpack.c.l.b16 %v5484
        %v5556 = vunpack.c.l.b16 %v5485
        %v5557 = vunpack.c.l.b16 %v5486
        %v5558 = vunpack.c.l.b16 %v5487
        %v5559 = vunpack.c.l.b16 %v5488
        %v5560 = vunpack.c.l.b16 %v5489
        %v5561 = vunpack.c.l.b16 %v5490
        %v5562 = vunpack.c.l.b16 %v5491
        %v5563 = vunpack.c.l.b16 %v5492
        %v5564 = vunpack.c.l.b16 %v5493
        %v5565 = vunpack.c.l.b16 %v5494
        %v5566 = vunpack.c.l.b16 %v5495
        %v5567 = vunpack.c.l.b16 %v5496
        %v5568 = vunpack.c.l.b16 %v5497
        %v5569 = vunpack.c.l.b16 %v5498
        %v5570 = vunpack.c.l.b16 %v5499
        %v5571 = vunpack.c.l.b16 %v5500
        %v5572 = vunpack.c.l.b16 %v5501
        %v5573 = vunpack.c.l.b16 %v5502
        %v5574 = vpack.c.b16 %v5543, %v5542
        %v5575 = vpack.c.b16 %v5545, %v5544
        %v5576 = vpack.c.b16 %v5547, %v5546
        %v5577 = vpack.c.b16 %v5549, %v5548
        %v5578 = vpack.c.b16 %v5551, %v5550
        %v5579 = vpack.c.b16 %v5553, %v5552
        %v5580 = vpack.c.b16 %v5555, %v5554
        %v5581 = vpack.c.b16 %v5557, %v5556
        %v5582 = vpack.c.b16 %v5559, %v5558
        %v5583 = vpack.c.b16 %v5561, %v5560
        %v5584 = vpack.c.b16 %v5563, %v5562
        %v5585 = vpack.c.b16 %v5565, %v5564
        %v5586 = vpack.c.b16 %v5567, %v5566
        %v5587 = vpack.c.b16 %v5569, %v5568
        %v5588 = vpack.c.b16 %v5571, %v5570
        %v5589 = vpack.c.b16 %v5573, %v5572
        %5606 = vmatprep.subr.bf16.mxu0 0
        %5607 = vmatpush1.bf16.msra.mxu0 %v5574
        %5608 = vmatprep.subr.bf16.mxu0 0
        %5609 = vmatpush1.bf16.msra.mxu0 %v5575
        %5610 = vmatprep.subr.bf16.mxu0 0
        %5611 = vmatpush1.bf16.msra.mxu0 %v5576
        %5612 = vmatprep.subr.bf16.mxu0 0
        %5613 = vmatpush1.bf16.msra.mxu0 %v5577
        %5614 = vmatprep.subr.bf16.mxu0 0
        %5615 = vmatpush1.bf16.msra.mxu0 %v5578
        %5616 = vmatprep.subr.bf16.mxu0 0
        %5617 = vmatpush1.bf16.msra.mxu0 %v5579
        %5618 = vmatprep.subr.bf16.mxu0 0
        %5619 = vmatpush1.bf16.msra.mxu0 %v5580
        %5620 = vmatprep.subr.bf16.mxu0 0
        %5621 = vmatpush1.bf16.msra.mxu0 %v5581
        %5622 = vmatprep.subr.bf16.mxu0 0
        %5623 = vmatpush1.bf16.msra.mxu0 %v5582
        %5624 = vmatprep.subr.bf16.mxu0 0
        %5625 = vmatpush1.bf16.msra.mxu0 %v5583
        %5626 = vmatprep.subr.bf16.mxu0 0
        %5627 = vmatpush1.bf16.msra.mxu0 %v5584
        %5628 = vmatprep.subr.bf16.mxu0 0
        %5629 = vmatpush1.bf16.msra.mxu0 %v5585
        %5630 = vmatprep.subr.bf16.mxu0 0
        %5631 = vmatpush1.bf16.msra.mxu0 %v5586
        %5632 = vmatprep.subr.bf16.mxu0 0
        %5633 = vmatpush1.bf16.msra.mxu0 %v5587
        %5634 = vmatprep.subr.bf16.mxu0 0
        %5635 = vmatpush1.bf16.msra.mxu0 %v5588
        %5636 = vmatprep.subr.bf16.mxu0 0
        %5637 = vmatpush1.bf16.msra.mxu0 %v5589
        %5638 = vmatprep.mubr.bf16.mxu0 %v5440
        %5639 = vmatmul.mubr.bf16.gmra.mrb[0].mxu0 %v5439
        %v5640 = vpop.f32.mrb[0].mxu0
        %v5641 = vadd.f32 %v5508, %v5640
        %v5642 = vpop.f32.mrb[0].mxu0
        %v5643 = vpop.f32.mrb[0].mxu0
        %v5644 = vadd.f32 %v5508, %v5643
        %v5645 = vpop.f32.mrb[0].mxu0
        %5646 = vmatprep.mubr.bf16.mxu0 %v5442
        %5647 = vmatmul.mubr.bf16.gmra.mrb[0].mxu0 %v5441
        %v5648 = vpop.f32.mrb[0].mxu0
        %v5649 = vadd.f32 %v5508, %v5648
        %v5650 = vpop.f32.mrb[0].mxu0
        %v5651 = vpop.f32.mrb[0].mxu0
        %v5652 = vadd.f32 %v5508, %v5651
        %v5653 = vpop.f32.mrb[0].mxu0
        %5654 = vmatprep.mubr.bf16.mxu0 %v5444
        %5655 = vmatmul.mubr.bf16.gmra.mrb[0].mxu0 %v5443
        %v5656 = vpop.f32.mrb[0].mxu0
        %v5657 = vadd.f32 %v5508, %v5656
        %v5658 = vpop.f32.mrb[0].mxu0
        %v5659 = vpop.f32.mrb[0].mxu0
        %v5660 = vadd.f32 %v5508, %v5659
        %v5661 = vpop.f32.mrb[0].mxu0
        %5662 = vmatprep.mubr.bf16.mxu0 %v5446
        %5663 = vmatmul.mubr.bf16.gmra.mrb[0].mxu0 %v5445
        %v5664 = vpop.f32.mrb[0].mxu0
        %v5665 = vadd.f32 %v5508, %v5664
        %v5666 = vpop.f32.mrb[0].mxu0
        %v5667 = vpop.f32.mrb[0].mxu0
        %v5668 = vadd.f32 %v5508, %v5667
        %v5669 = vpop.f32.mrb[0].mxu0
        %5670 = vmatprep.mubr.bf16.mxu0 %v5448
        %5671 = vmatmul.mubr.bf16.gmra.mrb[0].mxu0 %v5447
        %v5672 = vpop.f32.mrb[0].mxu0
        %v5673 = vadd.f32 %v5508, %v5672
        %v5674 = vpop.f32.mrb[0].mxu0
        %v5675 = vpop.f32.mrb[0].mxu0
        %v5676 = vadd.f32 %v5508, %v5675
        %v5677 = vpop.f32.mrb[0].mxu0
        %5678 = vmatprep.mubr.bf16.mxu0 %v5450
        %5679 = vmatmul.mubr.bf16.gmra.mrb[0].mxu0 %v5449
        %v5680 = vpop.f32.mrb[0].mxu0
        %v5681 = vadd.f32 %v5508, %v5680
        %v5682 = vpop.f32.mrb[0].mxu0
        %v5683 = vpop.f32.mrb[0].mxu0
        %v5684 = vadd.f32 %v5508, %v5683
        %v5685 = vpop.f32.mrb[0].mxu0
        %5686 = vmatprep.mubr.bf16.mxu0 %v5452
        %5687 = vmatmul.mubr.bf16.gmra.mrb[0].mxu0 %v5451
        %v5688 = vpop.f32.mrb[0].mxu0
        %v5689 = vadd.f32 %v5508, %v5688
        %v5690 = vpop.f32.mrb[0].mxu0
        %v5691 = vpop.f32.mrb[0].mxu0
        %v5692 = vadd.f32 %v5508, %v5691
        %v5693 = vpop.f32.mrb[0].mxu0
        %5694 = vmatprep.mubr.bf16.mxu0 %v5454
        %5695 = vmatmul.mubr.bf16.gmra.mrb[0].mxu0 %v5453
        %v5696 = vpop.f32.mrb[0].mxu0
        %v5697 = vadd.f32 %v5508, %v5696
        %v5698 = vpop.f32.mrb[0].mxu0
        %v5699 = vpop.f32.mrb[0].mxu0
        %v5700 = vadd.f32 %v5508, %v5699
        %v5701 = vpop.f32.mrb[0].mxu0
        %5702 = vmatprep.mubr.bf16.mxu0 %v5456
        %5703 = vmatmul.mubr.bf16.gmra.mrb[0].mxu0 %v5455
        %v5704 = vpop.f32.mrb[0].mxu0
        %v5705 = vadd.f32 %v5508, %v5704
        %v5706 = vpop.f32.mrb[0].mxu0
        %v5707 = vpop.f32.mrb[0].mxu0
        %v5708 = vadd.f32 %v5508, %v5707
        %v5709 = vpop.f32.mrb[0].mxu0
        %5710 = vmatprep.mubr.bf16.mxu0 %v5458
        %5711 = vmatmul.mubr.bf16.gmra.mrb[0].mxu0 %v5457
        %v5712 = vpop.f32.mrb[0].mxu0
        %v5713 = vadd.f32 %v5508, %v5712
        %v5714 = vpop.f32.mrb[0].mxu0
        %v5715 = vpop.f32.mrb[0].mxu0
        %v5716 = vadd.f32 %v5508, %v5715
        %v5717 = vpop.f32.mrb[0].mxu0
        %5718 = vmatprep.mubr.bf16.mxu0 %v5460
        %5719 = vmatmul.mubr.bf16.gmra.mrb[0].mxu0 %v5459
        %v5720 = vpop.f32.mrb[0].mxu0
        %v5721 = vadd.f32 %v5508, %v5720
        %v5722 = vpop.f32.mrb[0].mxu0
        %v5723 = vpop.f32.mrb[0].mxu0
        %v5724 = vadd.f32 %v5508, %v5723
        %v5725 = vpop.f32.mrb[0].mxu0
        %5726 = vmatprep.mubr.bf16.mxu0 %v5462
        %5727 = vmatmul.mubr.bf16.gmra.mrb[0].mxu0 %v5461
        %v5728 = vpop.f32.mrb[0].mxu0
        %v5729 = vadd.f32 %v5508, %v5728
        %v5730 = vpop.f32.mrb[0].mxu0
        %v5731 = vpop.f32.mrb[0].mxu0
        %v5732 = vadd.f32 %v5508, %v5731
        %v5733 = vpop.f32.mrb[0].mxu0
        %5734 = vmatprep.mubr.bf16.mxu0 %v5464
        %5735 = vmatmul.mubr.bf16.gmra.mrb[0].mxu0 %v5463
        %v5736 = vpop.f32.mrb[0].mxu0
        %v5737 = vadd.f32 %v5508, %v5736
        %v5738 = vpop.f32.mrb[0].mxu0
        %v5739 = vpop.f32.mrb[0].mxu0
        %v5740 = vadd.f32 %v5508, %v5739
        %v5741 = vpop.f32.mrb[0].mxu0
        %5742 = vmatprep.mubr.bf16.mxu0 %v5466
        %5743 = vmatmul.mubr.bf16.gmra.mrb[0].mxu0 %v5465
        %v5744 = vpop.f32.mrb[0].mxu0
        %v5745 = vadd.f32 %v5508, %v5744
        %v5746 = vpop.f32.mrb[0].mxu0
        %v5747 = vpop.f32.mrb[0].mxu0
        %v5748 = vadd.f32 %v5508, %v5747
        %v5749 = vpop.f32.mrb[0].mxu0
        %5750 = vmatprep.mubr.bf16.mxu0 %v5468
        %5751 = vmatmul.mubr.bf16.gmra.mrb[0].mxu0 %v5467
        %v5752 = vpop.f32.mrb[0].mxu0
        %v5753 = vadd.f32 %v5508, %v5752
        %v5754 = vpop.f32.mrb[0].mxu0
        %v5755 = vpop.f32.mrb[0].mxu0
        %v5756 = vadd.f32 %v5508, %v5755
        %v5757 = vpop.f32.mrb[0].mxu0
        %5758 = vmatprep.mubr.bf16.mxu0 %v5470
        %5759 = vmatmul.mubr.bf16.gmra.mrb[0].mxu0 %v5469
        %v5760 = vpop.f32.mrb[0].mxu0
        %v5761 = vadd.f32 %v5508, %v5760
        %v5762 = vpop.f32.mrb[0].mxu0
        %v5763 = vpop.f32.mrb[0].mxu0
        %v5764 = vadd.f32 %v5508, %v5763
        %v5765 = vpop.f32.mrb[0].mxu0
        %5766 = vdwg.mxu0
        %vm5767 = vcmp.gt.f32.partialorder %v5641, 0.0
        %vm5768 = vcmp.gt.f32.partialorder %v5644, 0.0
        %vm5769 = vcmp.gt.f32.partialorder %v5649, 0.0
        %vm5770 = vcmp.gt.f32.partialorder %v5652, 0.0
        %vm5771 = vcmp.gt.f32.partialorder %v5657, 0.0
        %vm5772 = vcmp.gt.f32.partialorder %v5660, 0.0
        %vm5773 = vcmp.gt.f32.partialorder %v5665, 0.0
        %vm5774 = vcmp.gt.f32.partialorder %v5668, 0.0
        %vm5775 = vcmp.gt.f32.partialorder %v5673, 0.0
        %vm5776 = vcmp.gt.f32.partialorder %v5676, 0.0
        %vm5777 = vcmp.gt.f32.partialorder %v5681, 0.0
        %vm5778 = vcmp.gt.f32.partialorder %v5684, 0.0
        %vm5779 = vcmp.gt.f32.partialorder %v5689, 0.0
        %vm5780 = vcmp.gt.f32.partialorder %v5692, 0.0
        %vm5781 = vcmp.gt.f32.partialorder %v5697, 0.0
        %vm5782 = vcmp.gt.f32.partialorder %v5700, 0.0
        %vm5783 = vcmp.gt.f32.partialorder %v5705, 0.0
        %vm5784 = vcmp.gt.f32.partialorder %v5708, 0.0
        %vm5785 = vcmp.gt.f32.partialorder %v5713, 0.0
        %vm5786 = vcmp.gt.f32.partialorder %v5716, 0.0
        %vm5787 = vcmp.gt.f32.partialorder %v5721, 0.0
        %vm5788 = vcmp.gt.f32.partialorder %v5724, 0.0
        %vm5789 = vcmp.gt.f32.partialorder %v5729, 0.0
        %vm5790 = vcmp.gt.f32.partialorder %v5732, 0.0
        %vm5791 = vcmp.gt.f32.partialorder %v5737, 0.0
        %vm5792 = vcmp.gt.f32.partialorder %v5740, 0.0
        %vm5793 = vcmp.gt.f32.partialorder %v5745, 0.0
        %vm5794 = vcmp.gt.f32.partialorder %v5748, 0.0
        %vm5795 = vcmp.gt.f32.partialorder %v5753, 0.0
        %vm5796 = vcmp.gt.f32.partialorder %v5756, 0.0
        %vm5797 = vcmp.gt.f32.partialorder %v5761, 0.0
        %vm5798 = vcmp.gt.f32.partialorder %v5764, 0.0
        %v5799 = vmul.f32 %v5641, 0.2
        %v5800 = vmul.f32 %v5644, 0.2
        %v5801 = vmul.f32 %v5649, 0.2
        %v5802 = vmul.f32 %v5652, 0.2
        %v5803 = vmul.f32 %v5657, 0.2
        %v5804 = vmul.f32 %v5660, 0.2
        %v5805 = vmul.f32 %v5665, 0.2
        %v5806 = vmul.f32 %v5668, 0.2
        %v5807 = vmul.f32 %v5673, 0.2
        %v5808 = vmul.f32 %v5676, 0.2
        %v5809 = vmul.f32 %v5681, 0.2
        %v5810 = vmul.f32 %v5684, 0.2
        %v5811 = vmul.f32 %v5689, 0.2
        %v5812 = vmul.f32 %v5692, 0.2
        %v5813 = vmul.f32 %v5697, 0.2
        %v5814 = vmul.f32 %v5700, 0.2
        %v5815 = vmul.f32 %v5705, 0.2
        %v5816 = vmul.f32 %v5708, 0.2
        %v5817 = vmul.f32 %v5713, 0.2
        %v5818 = vmul.f32 %v5716, 0.2
        %v5819 = vmul.f32 %v5721, 0.2
        %v5820 = vmul.f32 %v5724, 0.2
        %v5821 = vmul.f32 %v5729, 0.2
        %v5822 = vmul.f32 %v5732, 0.2
        %v5823 = vmul.f32 %v5737, 0.2
        %v5824 = vmul.f32 %v5740, 0.2
        %v5825 = vmul.f32 %v5745, 0.2
        %v5826 = vmul.f32 %v5748, 0.2
        %v5827 = vmul.f32 %v5753, 0.2
        %v5828 = vmul.f32 %v5756, 0.2
        %v5829 = vmul.f32 %v5761, 0.2
        %v5830 = vmul.f32 %v5764, 0.2
        %v5831 = vsel %vm5767, %v5641, %v5799
        %v5832 = vsel %vm5768, %v5644, %v5800
        %v5833 = vsel %vm5769, %v5649, %v5801
        %v5834 = vsel %vm5770, %v5652, %v5802
        %v5835 = vsel %vm5771, %v5657, %v5803
        %v5836 = vsel %vm5772, %v5660, %v5804
        %v5837 = vsel %vm5773, %v5665, %v5805
        %v5838 = vsel %vm5774, %v5668, %v5806
        %v5839 = vsel %vm5775, %v5673, %v5807
        %v5840 = vsel %vm5776, %v5676, %v5808
        %v5841 = vsel %vm5777, %v5681, %v5809
        %v5842 = vsel %vm5778, %v5684, %v5810
        %v5843 = vsel %vm5779, %v5689, %v5811
        %v5844 = vsel %vm5780, %v5692, %v5812
        %v5845 = vsel %vm5781, %v5697, %v5813
        %v5846 = vsel %vm5782, %v5700, %v5814
        %v5847 = vsel %vm5783, %v5705, %v5815
        %v5848 = vsel %vm5784, %v5708, %v5816
        %v5849 = vsel %vm5785, %v5713, %v5817
        %v5850 = vsel %vm5786, %v5716, %v5818
        %v5851 = vsel %vm5787, %v5721, %v5819
        %v5852 = vsel %vm5788, %v5724, %v5820
        %v5853 = vsel %vm5789, %v5729, %v5821
        %v5854 = vsel %vm5790, %v5732, %v5822
        %v5855 = vsel %vm5791, %v5737, %v5823
        %v5856 = vsel %vm5792, %v5740, %v5824
        %v5857 = vsel %vm5793, %v5745, %v5825
        %v5858 = vsel %vm5794, %v5748, %v5826
        %v5859 = vsel %vm5795, %v5753, %v5827
        %v5860 = vsel %vm5796, %v5756, %v5828
        %v5861 = vsel %vm5797, %v5761, %v5829
        %v5862 = vsel %vm5798, %v5764, %v5830
        %v5863 = vpack.c.bf16 %v5832, %v5831
        %v5864 = vpack.c.bf16 %v5834, %v5833
        %v5865 = vpack.c.bf16 %v5836, %v5835
        %v5866 = vpack.c.bf16 %v5838, %v5837
        %v5867 = vpack.c.bf16 %v5840, %v5839
        %v5868 = vpack.c.bf16 %v5842, %v5841
        %v5869 = vpack.c.bf16 %v5844, %v5843
        %v5870 = vpack.c.bf16 %v5846, %v5845
        %v5871 = vpack.c.bf16 %v5848, %v5847
        %v5872 = vpack.c.bf16 %v5850, %v5849
        %v5873 = vpack.c.bf16 %v5852, %v5851
        %v5874 = vpack.c.bf16 %v5854, %v5853
        %v5875 = vpack.c.bf16 %v5856, %v5855
        %v5876 = vpack.c.bf16 %v5858, %v5857
        %v5877 = vpack.c.bf16 %v5860, %v5859
        %v5878 = vpack.c.bf16 %v5862, %v5861
        %v5879 = vld [vmem:[%s7] sm:$0xf]
        %v5880 = vld [vmem:[%s7 + $0x4] sm:$0xf]
        %v5881 = vld [vmem:[%s7 + $0x8] sm:$0xf]
        %v5882 = vld [vmem:[%s7 + $0xc] sm:$0xf]
        %v5883 = vld [vmem:[%s7 + $0x10] sm:$0xf]
        %v5884 = vld [vmem:[%s7 + $0x14] sm:$0xf]
        %v5885 = vld [vmem:[%s7 + $0x18] sm:$0xf]
        %v5886 = vld [vmem:[%s7 + $0x1c] sm:$0xf]
        %v5887 = vld [vmem:[%s7 + $0x20] sm:$0xf]
        %v5888 = vld [vmem:[%s7 + $0x24] sm:$0xf]
        %v5889 = vld [vmem:[%s7 + $0x28] sm:$0xf]
        %v5890 = vld [vmem:[%s7 + $0x2c] sm:$0xf]
        %v5891 = vld [vmem:[%s7 + $0x30] sm:$0xf]
        %v5892 = vld [vmem:[%s7 + $0x34] sm:$0xf]
        %v5893 = vld [vmem:[%s7 + $0x38] sm:$0xf]
        %v5894 = vld [vmem:[%s7 + $0x3c] sm:$0xf]
        %v5895 = vld [vmem:[#allocation2] sm:$0x1]
        %v5897 = vlaneseq
        %v5898 = vshrl.u32 %v5897, 7
        %v5899 = vsub.s32 0, %v5898
        %v5900 = vrot.slane %v5895, %v5899
        %v5918 = vunpack.c.l.b16 %v5879
        %v5919 = vunpack.c.l.b16 %v5880
        %v5920 = vunpack.c.l.b16 %v5881
        %v5921 = vunpack.c.l.b16 %v5882
        %v5922 = vunpack.c.l.b16 %v5883
        %v5923 = vunpack.c.l.b16 %v5884
        %v5924 = vunpack.c.l.b16 %v5885
        %v5925 = vunpack.c.l.b16 %v5886
        %v5926 = vunpack.c.l.b16 %v5887
        %v5927 = vunpack.c.l.b16 %v5888
        %v5928 = vunpack.c.l.b16 %v5889
        %v5929 = vunpack.c.l.b16 %v5890
        %v5930 = vunpack.c.l.b16 %v5891
        %v5931 = vunpack.c.l.b16 %v5892
        %v5932 = vunpack.c.l.b16 %v5893
        %v5933 = vunpack.c.l.b16 %v5894
        %v5934 = vpack.c.b16 %v5919, %v5918
        %v5935 = vpack.c.b16 %v5921, %v5920
        %v5936 = vpack.c.b16 %v5923, %v5922
        %v5937 = vpack.c.b16 %v5925, %v5924
        %v5938 = vpack.c.b16 %v5927, %v5926
        %v5939 = vpack.c.b16 %v5929, %v5928
        %v5940 = vpack.c.b16 %v5931, %v5930
        %v5941 = vpack.c.b16 %v5933, %v5932
        %5950 = vmatprep.subr.bf16.mxu0 0
        %5951 = vmatpush1.bf16.msra.mxu0 %v5934
        %5952 = vmatprep.subr.bf16.mxu0 0
        %5953 = vmatpush1.bf16.msra.mxu0 %v5935
        %5954 = vmatprep.subr.bf16.mxu0 0
        %5955 = vmatpush1.bf16.msra.mxu0 %v5936
        %5956 = vmatprep.subr.bf16.mxu0 0
        %5957 = vmatpush1.bf16.msra.mxu0 %v5937
        %5958 = vmatprep.subr.bf16.mxu0 0
        %5959 = vmatpush1.bf16.msra.mxu0 %v5938
        %5960 = vmatprep.subr.bf16.mxu0 0
        %5961 = vmatpush1.bf16.msra.mxu0 %v5939
        %5962 = vmatprep.subr.bf16.mxu0 0
        %5963 = vmatpush1.bf16.msra.mxu0 %v5940
        %5964 = vmatprep.subr.bf16.mxu0 0
        %5965 = vmatpush1.bf16.msra.mxu0 %v5941
        %5966 = vmatprep.subr.bf16.mxu0 0
        %5967 = vmatpush1.bf16.msra.mxu0 0
        %5968 = vmatprep.subr.bf16.mxu0 0
        %5969 = vmatpush1.bf16.msra.mxu0 0
        %5970 = vmatprep.subr.bf16.mxu0 0
        %5971 = vmatpush1.bf16.msra.mxu0 0
        %5972 = vmatprep.subr.bf16.mxu0 0
        %5973 = vmatpush1.bf16.msra.mxu0 0
        %5974 = vmatprep.subr.bf16.mxu0 0
        %5975 = vmatpush1.bf16.msra.mxu0 0
        %5976 = vmatprep.subr.bf16.mxu0 0
        %5977 = vmatpush1.bf16.msra.mxu0 0
        %5978 = vmatprep.subr.bf16.mxu0 0
        %5979 = vmatpush1.bf16.msra.mxu0 0
        %5980 = vmatprep.subr.bf16.mxu0 0
        %5981 = vmatpush1.bf16.msra.mxu0 0
        %5982 = vmatprep.mubr.bf16.mxu0 0
        %5983 = vmatmul.mubr.bf16.gmra.mrb[0].mxu0 %v5863
        %v5984 = vpop.f32.mrb[0].mxu0
        %v5985 = vadd.f32 %v5900, %v5984
        %v5986 = vpop.f32.mrb[0].mxu0
        %v5987 = vpop.f32.mrb[0].mxu0
        %v5988 = vadd.f32 %v5900, %v5987
        %v5989 = vpop.f32.mrb[0].mxu0
        %5990 = vmatprep.mubr.bf16.mxu0 0
        %5991 = vmatmul.mubr.bf16.gmra.mrb[0].mxu0 %v5864
        %v5992 = vpop.f32.mrb[0].mxu0
        %v5993 = vadd.f32 %v5900, %v5992
        %v5994 = vpop.f32.mrb[0].mxu0
        %v5995 = vpop.f32.mrb[0].mxu0
        %v5996 = vadd.f32 %v5900, %v5995
        %v5997 = vpop.f32.mrb[0].mxu0
        %5998 = vmatprep.mubr.bf16.mxu0 0
        %5999 = vmatmul.mubr.bf16.gmra.mrb[0].mxu0 %v5865
        %v6000 = vpop.f32.mrb[0].mxu0
        %v6001 = vadd.f32 %v5900, %v6000
        %v6002 = vpop.f32.mrb[0].mxu0
        %v6003 = vpop.f32.mrb[0].mxu0
        %v6004 = vadd.f32 %v5900, %v6003
        %v6005 = vpop.f32.mrb[0].mxu0
        %6006 = vmatprep.mubr.bf16.mxu0 0
        %6007 = vmatmul.mubr.bf16.gmra.mrb[0].mxu0 %v5866
        %v6008 = vpop.f32.mrb[0].mxu0
        %v6009 = vadd.f32 %v5900, %v6008
        %v6010 = vpop.f32.mrb[0].mxu0
        %v6011 = vpop.f32.mrb[0].mxu0
        %v6012 = vadd.f32 %v5900, %v6011
        %v6013 = vpop.f32.mrb[0].mxu0
        %6014 = vmatprep.mubr.bf16.mxu0 0
        %6015 = vmatmul.mubr.bf16.gmra.mrb[0].mxu0 %v5867
        %v6016 = vpop.f32.mrb[0].mxu0
        %v6017 = vadd.f32 %v5900, %v6016
        %v6018 = vpop.f32.mrb[0].mxu0
        %v6019 = vpop.f32.mrb[0].mxu0
        %v6020 = vadd.f32 %v5900, %v6019
        %v6021 = vpop.f32.mrb[0].mxu0
        %6022 = vmatprep.mubr.bf16.mxu0 0
        %6023 = vmatmul.mubr.bf16.gmra.mrb[0].mxu0 %v5868
        %v6024 = vpop.f32.mrb[0].mxu0
        %v6025 = vadd.f32 %v5900, %v6024
        %v6026 = vpop.f32.mrb[0].mxu0
        %v6027 = vpop.f32.mrb[0].mxu0
        %v6028 = vadd.f32 %v5900, %v6027
        %v6029 = vpop.f32.mrb[0].mxu0
        %6030 = vmatprep.mubr.bf16.mxu0 0
        %6031 = vmatmul.mubr.bf16.gmra.mrb[0].mxu0 %v5869
        %v6032 = vpop.f32.mrb[0].mxu0
        %v6033 = vadd.f32 %v5900, %v6032
        %v6034 = vpop.f32.mrb[0].mxu0
        %v6035 = vpop.f32.mrb[0].mxu0
        %v6036 = vadd.f32 %v5900, %v6035
        %v6037 = vpop.f32.mrb[0].mxu0
        %6038 = vmatprep.mubr.bf16.mxu0 0
        %6039 = vmatmul.mubr.bf16.gmra.mrb[0].mxu0 %v5870
        %v6040 = vpop.f32.mrb[0].mxu0
        %v6041 = vadd.f32 %v5900, %v6040
        %v6042 = vpop.f32.mrb[0].mxu0
        %v6043 = vpop.f32.mrb[0].mxu0
        %v6044 = vadd.f32 %v5900, %v6043
        %v6045 = vpop.f32.mrb[0].mxu0
        %6046 = vmatprep.mubr.bf16.mxu0 0
        %6047 = vmatmul.mubr.bf16.gmra.mrb[0].mxu0 %v5871
        %v6048 = vpop.f32.mrb[0].mxu0
        %v6049 = vadd.f32 %v5900, %v6048
        %v6050 = vpop.f32.mrb[0].mxu0
        %v6051 = vpop.f32.mrb[0].mxu0
        %v6052 = vadd.f32 %v5900, %v6051
        %v6053 = vpop.f32.mrb[0].mxu0
        %6054 = vmatprep.mubr.bf16.mxu0 0
        %6055 = vmatmul.mubr.bf16.gmra.mrb[0].mxu0 %v5872
        %v6056 = vpop.f32.mrb[0].mxu0
        %v6057 = vadd.f32 %v5900, %v6056
        %v6058 = vpop.f32.mrb[0].mxu0
        %v6059 = vpop.f32.mrb[0].mxu0
        %v6060 = vadd.f32 %v5900, %v6059
        %v6061 = vpop.f32.mrb[0].mxu0
        %6062 = vmatprep.mubr.bf16.mxu0 0
        %6063 = vmatmul.mubr.bf16.gmra.mrb[0].mxu0 %v5873
        %v6064 = vpop.f32.mrb[0].mxu0
        %v6065 = vadd.f32 %v5900, %v6064
        %v6066 = vpop.f32.mrb[0].mxu0
        %v6067 = vpop.f32.mrb[0].mxu0
        %v6068 = vadd.f32 %v5900, %v6067
        %v6069 = vpop.f32.mrb[0].mxu0
        %6070 = vmatprep.mubr.bf16.mxu0 0
        %6071 = vmatmul.mubr.bf16.gmra.mrb[0].mxu0 %v5874
        %v6072 = vpop.f32.mrb[0].mxu0
        %v6073 = vadd.f32 %v5900, %v6072
        %v6074 = vpop.f32.mrb[0].mxu0
        %v6075 = vpop.f32.mrb[0].mxu0
        %v6076 = vadd.f32 %v5900, %v6075
        %v6077 = vpop.f32.mrb[0].mxu0
        %6078 = vmatprep.mubr.bf16.mxu0 0
        %6079 = vmatmul.mubr.bf16.gmra.mrb[0].mxu0 %v5875
        %v6080 = vpop.f32.mrb[0].mxu0
        %v6081 = vadd.f32 %v5900, %v6080
        %v6082 = vpop.f32.mrb[0].mxu0
        %v6083 = vpop.f32.mrb[0].mxu0
        %v6084 = vadd.f32 %v5900, %v6083
        %v6085 = vpop.f32.mrb[0].mxu0
        %6086 = vmatprep.mubr.bf16.mxu0 0
        %6087 = vmatmul.mubr.bf16.gmra.mrb[0].mxu0 %v5876
        %v6088 = vpop.f32.mrb[0].mxu0
        %v6089 = vadd.f32 %v5900, %v6088
        %v6090 = vpop.f32.mrb[0].mxu0
        %v6091 = vpop.f32.mrb[0].mxu0
        %v6092 = vadd.f32 %v5900, %v6091
        %v6093 = vpop.f32.mrb[0].mxu0
        %6094 = vmatprep.mubr.bf16.mxu0 0
        %6095 = vmatmul.mubr.bf16.gmra.mrb[0].mxu0 %v5877
        %v6096 = vpop.f32.mrb[0].mxu0
        %v6097 = vadd.f32 %v5900, %v6096
        %v6098 = vpop.f32.mrb[0].mxu0
        %v6099 = vpop.f32.mrb[0].mxu0
        %v6100 = vadd.f32 %v5900, %v6099
        %v6101 = vpop.f32.mrb[0].mxu0
        %6102 = vmatprep.mubr.bf16.mxu0 0
        %6103 = vmatmul.mubr.bf16.gmra.mrb[0].mxu0 %v5878
        %v6104 = vpop.f32.mrb[0].mxu0
        %v6105 = vadd.f32 %v5900, %v6104
        %v6106 = vpop.f32.mrb[0].mxu0
        %v6107 = vpop.f32.mrb[0].mxu0
        %v6108 = vadd.f32 %v5900, %v6107
        %v6109 = vpop.f32.mrb[0].mxu0
        %6110 = vdwg.mxu0
        %v6111 = vsub.f32 0.0, %v5985
        %v6112 = vsub.f32 0.0, %v5988
        %v6113 = vsub.f32 0.0, %v5993
        %v6114 = vsub.f32 0.0, %v5996
        %v6115 = vsub.f32 0.0, %v6001
        %v6116 = vsub.f32 0.0, %v6004
        %v6117 = vsub.f32 0.0, %v6009
        %v6118 = vsub.f32 0.0, %v6012
        %v6119 = vsub.f32 0.0, %v6017
        %v6120 = vsub.f32 0.0, %v6020
        %v6121 = vsub.f32 0.0, %v6025
        %v6122 = vsub.f32 0.0, %v6028
        %v6123 = vsub.f32 0.0, %v6033
        %v6124 = vsub.f32 0.0, %v6036
        %v6125 = vsub.f32 0.0, %v6041
        %v6126 = vsub.f32 0.0, %v6044
        %v6127 = vsub.f32 0.0, %v6049
        %v6128 = vsub.f32 0.0, %v6052
        %v6129 = vsub.f32 0.0, %v6057
        %v6130 = vsub.f32 0.0, %v6060
        %v6131 = vsub.f32 0.0, %v6065
        %v6132 = vsub.f32 0.0, %v6068
        %v6133 = vsub.f32 0.0, %v6073
        %v6134 = vsub.f32 0.0, %v6076
        %v6135 = vsub.f32 0.0, %v6081
        %v6136 = vsub.f32 0.0, %v6084
        %v6137 = vsub.f32 0.0, %v6089
        %v6138 = vsub.f32 0.0, %v6092
        %v6139 = vsub.f32 0.0, %v6097
        %v6140 = vsub.f32 0.0, %v6100
        %v6141 = vsub.f32 0.0, %v6105
        %v6142 = vsub.f32 0.0, %v6108
        %v6143 = vmul.f32 %v6111, 1.442695
        %v6144 = vpow.pop %v6143
        %v6145 = vmul.f32 %v6112, 1.442695
        %v6146 = vpow.pop %v6145
        %v6147 = vmul.f32 %v6113, 1.442695
        %v6148 = vpow.pop %v6147
        %v6149 = vmul.f32 %v6114, 1.442695
        %v6150 = vpow.pop %v6149
        %v6151 = vmul.f32 %v6115, 1.442695
        %v6152 = vpow.pop %v6151
        %v6153 = vmul.f32 %v6116, 1.442695
        %v6154 = vpow.pop %v6153
        %v6155 = vmul.f32 %v6117, 1.442695
        %v6156 = vpow.pop %v6155
        %v6157 = vmul.f32 %v6118, 1.442695
        %v6158 = vpow.pop %v6157
        %v6159 = vmul.f32 %v6119, 1.442695
        %v6160 = vpow.pop %v6159
        %v6161 = vmul.f32 %v6120, 1.442695
        %v6162 = vpow.pop %v6161
        %v6163 = vmul.f32 %v6121, 1.442695
        %v6164 = vpow.pop %v6163
        %v6165 = vmul.f32 %v6122, 1.442695
        %v6166 = vpow.pop %v6165
        %v6167 = vmul.f32 %v6123, 1.442695
        %v6168 = vpow.pop %v6167
        %v6169 = vmul.f32 %v6124, 1.442695
        %v6170 = vpow.pop %v6169
        %v6171 = vmul.f32 %v6125, 1.442695
        %v6172 = vpow.pop %v6171
        %v6173 = vmul.f32 %v6126, 1.442695
        %v6174 = vpow.pop %v6173
        %v6175 = vmul.f32 %v6127, 1.442695
        %v6176 = vpow.pop %v6175
        %v6177 = vmul.f32 %v6128, 1.442695
        %v6178 = vpow.pop %v6177
        %v6179 = vmul.f32 %v6129, 1.442695
        %v6180 = vpow.pop %v6179
        %v6181 = vmul.f32 %v6130, 1.442695
        %v6182 = vpow.pop %v6181
        %v6183 = vmul.f32 %v6131, 1.442695
        %v6184 = vpow.pop %v6183
        %v6185 = vmul.f32 %v6132, 1.442695
        %v6186 = vpow.pop %v6185
        %v6187 = vmul.f32 %v6133, 1.442695
        %v6188 = vpow.pop %v6187
        %v6189 = vmul.f32 %v6134, 1.442695
        %v6190 = vpow.pop %v6189
        %v6191 = vmul.f32 %v6135, 1.442695
        %v6192 = vpow.pop %v6191
        %v6193 = vmul.f32 %v6136, 1.442695
        %v6194 = vpow.pop %v6193
        %v6195 = vmul.f32 %v6137, 1.442695
        %v6196 = vpow.pop %v6195
        %v6197 = vmul.f32 %v6138, 1.442695
        %v6198 = vpow.pop %v6197
        %v6199 = vmul.f32 %v6139, 1.442695
        %v6200 = vpow.pop %v6199
        %v6201 = vmul.f32 %v6140, 1.442695
        %v6202 = vpow.pop %v6201
        %v6203 = vmul.f32 %v6141, 1.442695
        %v6204 = vpow.pop %v6203
        %v6205 = vmul.f32 %v6142, 1.442695
        %v6206 = vpow.pop %v6205
        %v6207 = vadd.f32 %v6144, 1.0
        %v6208 = vadd.f32 %v6146, 1.0
        %v6209 = vadd.f32 %v6148, 1.0
        %v6210 = vadd.f32 %v6150, 1.0
        %v6211 = vadd.f32 %v6152, 1.0
        %v6212 = vadd.f32 %v6154, 1.0
        %v6213 = vadd.f32 %v6156, 1.0
        %v6214 = vadd.f32 %v6158, 1.0
        %v6215 = vadd.f32 %v6160, 1.0
        %v6216 = vadd.f32 %v6162, 1.0
        %v6217 = vadd.f32 %v6164, 1.0
        %v6218 = vadd.f32 %v6166, 1.0
        %v6219 = vadd.f32 %v6168, 1.0
        %v6220 = vadd.f32 %v6170, 1.0
        %v6221 = vadd.f32 %v6172, 1.0
        %v6222 = vadd.f32 %v6174, 1.0
        %v6223 = vadd.f32 %v6176, 1.0
        %v6224 = vadd.f32 %v6178, 1.0
        %v6225 = vadd.f32 %v6180, 1.0
        %v6226 = vadd.f32 %v6182, 1.0
        %v6227 = vadd.f32 %v6184, 1.0
        %v6228 = vadd.f32 %v6186, 1.0
        %v6229 = vadd.f32 %v6188, 1.0
        %v6230 = vadd.f32 %v6190, 1.0
        %v6231 = vadd.f32 %v6192, 1.0
        %v6232 = vadd.f32 %v6194, 1.0
        %v6233 = vadd.f32 %v6196, 1.0
        %v6234 = vadd.f32 %v6198, 1.0
        %v6235 = vadd.f32 %v6200, 1.0
        %v6236 = vadd.f32 %v6202, 1.0
        %v6237 = vadd.f32 %v6204, 1.0
        %v6238 = vadd.f32 %v6206, 1.0
        %v6239 = vrcp.pop %v6207
        %v6240 = vrcp.pop %v6208
        %v6241 = vrcp.pop %v6209
        %v6242 = vrcp.pop %v6210
        %v6243 = vrcp.pop %v6211
        %v6244 = vrcp.pop %v6212
        %v6245 = vrcp.pop %v6213
        %v6246 = vrcp.pop %v6214
        %v6247 = vrcp.pop %v6215
        %v6248 = vrcp.pop %v6216
        %v6249 = vrcp.pop %v6217
        %v6250 = vrcp.pop %v6218
        %v6251 = vrcp.pop %v6219
        %v6252 = vrcp.pop %v6220
        %v6253 = vrcp.pop %v6221
        %v6254 = vrcp.pop %v6222
        %v6255 = vrcp.pop %v6223
        %v6256 = vrcp.pop %v6224
        %v6257 = vrcp.pop %v6225
        %v6258 = vrcp.pop %v6226
        %v6259 = vrcp.pop %v6227
        %v6260 = vrcp.pop %v6228
        %v6261 = vrcp.pop %v6229
        %v6262 = vrcp.pop %v6230
        %v6263 = vrcp.pop %v6231
        %v6264 = vrcp.pop %v6232
        %v6265 = vrcp.pop %v6233
        %v6266 = vrcp.pop %v6234
        %v6267 = vrcp.pop %v6235
        %v6268 = vrcp.pop %v6236
        %v6269 = vrcp.pop %v6237
        %v6270 = vrcp.pop %v6238
        %vm6271 = vcmask 7168
        %6272 = vst.msk [vmem:[%s400] sm:$0xff] %vm6271, %v6239
        %6273 = vst.msk [vmem:[%s400 + $0x8] sm:$0xff] %vm6271, %v6240
        %6274 = vst.msk [vmem:[%s400 + $0x10] sm:$0xff] %vm6271, %v6241
        %6275 = vst.msk [vmem:[%s400 + $0x18] sm:$0xff] %vm6271, %v6242
        %6276 = vst.msk [vmem:[%s400 + $0x20] sm:$0xff] %vm6271, %v6243
        %6277 = vst.msk [vmem:[%s400 + $0x28] sm:$0xff] %vm6271, %v6244
        %6278 = vst.msk [vmem:[%s400 + $0x30] sm:$0xff] %vm6271, %v6245
        %6279 = vst.msk [vmem:[%s400 + $0x38] sm:$0xff] %vm6271, %v6246
        %6280 = vst.msk [vmem:[%s400 + $0x40] sm:$0xff] %vm6271, %v6247
        %6281 = vst.msk [vmem:[%s400 + $0x48] sm:$0xff] %vm6271, %v6248
        %6282 = vst.msk [vmem:[%s400 + $0x50] sm:$0xff] %vm6271, %v6249
        %6283 = vst.msk [vmem:[%s400 + $0x58] sm:$0xff] %vm6271, %v6250
        %6284 = vst.msk [vmem:[%s400 + $0x60] sm:$0xff] %vm6271, %v6251
        %6285 = vst.msk [vmem:[%s400 + $0x68] sm:$0xff] %vm6271, %v6252
        %6286 = vst.msk [vmem:[%s400 + $0x70] sm:$0xff] %vm6271, %v6253
        %6287 = vst.msk [vmem:[%s400 + $0x78] sm:$0xff] %vm6271, %v6254
        %6288 = vst.msk [vmem:[%s400 + $0x80] sm:$0xff] %vm6271, %v6255
        %6289 = vst.msk [vmem:[%s400 + $0x88] sm:$0xff] %vm6271, %v6256
        %6290 = vst.msk [vmem:[%s400 + $0x90] sm:$0xff] %vm6271, %v6257
        %6291 = vst.msk [vmem:[%s400 + $0x98] sm:$0xff] %vm6271, %v6258
        %6292 = vst.msk [vmem:[%s400 + $0xa0] sm:$0xff] %vm6271, %v6259
        %6293 = vst.msk [vmem:[%s400 + $0xa8] sm:$0xff] %vm6271, %v6260
        %6294 = vst.msk [vmem:[%s400 + $0xb0] sm:$0xff] %vm6271, %v6261
        %6295 = vst.msk [vmem:[%s400 + $0xb8] sm:$0xff] %vm6271, %v6262
        %6296 = vst.msk [vmem:[%s400 + $0xc0] sm:$0xff] %vm6271, %v6263
        %6297 = vst.msk [vmem:[%s400 + $0xc8] sm:$0xff] %vm6271, %v6264
        %6298 = vst.msk [vmem:[%s400 + $0xd0] sm:$0xff] %vm6271, %v6265
        %6299 = vst.msk [vmem:[%s400 + $0xd8] sm:$0xff] %vm6271, %v6266
        %6300 = vst.msk [vmem:[%s400 + $0xe0] sm:$0xff] %vm6271, %v6267
        %6301 = vst.msk [vmem:[%s400 + $0xe8] sm:$0xff] %vm6271, %v6268
        %6302 = vst.msk [vmem:[%s400 + $0xf0] sm:$0xff] %vm6271, %v6269
        %6303 = vst.msk [vmem:[%s400 + $0xf8] sm:$0xff] %vm6271, %v6270
        %s6304 = smul.u32 32, %s27
        %p6305 = scmp.lt.s32.totalorder %s6304, 63
        %s6306 = scalar_select %p6305, %s6304, 63
        %s6307 = smul.addr %s6306, 8
        %s6308 = scalar_lea.vmem %s9, %s6307
        // Predicated region
        $region73: #{tpu_custom_call.1} parent=55 // pred_check
          %p6309 = pneg %p239
        $region74: #{tpu_custom_call.1} parent=55 // pred_check_branch
          %6311 = sbr.rel (%p6309) target = $region76
        $region75: #{tpu_custom_call.1} parent=55 // pred_region
          %s6312 = smul.u32 32, %s27
        $region76: #{tpu_custom_call.1} parent=55 // pred_fallthru
          _
      $region56: #{tpu_custom_call.1} parent=5 // pred_fallthru
        _
      %p6313 = scmp.le.s32.totalorder 2, %s22
      // Predicated region
      $region77: #{tpu_custom_call.1} parent=5 // pred_check
        %p6314 = pneg %p6313
      $region78: #{tpu_custom_call.1} parent=5 // pred_check_branch
        %6316 = sbr.rel (%p6314) target = $region80
      $region79: #{tpu_custom_call.1} parent=5 // pred_region
        %s6317 = ssub.s32 %s22, 2
        // Predicated region
        $region81: #{tpu_custom_call.1} parent=79 // pred_check
          %p6318 = pneg %p245
        $region82: #{tpu_custom_call.1} parent=79 // pred_check_branch
          %6320 = sbr.rel (%p6318) target = $region84
        $region83: #{tpu_custom_call.1} parent=79 // pred_region
          %s6321 = smul.u32 32, %s28
          %p6322 = scmp.lt.s32.totalorder %s6321, 63
          %s6323 = scalar_select %p6322, %s6321, 63
          %s6324 = smul.addr %s6323, 8
          %s6325 = scalar_lea.vmem %s9, %s6324
        $region84: #{tpu_custom_call.1} parent=79 // pred_fallthru
          _
      $region80: #{tpu_custom_call.1} parent=5 // pred_fallthru
        _
    $region6: #{tpu_custom_call.1} parent=1 // loop_footer
      %s26 = sadd.s32 1, %s22
    $region7: #{tpu_custom_call.1} parent=1 // loop_footer_branch
      %21 = sbr.rel target = $region3
    $region8: #{tpu_custom_call.1} parent=1 // loop_exit
      _
    %6326 = vsyncpa [#allocation4], 1
    %s6327 = scalar_lea.sflag [#allocation4], 1
    %6328 = vsyncpa %s6327, 1
    %6329 = vsyncpa [#allocation6], 1
    %6330 = vsyncpa [#allocation9], 1

</llo_original>
